<compile_context>
chip_gen: v7x
topology: tpu7x:2x2x1
jax: 0.10.0
libtpu: 0.0.40
codegen_flags: <defaults>
</compile_context>

<pallas_src>
import functools

import jax
import jax.numpy as jnp
from jax.experimental import pallas as pl
from jax.experimental.pallas import tpu as pltpu

VMEM_SPEC = pl.BlockSpec(memory_space=pltpu.MemorySpace.VMEM)

SIGMA = 0.5
GAMA = 0.1


# ---------------------------------------------------------------------------
# Fused Pallas kernel: whole GLAC_GCN forward pass
# ---------------------------------------------------------------------------
def _glac_gcn_kernel(
    # inputs
    x_ref, adj1_ref, adj2_ref,
    ew1, eb1, ew2, eb2, ew3, eb3, zw, zb,
    dw1, db1, dw2, db2, dw3, db3, xw, xb,
    g1, g2, g3, g4, g5,
    clu_ref,
    # outputs
    xbar_ref, q_ref, p1_ref, p2_ref, z_ref,
    *, v,
):
    f32 = jnp.float32
    x = x_ref[...]
    adj1 = adj1_ref[...]
    adj2 = adj2_ref[...]

    # ---- torch.nn.Linear equivalent: y = h @ W + b (W stored (in, out)) ----
    def dense(h, w_ref, b_ref, relu):
        y = jnp.dot(h, w_ref[...], preferred_element_type=f32) + b_ref[...]
        return jnp.maximum(y, 0.0) if relu else y

    # ---- AE encoder / decoder (all intermediates stay in vregs/VMEM) ----
    tra1 = dense(x, ew1, eb1, True)
    tra2 = dense(tra1, ew2, eb2, True)
    tra3 = dense(tra2, ew3, eb3, True)
    z = dense(tra3, zw, zb, False)
    d_h1 = dense(z, dw1, db1, True)
    d_h2 = dense(d_h1, dw2, db2, True)
    d_h3 = dense(d_h2, dw3, db3, True)
    x_bar = dense(d_h3, xw, xb, False)

    xbar_ref[...] = x_bar.astype(xbar_ref.dtype)
    z_ref[...] = z.astype(z_ref.dtype)

    # ---- dual-branch GNN layers (shared weights, two adjacency matrices) ----
    def gnn_pair(in1, in2, w_ref, active, shared_support=False):
        w = w_ref[...]
        if shared_support:
            # layer 1: both branches see the same input x -> one support matmul
            s = jnp.dot(in1, w, preferred_element_type=f32)
            o1 = jnp.dot(adj1, s, preferred_element_type=f32)
            o2 = jnp.dot(adj2, s, preferred_element_type=f32)
        else:
            s1 = jnp.dot(in1, w, preferred_element_type=f32)
            s2 = jnp.dot(in2, w, preferred_element_type=f32)
            o1 = jnp.dot(adj1, s1, preferred_element_type=f32)
            o2 = jnp.dot(adj2, s2, preferred_element_type=f32)
        if active:
            o1 = jnp.maximum(o1, 0.0)
            o2 = jnp.maximum(o2, 0.0)
        return o1, o2

    def mix(a, b, tra):
        # sigma*h_self + gama*h_other + sigma*tra, done in-kernel (VPU only)
        return SIGMA * a + GAMA * b + SIGMA * tra

    h11, h21 = gnn_pair(x, x, g1, True, shared_support=True)
    h12, h22 = gnn_pair(mix(h11, h21, tra1), mix(h21, h11, tra1), g2, True)
    h13, h23 = gnn_pair(mix(h12, h22, tra2), mix(h22, h12, tra2), g3, True)
    h14, h24 = gnn_pair(mix(h13, h23, tra3), mix(h23, h13, tra3), g4, True)
    h15, h25 = gnn_pair(mix(h14, h24, z), mix(h24, h14, z), g5, False)

    # ---- row softmax (EUP exp + approx reciprocal, no VPU divide) ----
    def row_softmax(h):
        m = jnp.max(h, axis=1, keepdims=True)
        e = jnp.exp(h - m)
        return e * pl.reciprocal(jnp.sum(e, axis=1, keepdims=True), approx=True)

    p1_ref[...] = row_softmax(h15).astype(p1_ref.dtype)
    p2_ref[...] = row_softmax(h25).astype(p2_ref.dtype)

    # ---- Student-t soft assignment q ----
    c = clu_ref[...]                                   # (K, n_z)
    z_sq = jnp.sum(z * z, axis=1, keepdims=True)       # (N, 1)
    c_sq = jnp.sum(c * c, axis=1, keepdims=True)       # (K, 1)
    zc = jax.lax.dot_general(z, c, (((1,), (1,)), ((), ())),
                             preferred_element_type=f32)   # (N, K)
    dist2 = jnp.maximum(z_sq + jnp.transpose(c_sq) - 2.0 * zc, 0.0)
    if v == 1.0:
        q = pl.reciprocal(1.0 + dist2, approx=True)
        # exponent (v+1)/2 == 1.0 exactly -> skip jnp.power (log+exp on EUP)
    else:
        q = pl.reciprocal(1.0 + dist2 / v, approx=True)
        q = jnp.power(q, (v + 1.0) / 2.0)
    q = q * pl.reciprocal(jnp.sum(q, axis=1, keepdims=True), approx=True)
    q_ref[...] = q.astype(q_ref.dtype)


# ---------------------------------------------------------------------------
# Wrapper: one pallas_call for the entire forward pass
# ---------------------------------------------------------------------------
def _cost_estimate(N, n_input, e1, e2, e3, d1, d2, d3, nz, K):
    mm = lambda m, k, n: 2 * m * k * n
    flops = 0
    # AE linear layers
    for a, b in [(n_input, e1), (e1, e2), (e2, e3), (e3, nz),
                 (nz, d1), (d1, d2), (d2, d3), (d3, n_input)]:
        flops += mm(N, a, b)
    # GNN support matmuls (layer 1 shared, layers 2-5 per branch)
    flops += mm(N, n_input, e1)
    for a, b in [(e1, e2), (e2, e3), (e3, nz), (nz, K)]:
        flops += 2 * mm(N, a, b)
    # adjacency propagation (2 branches x 5 layers)
    for f in [e1, e2, e3, nz, K]:
        flops += 2 * mm(N, N, f)
    # q distance matmul
    flops += mm(N, nz, K)
    transcendentals = 2 * N * K + 4 * N        # softmax exps + reciprocals
    bytes_accessed = 4 * (
        N * n_input + 2 * N * N
        + (n_input * e1 + e1 * e2 + e2 * e3 + e3 * nz
           + nz * d1 + d1 * d2 + d2 * d3 + d3 * n_input)
        + (e1 + e2 + e3 + nz + d1 + d2 + d3 + n_input)
        + (n_input * e1 + e1 * e2 + e2 * e3 + e3 * nz + nz * K)
        + K * nz
        + N * (n_input + 3 * K + nz))
    return pl.CostEstimate(flops=flops, transcendentals=transcendentals,
                           bytes_accessed=bytes_accessed)


def glac_gcn_forward(p, x, adj1, adj2, v=1.0):
    N, n_input = x.shape
    e1 = p["enc_1"][0].shape[1]
    e2 = p["enc_2"][0].shape[1]
    e3 = p["enc_3"][0].shape[1]
    nz = p["z_layer"][0].shape[1]
    d1 = p["dec_1"][0].shape[1]
    d2 = p["dec_2"][0].shape[1]
    d3 = p["dec_3"][0].shape[1]
    K = p["cluster_layer"].shape[0]

    args = [
        x, adj1, adj2,
        *p["enc_1"], *p["enc_2"], *p["enc_3"], *p["z_layer"],
        *p["dec_1"], *p["dec_2"], *p["dec_3"], *p["x_bar_layer"],
        p["gnn_1"], p["gnn_2"], p["gnn_3"], p["gnn_4"], p["gnn_5"],
        p["cluster_layer"],
    ]

    out_shapes = (
        jax.ShapeDtypeStruct((N, n_input), jnp.float32),   # x_bar
        jax.ShapeDtypeStruct((N, K), jnp.float32),         # q
        jax.ShapeDtypeStruct((N, K), jnp.float32),         # predict1
        jax.ShapeDtypeStruct((N, K), jnp.float32),         # predict2
        jax.ShapeDtypeStruct((N, nz), jnp.float32),        # z
    )

    fused = pl.pallas_call(
        functools.partial(_glac_gcn_kernel, v=float(v)),
        out_shape=out_shapes,
        in_specs=[VMEM_SPEC] * len(args),
        out_specs=(VMEM_SPEC,) * 5,
        cost_estimate=_cost_estimate(N, n_input, e1, e2, e3, d1, d2, d3, nz, K),
    )
    return fused(*args)


# ---------------------------------------------------------------------------
# Parameter construction (deterministic, synthetic; replaces torch.load)
# ---------------------------------------------------------------------------
def _init_linear(key, fan_in, fan_out):
    kw, kb = jax.random.split(key)
    scale = (2.0 / (fan_in + fan_out)) ** 0.5
    w = scale * jax.random.normal(kw, (fan_in, fan_out), jnp.float32)
    b = 0.01 * jax.random.normal(kb, (1, fan_out), jnp.float32)
    return w, b


def _init_gnn(key, fan_in, fan_out):
    scale = (2.0 / (fan_in + fan_out)) ** 0.5     # xavier_normal
    return scale * jax.random.normal(key, (fan_in, fan_out), jnp.float32)


def make_params(key, n_enc_1, n_enc_2, n_enc_3, n_dec_1, n_dec_2, n_dec_3,
                n_input, n_z, n_clusters):
    keys = jax.random.split(key, 16)
    p = {}
    p["enc_1"] = _init_linear(keys[0], n_input, n_enc_1)
    p["enc_2"] = _init_linear(keys[1], n_enc_1, n_enc_2)
    p["enc_3"] = _init_linear(keys[2], n_enc_2, n_enc_3)
    p["z_layer"] = _init_linear(keys[3], n_enc_3, n_z)
    p["dec_1"] = _init_linear(keys[4], n_z, n_dec_1)
    p["dec_2"] = _init_linear(keys[5], n_dec_1, n_dec_2)
    p["dec_3"] = _init_linear(keys[6], n_dec_2, n_dec_3)
    p["x_bar_layer"] = _init_linear(keys[7], n_dec_3, n_input)
    p["gnn_1"] = _init_gnn(keys[8], n_input, n_enc_1)
    p["gnn_2"] = _init_gnn(keys[9], n_enc_1, n_enc_2)
    p["gnn_3"] = _init_gnn(keys[10], n_enc_2, n_enc_3)
    p["gnn_4"] = _init_gnn(keys[11], n_enc_3, n_z)
    p["gnn_5"] = _init_gnn(keys[12], n_z, n_clusters)
    scale = (2.0 / (n_clusters + n_z)) ** 0.5
    p["cluster_layer"] = scale * jax.random.normal(
        keys[13], (n_clusters, n_z), jnp.float32)
    return p


# ---------------------------------------------------------------------------
if __name__ == "__main__":
    # Small synthetic config consistent with the module signature.
    N = 16            # number of graph nodes
    n_input = 32
    n_enc_1, n_enc_2, n_enc_3 = 16, 16, 32
    n_dec_1, n_dec_2, n_dec_3 = 32, 16, 16
    n_z = 8
    n_clusters = 4

    key = jax.random.PRNGKey(0)
    k_params, k_x, k_a1, k_a2 = jax.random.split(key, 4)

    params = make_params(k_params, n_enc_1, n_enc_2, n_enc_3,
                         n_dec_1, n_dec_2, n_dec_3, n_input, n_z, n_clusters)

    x = jax.random.normal(k_x, (N, n_input), jnp.float32)

    def make_adj(k):
        a = jax.random.uniform(k, (N, N), jnp.float32)
        a = (a > 0.7).astype(jnp.float32) + jnp.eye(N, dtype=jnp.float32)
        a = jnp.minimum(a, 1.0)
        return a / jnp.sum(a, axis=1, keepdims=True)   # row-normalized dense adj

    adj1 = make_adj(k_a1)
    adj2 = make_adj(k_a2)

    # TODO(synk): original __init__ loads pretrained AE weights from disk
    # (args.pretrain_path); replaced with deterministic in-script init.

    outs = jax.jit(glac_gcn_forward)(params, x, adj1, adj2)
    outs = jax.block_until_ready(outs)

    x_bar, q, predict1, predict2, z = outs
    assert x_bar.shape == (N, n_input)
    assert q.shape == (N, n_clusters)
    assert predict1.shape == (N, n_clusters)
    assert predict2.shape == (N, n_clusters)
    assert z.shape == (N, n_z)
    assert bool(jnp.all(jnp.isfinite(x_bar)))
    assert bool(jnp.all(jnp.isfinite(q)))
    assert bool(jnp.all(jnp.isfinite(predict1)))
    assert bool(jnp.all(jnp.isfinite(predict2)))
    print("KERNEL_OK")
</pallas_src>

<mosaic_0001>
module attributes {stable_mosaic.version = 11 : i64} {
  func.func @_glac_gcn_kernel(%arg0: memref<16x32xf32, #tpu.memory_space<vmem>>, %arg1: memref<16x16xf32, #tpu.memory_space<vmem>>, %arg2: memref<16x16xf32, #tpu.memory_space<vmem>>, %arg3: memref<32x16xf32, #tpu.memory_space<vmem>>, %arg4: memref<1x16xf32, #tpu.memory_space<vmem>>, %arg5: memref<16x16xf32, #tpu.memory_space<vmem>>, %arg6: memref<1x16xf32, #tpu.memory_space<vmem>>, %arg7: memref<16x32xf32, #tpu.memory_space<vmem>>, %arg8: memref<1x32xf32, #tpu.memory_space<vmem>>, %arg9: memref<32x8xf32, #tpu.memory_space<vmem>>, %arg10: memref<1x8xf32, #tpu.memory_space<vmem>>, %arg11: memref<8x32xf32, #tpu.memory_space<vmem>>, %arg12: memref<1x32xf32, #tpu.memory_space<vmem>>, %arg13: memref<32x16xf32, #tpu.memory_space<vmem>>, %arg14: memref<1x16xf32, #tpu.memory_space<vmem>>, %arg15: memref<16x16xf32, #tpu.memory_space<vmem>>, %arg16: memref<1x16xf32, #tpu.memory_space<vmem>>, %arg17: memref<16x32xf32, #tpu.memory_space<vmem>>, %arg18: memref<1x32xf32, #tpu.memory_space<vmem>>, %arg19: memref<32x16xf32, #tpu.memory_space<vmem>>, %arg20: memref<16x16xf32, #tpu.memory_space<vmem>>, %arg21: memref<16x32xf32, #tpu.memory_space<vmem>>, %arg22: memref<32x8xf32, #tpu.memory_space<vmem>>, %arg23: memref<8x4xf32, #tpu.memory_space<vmem>>, %arg24: memref<4x8xf32, #tpu.memory_space<vmem>>, %arg25: memref<16x32xf32, #tpu.memory_space<vmem>>, %arg26: memref<16x4xf32, #tpu.memory_space<vmem>>, %arg27: memref<16x4xf32, #tpu.memory_space<vmem>>, %arg28: memref<16x4xf32, #tpu.memory_space<vmem>>, %arg29: memref<16x8xf32, #tpu.memory_space<vmem>>) attributes {dimension_semantics = [], scalar_prefetch = 0 : i64, scratch_operands = 0 : i64, tpu.core_type = #tpu.core_type<tc>} {
    %c0 = arith.constant 0 : index
    %c0_0 = arith.constant 0 : index
    %0 = vector.load %arg0[%c0, %c0_0] : memref<16x32xf32, #tpu.memory_space<vmem>>, vector<16x32xf32>
    %c0_1 = arith.constant 0 : index
    %c0_2 = arith.constant 0 : index
    %1 = vector.load %arg1[%c0_1, %c0_2] : memref<16x16xf32, #tpu.memory_space<vmem>>, vector<16x16xf32>
    %c0_3 = arith.constant 0 : index
    %c0_4 = arith.constant 0 : index
    %2 = vector.load %arg2[%c0_3, %c0_4] : memref<16x16xf32, #tpu.memory_space<vmem>>, vector<16x16xf32>
    %c0_5 = arith.constant 0 : index
    %c0_6 = arith.constant 0 : index
    %3 = vector.load %arg3[%c0_5, %c0_6] : memref<32x16xf32, #tpu.memory_space<vmem>>, vector<32x16xf32>
    %cst = arith.constant dense<0.000000e+00> : vector<16x16xf32>
    %4 = tpu.matmul %0, %3, %cst {dimension_numbers = #tpu.dot_dimension_numbers<[1], [0], [0], [1], [0, 0, 1, 1], [], []>} : vector<16x32xf32>, vector<32x16xf32>, vector<16x16xf32> -> vector<16x16xf32>
    %c0_7 = arith.constant 0 : index
    %c0_8 = arith.constant 0 : index
    %5 = vector.load %arg4[%c0_7, %c0_8] : memref<1x16xf32, #tpu.memory_space<vmem>>, vector<1x16xf32>
    %6 = vector.broadcast %5 : vector<1x16xf32> to vector<16x16xf32>
    %7 = arith.addf %4, %6 : vector<16x16xf32>
    %cst_9 = arith.constant 0.000000e+00 : f32
    %8 = vector.broadcast %cst_9 : f32 to vector<16x16xf32>
    %9 = arith.maximumf %7, %8 : vector<16x16xf32>
    %c0_10 = arith.constant 0 : index
    %c0_11 = arith.constant 0 : index
    %10 = vector.load %arg5[%c0_10, %c0_11] : memref<16x16xf32, #tpu.memory_space<vmem>>, vector<16x16xf32>
    %cst_12 = arith.constant dense<0.000000e+00> : vector<16x16xf32>
    %11 = tpu.matmul %9, %10, %cst_12 {dimension_numbers = #tpu.dot_dimension_numbers<[1], [0], [0], [1], [0, 0, 1, 1], [], []>} : vector<16x16xf32>, vector<16x16xf32>, vector<16x16xf32> -> vector<16x16xf32>
    %c0_13 = arith.constant 0 : index
    %c0_14 = arith.constant 0 : index
    %12 = vector.load %arg6[%c0_13, %c0_14] : memref<1x16xf32, #tpu.memory_space<vmem>>, vector<1x16xf32>
    %13 = vector.broadcast %12 : vector<1x16xf32> to vector<16x16xf32>
    %14 = arith.addf %11, %13 : vector<16x16xf32>
    %cst_15 = arith.constant 0.000000e+00 : f32
    %15 = vector.broadcast %cst_15 : f32 to vector<16x16xf32>
    %16 = arith.maximumf %14, %15 : vector<16x16xf32>
    %c0_16 = arith.constant 0 : index
    %c0_17 = arith.constant 0 : index
    %17 = vector.load %arg7[%c0_16, %c0_17] : memref<16x32xf32, #tpu.memory_space<vmem>>, vector<16x32xf32>
    %cst_18 = arith.constant dense<0.000000e+00> : vector<16x32xf32>
    %18 = tpu.matmul %16, %17, %cst_18 {dimension_numbers = #tpu.dot_dimension_numbers<[1], [0], [0], [1], [0, 0, 1, 1], [], []>} : vector<16x16xf32>, vector<16x32xf32>, vector<16x32xf32> -> vector<16x32xf32>
    %c0_19 = arith.constant 0 : index
    %c0_20 = arith.constant 0 : index
    %19 = vector.load %arg8[%c0_19, %c0_20] : memref<1x32xf32, #tpu.memory_space<vmem>>, vector<1x32xf32>
    %20 = vector.broadcast %19 : vector<1x32xf32> to vector<16x32xf32>
    %21 = arith.addf %18, %20 : vector<16x32xf32>
    %cst_21 = arith.constant 0.000000e+00 : f32
    %22 = vector.broadcast %cst_21 : f32 to vector<16x32xf32>
    %23 = arith.maximumf %21, %22 : vector<16x32xf32>
    %c0_22 = arith.constant 0 : index
    %c0_23 = arith.constant 0 : index
    %24 = vector.load %arg9[%c0_22, %c0_23] : memref<32x8xf32, #tpu.memory_space<vmem>>, vector<32x8xf32>
    %cst_24 = arith.constant dense<0.000000e+00> : vector<16x8xf32>
    %25 = tpu.matmul %23, %24, %cst_24 {dimension_numbers = #tpu.dot_dimension_numbers<[1], [0], [0], [1], [0, 0, 1, 1], [], []>} : vector<16x32xf32>, vector<32x8xf32>, vector<16x8xf32> -> vector<16x8xf32>
    %c0_25 = arith.constant 0 : index
    %c0_26 = arith.constant 0 : index
    %26 = vector.load %arg10[%c0_25, %c0_26] : memref<1x8xf32, #tpu.memory_space<vmem>>, vector<1x8xf32>
    %27 = vector.broadcast %26 : vector<1x8xf32> to vector<16x8xf32>
    %28 = arith.addf %25, %27 : vector<16x8xf32>
    %c0_27 = arith.constant 0 : index
    %c0_28 = arith.constant 0 : index
    %29 = vector.load %arg11[%c0_27, %c0_28] : memref<8x32xf32, #tpu.memory_space<vmem>>, vector<8x32xf32>
    %cst_29 = arith.constant dense<0.000000e+00> : vector<16x32xf32>
    %30 = tpu.matmul %28, %29, %cst_29 {dimension_numbers = #tpu.dot_dimension_numbers<[1], [0], [0], [1], [0, 0, 1, 1], [], []>} : vector<16x8xf32>, vector<8x32xf32>, vector<16x32xf32> -> vector<16x32xf32>
    %c0_30 = arith.constant 0 : index
    %c0_31 = arith.constant 0 : index
    %31 = vector.load %arg12[%c0_30, %c0_31] : memref<1x32xf32, #tpu.memory_space<vmem>>, vector<1x32xf32>
    %32 = vector.broadcast %31 : vector<1x32xf32> to vector<16x32xf32>
    %33 = arith.addf %30, %32 : vector<16x32xf32>
    %cst_32 = arith.constant 0.000000e+00 : f32
    %34 = vector.broadcast %cst_32 : f32 to vector<16x32xf32>
    %35 = arith.maximumf %33, %34 : vector<16x32xf32>
    %c0_33 = arith.constant 0 : index
    %c0_34 = arith.constant 0 : index
    %36 = vector.load %arg13[%c0_33, %c0_34] : memref<32x16xf32, #tpu.memory_space<vmem>>, vector<32x16xf32>
    %cst_35 = arith.constant dense<0.000000e+00> : vector<16x16xf32>
    %37 = tpu.matmul %35, %36, %cst_35 {dimension_numbers = #tpu.dot_dimension_numbers<[1], [0], [0], [1], [0, 0, 1, 1], [], []>} : vector<16x32xf32>, vector<32x16xf32>, vector<16x16xf32> -> vector<16x16xf32>
    %c0_36 = arith.constant 0 : index
    %c0_37 = arith.constant 0 : index
    %38 = vector.load %arg14[%c0_36, %c0_37] : memref<1x16xf32, #tpu.memory_space<vmem>>, vector<1x16xf32>
    %39 = vector.broadcast %38 : vector<1x16xf32> to vector<16x16xf32>
    %40 = arith.addf %37, %39 : vector<16x16xf32>
    %cst_38 = arith.constant 0.000000e+00 : f32
    %41 = vector.broadcast %cst_38 : f32 to vector<16x16xf32>
    %42 = arith.maximumf %40, %41 : vector<16x16xf32>
    %c0_39 = arith.constant 0 : index
    %c0_40 = arith.constant 0 : index
    %43 = vector.load %arg15[%c0_39, %c0_40] : memref<16x16xf32, #tpu.memory_space<vmem>>, vector<16x16xf32>
    %cst_41 = arith.constant dense<0.000000e+00> : vector<16x16xf32>
    %44 = tpu.matmul %42, %43, %cst_41 {dimension_numbers = #tpu.dot_dimension_numbers<[1], [0], [0], [1], [0, 0, 1, 1], [], []>} : vector<16x16xf32>, vector<16x16xf32>, vector<16x16xf32> -> vector<16x16xf32>
    %c0_42 = arith.constant 0 : index
    %c0_43 = arith.constant 0 : index
    %45 = vector.load %arg16[%c0_42, %c0_43] : memref<1x16xf32, #tpu.memory_space<vmem>>, vector<1x16xf32>
    %46 = vector.broadcast %45 : vector<1x16xf32> to vector<16x16xf32>
    %47 = arith.addf %44, %46 : vector<16x16xf32>
    %cst_44 = arith.constant 0.000000e+00 : f32
    %48 = vector.broadcast %cst_44 : f32 to vector<16x16xf32>
    %49 = arith.maximumf %47, %48 : vector<16x16xf32>
    %c0_45 = arith.constant 0 : index
    %c0_46 = arith.constant 0 : index
    %50 = vector.load %arg17[%c0_45, %c0_46] : memref<16x32xf32, #tpu.memory_space<vmem>>, vector<16x32xf32>
    %cst_47 = arith.constant dense<0.000000e+00> : vector<16x32xf32>
    %51 = tpu.matmul %49, %50, %cst_47 {dimension_numbers = #tpu.dot_dimension_numbers<[1], [0], [0], [1], [0, 0, 1, 1], [], []>} : vector<16x16xf32>, vector<16x32xf32>, vector<16x32xf32> -> vector<16x32xf32>
    %c0_48 = arith.constant 0 : index
    %c0_49 = arith.constant 0 : index
    %52 = vector.load %arg18[%c0_48, %c0_49] : memref<1x32xf32, #tpu.memory_space<vmem>>, vector<1x32xf32>
    %53 = vector.broadcast %52 : vector<1x32xf32> to vector<16x32xf32>
    %54 = arith.addf %51, %53 : vector<16x32xf32>
    %c0_50 = arith.constant 0 : index
    %c0_51 = arith.constant 0 : index
    %55 = vector.load %arg25[%c0_50, %c0_51] : memref<16x32xf32, #tpu.memory_space<vmem>>, vector<16x32xf32>
    tpu.vector_store %arg25[%c0_50, %c0_51], %54 {strides = array<i32>} : memref<16x32xf32, #tpu.memory_space<vmem>>, vector<16x32xf32>,
    %c0_52 = arith.constant 0 : index
    %c0_53 = arith.constant 0 : index
    %56 = vector.load %arg29[%c0_52, %c0_53] : memref<16x8xf32, #tpu.memory_space<vmem>>, vector<16x8xf32>
    tpu.vector_store %arg29[%c0_52, %c0_53], %28 {strides = array<i32>} : memref<16x8xf32, #tpu.memory_space<vmem>>, vector<16x8xf32>,
    %c0_54 = arith.constant 0 : index
    %c0_55 = arith.constant 0 : index
    %57 = vector.load %arg19[%c0_54, %c0_55] : memref<32x16xf32, #tpu.memory_space<vmem>>, vector<32x16xf32>
    %cst_56 = arith.constant dense<0.000000e+00> : vector<16x16xf32>
    %58 = tpu.matmul %0, %57, %cst_56 {dimension_numbers = #tpu.dot_dimension_numbers<[1], [0], [0], [1], [0, 0, 1, 1], [], []>} : vector<16x32xf32>, vector<32x16xf32>, vector<16x16xf32> -> vector<16x16xf32>
    %cst_57 = arith.constant dense<0.000000e+00> : vector<16x16xf32>
    %59 = tpu.matmul %1, %58, %cst_57 {dimension_numbers = #tpu.dot_dimension_numbers<[1], [0], [0], [1], [0, 0, 1, 1], [], []>} : vector<16x16xf32>, vector<16x16xf32>, vector<16x16xf32> -> vector<16x16xf32>
    %cst_58 = arith.constant dense<0.000000e+00> : vector<16x16xf32>
    %60 = tpu.matmul %2, %58, %cst_58 {dimension_numbers = #tpu.dot_dimension_numbers<[1], [0], [0], [1], [0, 0, 1, 1], [], []>} : vector<16x16xf32>, vector<16x16xf32>, vector<16x16xf32> -> vector<16x16xf32>
    %cst_59 = arith.constant 0.000000e+00 : f32
    %61 = vector.broadcast %cst_59 : f32 to vector<16x16xf32>
    %62 = arith.maximumf %59, %61 : vector<16x16xf32>
    %cst_60 = arith.constant 0.000000e+00 : f32
    %63 = vector.broadcast %cst_60 : f32 to vector<16x16xf32>
    %64 = arith.maximumf %60, %63 : vector<16x16xf32>
    %cst_61 = arith.constant 5.000000e-01 : f32
    %65 = vector.broadcast %cst_61 : f32 to vector<16x16xf32>
    %66 = arith.mulf %65, %62 : vector<16x16xf32>
    %cst_62 = arith.constant 1.000000e-01 : f32
    %67 = vector.broadcast %cst_62 : f32 to vector<16x16xf32>
    %68 = arith.mulf %67, %64 : vector<16x16xf32>
    %69 = arith.addf %66, %68 : vector<16x16xf32>
    %cst_63 = arith.constant 5.000000e-01 : f32
    %70 = vector.broadcast %cst_63 : f32 to vector<16x16xf32>
    %71 = arith.mulf %70, %9 : vector<16x16xf32>
    %72 = arith.addf %69, %71 : vector<16x16xf32>
    %cst_64 = arith.constant 5.000000e-01 : f32
    %73 = vector.broadcast %cst_64 : f32 to vector<16x16xf32>
    %74 = arith.mulf %73, %64 : vector<16x16xf32>
    %cst_65 = arith.constant 1.000000e-01 : f32
    %75 = vector.broadcast %cst_65 : f32 to vector<16x16xf32>
    %76 = arith.mulf %75, %62 : vector<16x16xf32>
    %77 = arith.addf %74, %76 : vector<16x16xf32>
    %cst_66 = arith.constant 5.000000e-01 : f32
    %78 = vector.broadcast %cst_66 : f32 to vector<16x16xf32>
    %79 = arith.mulf %78, %9 : vector<16x16xf32>
    %80 = arith.addf %77, %79 : vector<16x16xf32>
    %c0_67 = arith.constant 0 : index
    %c0_68 = arith.constant 0 : index
    %81 = vector.load %arg20[%c0_67, %c0_68] : memref<16x16xf32, #tpu.memory_space<vmem>>, vector<16x16xf32>
    %cst_69 = arith.constant dense<0.000000e+00> : vector<16x16xf32>
    %82 = tpu.matmul %72, %81, %cst_69 {dimension_numbers = #tpu.dot_dimension_numbers<[1], [0], [0], [1], [0, 0, 1, 1], [], []>} : vector<16x16xf32>, vector<16x16xf32>, vector<16x16xf32> -> vector<16x16xf32>
    %cst_70 = arith.constant dense<0.000000e+00> : vector<16x16xf32>
    %83 = tpu.matmul %80, %81, %cst_70 {dimension_numbers = #tpu.dot_dimension_numbers<[1], [0], [0], [1], [0, 0, 1, 1], [], []>} : vector<16x16xf32>, vector<16x16xf32>, vector<16x16xf32> -> vector<16x16xf32>
    %cst_71 = arith.constant dense<0.000000e+00> : vector<16x16xf32>
    %84 = tpu.matmul %1, %82, %cst_71 {dimension_numbers = #tpu.dot_dimension_numbers<[1], [0], [0], [1], [0, 0, 1, 1], [], []>} : vector<16x16xf32>, vector<16x16xf32>, vector<16x16xf32> -> vector<16x16xf32>
    %cst_72 = arith.constant dense<0.000000e+00> : vector<16x16xf32>
    %85 = tpu.matmul %2, %83, %cst_72 {dimension_numbers = #tpu.dot_dimension_numbers<[1], [0], [0], [1], [0, 0, 1, 1], [], []>} : vector<16x16xf32>, vector<16x16xf32>, vector<16x16xf32> -> vector<16x16xf32>
    %cst_73 = arith.constant 0.000000e+00 : f32
    %86 = vector.broadcast %cst_73 : f32 to vector<16x16xf32>
    %87 = arith.maximumf %84, %86 : vector<16x16xf32>
    %cst_74 = arith.constant 0.000000e+00 : f32
    %88 = vector.broadcast %cst_74 : f32 to vector<16x16xf32>
    %89 = arith.maximumf %85, %88 : vector<16x16xf32>
    %cst_75 = arith.constant 5.000000e-01 : f32
    %90 = vector.broadcast %cst_75 : f32 to vector<16x16xf32>
    %91 = arith.mulf %90, %87 : vector<16x16xf32>
    %cst_76 = arith.constant 1.000000e-01 : f32
    %92 = vector.broadcast %cst_76 : f32 to vector<16x16xf32>
    %93 = arith.mulf %92, %89 : vector<16x16xf32>
    %94 = arith.addf %91, %93 : vector<16x16xf32>
    %cst_77 = arith.constant 5.000000e-01 : f32
    %95 = vector.broadcast %cst_77 : f32 to vector<16x16xf32>
    %96 = arith.mulf %95, %16 : vector<16x16xf32>
    %97 = arith.addf %94, %96 : vector<16x16xf32>
    %cst_78 = arith.constant 5.000000e-01 : f32
    %98 = vector.broadcast %cst_78 : f32 to vector<16x16xf32>
    %99 = arith.mulf %98, %89 : vector<16x16xf32>
    %cst_79 = arith.constant 1.000000e-01 : f32
    %100 = vector.broadcast %cst_79 : f32 to vector<16x16xf32>
    %101 = arith.mulf %100, %87 : vector<16x16xf32>
    %102 = arith.addf %99, %101 : vector<16x16xf32>
    %cst_80 = arith.constant 5.000000e-01 : f32
    %103 = vector.broadcast %cst_80 : f32 to vector<16x16xf32>
    %104 = arith.mulf %103, %16 : vector<16x16xf32>
    %105 = arith.addf %102, %104 : vector<16x16xf32>
    %c0_81 = arith.constant 0 : index
    %c0_82 = arith.constant 0 : index
    %106 = vector.load %arg21[%c0_81, %c0_82] : memref<16x32xf32, #tpu.memory_space<vmem>>, vector<16x32xf32>
    %cst_83 = arith.constant dense<0.000000e+00> : vector<16x32xf32>
    %107 = tpu.matmul %97, %106, %cst_83 {dimension_numbers = #tpu.dot_dimension_numbers<[1], [0], [0], [1], [0, 0, 1, 1], [], []>} : vector<16x16xf32>, vector<16x32xf32>, vector<16x32xf32> -> vector<16x32xf32>
    %cst_84 = arith.constant dense<0.000000e+00> : vector<16x32xf32>
    %108 = tpu.matmul %105, %106, %cst_84 {dimension_numbers = #tpu.dot_dimension_numbers<[1], [0], [0], [1], [0, 0, 1, 1], [], []>} : vector<16x16xf32>, vector<16x32xf32>, vector<16x32xf32> -> vector<16x32xf32>
    %cst_85 = arith.constant dense<0.000000e+00> : vector<16x32xf32>
    %109 = tpu.matmul %1, %107, %cst_85 {dimension_numbers = #tpu.dot_dimension_numbers<[1], [0], [0], [1], [0, 0, 1, 1], [], []>} : vector<16x16xf32>, vector<16x32xf32>, vector<16x32xf32> -> vector<16x32xf32>
    %cst_86 = arith.constant dense<0.000000e+00> : vector<16x32xf32>
    %110 = tpu.matmul %2, %108, %cst_86 {dimension_numbers = #tpu.dot_dimension_numbers<[1], [0], [0], [1], [0, 0, 1, 1], [], []>} : vector<16x16xf32>, vector<16x32xf32>, vector<16x32xf32> -> vector<16x32xf32>
    %cst_87 = arith.constant 0.000000e+00 : f32
    %111 = vector.broadcast %cst_87 : f32 to vector<16x32xf32>
    %112 = arith.maximumf %109, %111 : vector<16x32xf32>
    %cst_88 = arith.constant 0.000000e+00 : f32
    %113 = vector.broadcast %cst_88 : f32 to vector<16x32xf32>
    %114 = arith.maximumf %110, %113 : vector<16x32xf32>
    %cst_89 = arith.constant 5.000000e-01 : f32
    %115 = vector.broadcast %cst_89 : f32 to vector<16x32xf32>
    %116 = arith.mulf %115, %112 : vector<16x32xf32>
    %cst_90 = arith.constant 1.000000e-01 : f32
    %117 = vector.broadcast %cst_90 : f32 to vector<16x32xf32>
    %118 = arith.mulf %117, %114 : vector<16x32xf32>
    %119 = arith.addf %116, %118 : vector<16x32xf32>
    %cst_91 = arith.constant 5.000000e-01 : f32
    %120 = vector.broadcast %cst_91 : f32 to vector<16x32xf32>
    %121 = arith.mulf %120, %23 : vector<16x32xf32>
    %122 = arith.addf %119, %121 : vector<16x32xf32>
    %cst_92 = arith.constant 5.000000e-01 : f32
    %123 = vector.broadcast %cst_92 : f32 to vector<16x32xf32>
    %124 = arith.mulf %123, %114 : vector<16x32xf32>
    %cst_93 = arith.constant 1.000000e-01 : f32
    %125 = vector.broadcast %cst_93 : f32 to vector<16x32xf32>
    %126 = arith.mulf %125, %112 : vector<16x32xf32>
    %127 = arith.addf %124, %126 : vector<16x32xf32>
    %cst_94 = arith.constant 5.000000e-01 : f32
    %128 = vector.broadcast %cst_94 : f32 to vector<16x32xf32>
    %129 = arith.mulf %128, %23 : vector<16x32xf32>
    %130 = arith.addf %127, %129 : vector<16x32xf32>
    %c0_95 = arith.constant 0 : index
    %c0_96 = arith.constant 0 : index
    %131 = vector.load %arg22[%c0_95, %c0_96] : memref<32x8xf32, #tpu.memory_space<vmem>>, vector<32x8xf32>
    %cst_97 = arith.constant dense<0.000000e+00> : vector<16x8xf32>
    %132 = tpu.matmul %122, %131, %cst_97 {dimension_numbers = #tpu.dot_dimension_numbers<[1], [0], [0], [1], [0, 0, 1, 1], [], []>} : vector<16x32xf32>, vector<32x8xf32>, vector<16x8xf32> -> vector<16x8xf32>
    %cst_98 = arith.constant dense<0.000000e+00> : vector<16x8xf32>
    %133 = tpu.matmul %130, %131, %cst_98 {dimension_numbers = #tpu.dot_dimension_numbers<[1], [0], [0], [1], [0, 0, 1, 1], [], []>} : vector<16x32xf32>, vector<32x8xf32>, vector<16x8xf32> -> vector<16x8xf32>
    %cst_99 = arith.constant dense<0.000000e+00> : vector<16x8xf32>
    %134 = tpu.matmul %1, %132, %cst_99 {dimension_numbers = #tpu.dot_dimension_numbers<[1], [0], [0], [1], [0, 0, 1, 1], [], []>} : vector<16x16xf32>, vector<16x8xf32>, vector<16x8xf32> -> vector<16x8xf32>
    %cst_100 = arith.constant dense<0.000000e+00> : vector<16x8xf32>
    %135 = tpu.matmul %2, %133, %cst_100 {dimension_numbers = #tpu.dot_dimension_numbers<[1], [0], [0], [1], [0, 0, 1, 1], [], []>} : vector<16x16xf32>, vector<16x8xf32>, vector<16x8xf32> -> vector<16x8xf32>
    %cst_101 = arith.constant 0.000000e+00 : f32
    %136 = vector.broadcast %cst_101 : f32 to vector<16x8xf32>
    %137 = arith.maximumf %134, %136 : vector<16x8xf32>
    %cst_102 = arith.constant 0.000000e+00 : f32
    %138 = vector.broadcast %cst_102 : f32 to vector<16x8xf32>
    %139 = arith.maximumf %135, %138 : vector<16x8xf32>
    %cst_103 = arith.constant 5.000000e-01 : f32
    %140 = vector.broadcast %cst_103 : f32 to vector<16x8xf32>
    %141 = arith.mulf %140, %137 : vector<16x8xf32>
    %cst_104 = arith.constant 1.000000e-01 : f32
    %142 = vector.broadcast %cst_104 : f32 to vector<16x8xf32>
    %143 = arith.mulf %142, %139 : vector<16x8xf32>
    %144 = arith.addf %141, %143 : vector<16x8xf32>
    %cst_105 = arith.constant 5.000000e-01 : f32
    %145 = vector.broadcast %cst_105 : f32 to vector<16x8xf32>
    %146 = arith.mulf %145, %28 : vector<16x8xf32>
    %147 = arith.addf %144, %146 : vector<16x8xf32>
    %cst_106 = arith.constant 5.000000e-01 : f32
    %148 = vector.broadcast %cst_106 : f32 to vector<16x8xf32>
    %149 = arith.mulf %148, %139 : vector<16x8xf32>
    %cst_107 = arith.constant 1.000000e-01 : f32
    %150 = vector.broadcast %cst_107 : f32 to vector<16x8xf32>
    %151 = arith.mulf %150, %137 : vector<16x8xf32>
    %152 = arith.addf %149, %151 : vector<16x8xf32>
    %cst_108 = arith.constant 5.000000e-01 : f32
    %153 = vector.broadcast %cst_108 : f32 to vector<16x8xf32>
    %154 = arith.mulf %153, %28 : vector<16x8xf32>
    %155 = arith.addf %152, %154 : vector<16x8xf32>
    %c0_109 = arith.constant 0 : index
    %c0_110 = arith.constant 0 : index
    %156 = vector.load %arg23[%c0_109, %c0_110] : memref<8x4xf32, #tpu.memory_space<vmem>>, vector<8x4xf32>
    %cst_111 = arith.constant dense<0.000000e+00> : vector<16x4xf32>
    %157 = tpu.matmul %147, %156, %cst_111 {dimension_numbers = #tpu.dot_dimension_numbers<[1], [0], [0], [1], [0, 0, 1, 1], [], []>} : vector<16x8xf32>, vector<8x4xf32>, vector<16x4xf32> -> vector<16x4xf32>
    %cst_112 = arith.constant dense<0.000000e+00> : vector<16x4xf32>
    %158 = tpu.matmul %155, %156, %cst_112 {dimension_numbers = #tpu.dot_dimension_numbers<[1], [0], [0], [1], [0, 0, 1, 1], [], []>} : vector<16x8xf32>, vector<8x4xf32>, vector<16x4xf32> -> vector<16x4xf32>
    %cst_113 = arith.constant dense<0.000000e+00> : vector<16x4xf32>
    %159 = tpu.matmul %1, %157, %cst_113 {dimension_numbers = #tpu.dot_dimension_numbers<[1], [0], [0], [1], [0, 0, 1, 1], [], []>} : vector<16x16xf32>, vector<16x4xf32>, vector<16x4xf32> -> vector<16x4xf32>
    %cst_114 = arith.constant dense<0.000000e+00> : vector<16x4xf32>
    %160 = tpu.matmul %2, %158, %cst_114 {dimension_numbers = #tpu.dot_dimension_numbers<[1], [0], [0], [1], [0, 0, 1, 1], [], []>} : vector<16x16xf32>, vector<16x4xf32>, vector<16x4xf32> -> vector<16x4xf32>
    %cst_115 = arith.constant dense<0xFF800000> : vector<16xf32>
    %161 = vector.multi_reduction <maximumf>, %159, %cst_115 [1] : vector<16x4xf32> to vector<16xf32>
    %162 = vector.shape_cast %161 : vector<16xf32> to vector<16x1xf32>
    %163 = vector.broadcast %162 : vector<16x1xf32> to vector<16x4xf32>
    %164 = arith.subf %159, %163 : vector<16x4xf32>
    %165 = math.exp %164 : vector<16x4xf32>
    %cst_116 = arith.constant dense<0.000000e+00> : vector<16xf32>
    %166 = vector.multi_reduction <add>, %165, %cst_116 [1] : vector<16x4xf32> to vector<16xf32>
    %167 = vector.shape_cast %166 : vector<16xf32> to vector<16x1xf32>
    %168 = tpu.reciprocal %167 {approx = true} : vector<16x1xf32> -> vector<16x1xf32>
    %169 = vector.broadcast %168 : vector<16x1xf32> to vector<16x4xf32>
    %170 = arith.mulf %165, %169 : vector<16x4xf32>
    %c0_117 = arith.constant 0 : index
    %c0_118 = arith.constant 0 : index
    %171 = vector.load %arg27[%c0_117, %c0_118] : memref<16x4xf32, #tpu.memory_space<vmem>>, vector<16x4xf32>
    tpu.vector_store %arg27[%c0_117, %c0_118], %170 {strides = array<i32>} : memref<16x4xf32, #tpu.memory_space<vmem>>, vector<16x4xf32>,
    %cst_119 = arith.constant dense<0xFF800000> : vector<16xf32>
    %172 = vector.multi_reduction <maximumf>, %160, %cst_119 [1] : vector<16x4xf32> to vector<16xf32>
    %173 = vector.shape_cast %172 : vector<16xf32> to vector<16x1xf32>
    %174 = vector.broadcast %173 : vector<16x1xf32> to vector<16x4xf32>
    %175 = arith.subf %160, %174 : vector<16x4xf32>
    %176 = math.exp %175 : vector<16x4xf32>
    %cst_120 = arith.constant dense<0.000000e+00> : vector<16xf32>
    %177 = vector.multi_reduction <add>, %176, %cst_120 [1] : vector<16x4xf32> to vector<16xf32>
    %178 = vector.shape_cast %177 : vector<16xf32> to vector<16x1xf32>
    %179 = tpu.reciprocal %178 {approx = true} : vector<16x1xf32> -> vector<16x1xf32>
    %180 = vector.broadcast %179 : vector<16x1xf32> to vector<16x4xf32>
    %181 = arith.mulf %176, %180 : vector<16x4xf32>
    %c0_121 = arith.constant 0 : index
    %c0_122 = arith.constant 0 : index
    %182 = vector.load %arg28[%c0_121, %c0_122] : memref<16x4xf32, #tpu.memory_space<vmem>>, vector<16x4xf32>
    tpu.vector_store %arg28[%c0_121, %c0_122], %181 {strides = array<i32>} : memref<16x4xf32, #tpu.memory_space<vmem>>, vector<16x4xf32>,
    %c0_123 = arith.constant 0 : index
    %c0_124 = arith.constant 0 : index
    %183 = vector.load %arg24[%c0_123, %c0_124] : memref<4x8xf32, #tpu.memory_space<vmem>>, vector<4x8xf32>
    %184 = arith.mulf %28, %28 : vector<16x8xf32>
    %cst_125 = arith.constant dense<0.000000e+00> : vector<16xf32>
    %185 = vector.multi_reduction <add>, %184, %cst_125 [1] : vector<16x8xf32> to vector<16xf32>
    %186 = vector.shape_cast %185 : vector<16xf32> to vector<16x1xf32>
    %187 = arith.mulf %183, %183 : vector<4x8xf32>
    %cst_126 = arith.constant dense<0.000000e+00> : vector<4xf32>
    %188 = vector.multi_reduction <add>, %187, %cst_126 [1] : vector<4x8xf32> to vector<4xf32>
    %189 = vector.shape_cast %188 : vector<4xf32> to vector<4x1xf32>
    %cst_127 = arith.constant dense<0.000000e+00> : vector<16x4xf32>
    %190 = tpu.matmul %28, %183, %cst_127 {dimension_numbers = #tpu.dot_dimension_numbers<[1], [1], [0], [0], [0, 0, 1, 0], [], []>} : vector<16x8xf32>, vector<4x8xf32>, vector<16x4xf32> -> vector<16x4xf32>
    %191 = tpu.transpose %189, [1, 0] : vector<4x1xf32> -> vector<1x4xf32>
    %192 = vector.broadcast %186 : vector<16x1xf32> to vector<16x4xf32>
    %193 = vector.broadcast %191 : vector<1x4xf32> to vector<16x4xf32>
    %194 = arith.addf %192, %193 : vector<16x4xf32>
    %cst_128 = arith.constant 2.000000e+00 : f32
    %195 = vector.broadcast %cst_128 : f32 to vector<16x4xf32>
    %196 = arith.mulf %195, %190 : vector<16x4xf32>
    %197 = arith.subf %194, %196 : vector<16x4xf32>
    %cst_129 = arith.constant 0.000000e+00 : f32
    %198 = vector.broadcast %cst_129 : f32 to vector<16x4xf32>
    %199 = arith.maximumf %197, %198 : vector<16x4xf32>
    %cst_130 = arith.constant 1.000000e+00 : f32
    %200 = vector.broadcast %cst_130 : f32 to vector<16x4xf32>
    %201 = arith.addf %200, %199 : vector<16x4xf32>
    %202 = tpu.reciprocal %201 {approx = true} : vector<16x4xf32> -> vector<16x4xf32>
    %cst_131 = arith.constant dense<0.000000e+00> : vector<16xf32>
    %203 = vector.multi_reduction <add>, %202, %cst_131 [1] : vector<16x4xf32> to vector<16xf32>
    %204 = vector.shape_cast %203 : vector<16xf32> to vector<16x1xf32>
    %205 = tpu.reciprocal %204 {approx = true} : vector<16x1xf32> -> vector<16x1xf32>
    %206 = vector.broadcast %205 : vector<16x1xf32> to vector<16x4xf32>
    %207 = arith.mulf %202, %206 : vector<16x4xf32>
    %c0_132 = arith.constant 0 : index
    %c0_133 = arith.constant 0 : index
    %208 = vector.load %arg26[%c0_132, %c0_133] : memref<16x4xf32, #tpu.memory_space<vmem>>, vector<16x4xf32>
    tpu.vector_store %arg26[%c0_132, %c0_133], %207 {strides = array<i32>} : memref<16x4xf32, #tpu.memory_space<vmem>>, vector<16x4xf32>,
    return
  }
}

</mosaic_0001>

<llo_original>
// kernel: glac_gcn_forward.1
$region0: #{glac_gcn_forward.1}
  #allocation0 [shape = 'u32[]', space=smem, size = 0x4, offset = 0x4, fixed_abs, tag = 'smem constant byte address 0x4 - core index']
  #allocation1 [shape = 'u32[144,128]{1,0:T(1,128)}', space=vmem, size = 0x12000, scoped, tag = 'internal scratch']
  %s0 = inlined_call_operand.smem [shape: u32[30], index: -1, kind: input, shape index: {}]
  %s1 = sld [smem:[%s0]]
  %s2 = scalar_lea.smem %s0, 1
  %s3 = sld [smem:[%s2]]
  %s4 = scalar_lea.smem %s0, 2
  %s5 = sld [smem:[%s4]]
  %s6 = scalar_lea.smem %s0, 3
  %s7 = sld [smem:[%s6]]
  %s8 = scalar_lea.smem %s0, 4
  %s9 = sld [smem:[%s8]]
  %s10 = scalar_lea.smem %s0, 5
  %s11 = sld [smem:[%s10]]
  %s12 = scalar_lea.smem %s0, 6
  %s13 = sld [smem:[%s12]]
  %s14 = scalar_lea.smem %s0, 7
  %s15 = sld [smem:[%s14]]
  %s16 = scalar_lea.smem %s0, 8
  %s17 = sld [smem:[%s16]]
  %s18 = scalar_lea.smem %s0, 9
  %s19 = sld [smem:[%s18]]
  %s20 = scalar_lea.smem %s0, 10
  %s21 = sld [smem:[%s20]]
  %s22 = scalar_lea.smem %s0, 11
  %s23 = sld [smem:[%s22]]
  %s24 = scalar_lea.smem %s0, 12
  %s25 = sld [smem:[%s24]]
  %s26 = scalar_lea.smem %s0, 13
  %s27 = sld [smem:[%s26]]
  %s28 = scalar_lea.smem %s0, 14
  %s29 = sld [smem:[%s28]]
  %s30 = scalar_lea.smem %s0, 15
  %s31 = sld [smem:[%s30]]
  %s32 = scalar_lea.smem %s0, 16
  %s33 = sld [smem:[%s32]]
  %s34 = scalar_lea.smem %s0, 17
  %s35 = sld [smem:[%s34]]
  %s36 = scalar_lea.smem %s0, 18
  %s37 = sld [smem:[%s36]]
  %s38 = scalar_lea.smem %s0, 19
  %s39 = sld [smem:[%s38]]
  %s40 = scalar_lea.smem %s0, 20
  %s41 = sld [smem:[%s40]]
  %s42 = scalar_lea.smem %s0, 21
  %s43 = sld [smem:[%s42]]
  %s44 = scalar_lea.smem %s0, 22
  %s45 = sld [smem:[%s44]]
  %s46 = scalar_lea.smem %s0, 23
  %s47 = sld [smem:[%s46]]
  %s48 = scalar_lea.smem %s0, 24
  %s49 = sld [smem:[%s48]]
  %s50 = scalar_lea.smem %s0, 25
  %s51 = sld [smem:[%s50]]
  %s52 = scalar_lea.smem %s0, 26
  %s53 = sld [smem:[%s52]]
  %s54 = scalar_lea.smem %s0, 27
  %s55 = sld [smem:[%s54]]
  %s56 = scalar_lea.smem %s0, 28
  %s57 = sld [smem:[%s56]]
  %s58 = scalar_lea.smem %s0, 29
  %s59 = sld [smem:[%s58]]
  %60 = xla_tuple %s51, %s53, %s55, %s57, %s59
  %s61 = sld [smem:[#allocation0]]
  $region142: #{glac_gcn_forward.1} parent=0
    _
  %s63 = ssub.s32 1, %s61
  %s64 = scalar_select 0, %s63, %s61
  $region1: #{glac_gcn_forward.1} parent=0
    #allocation2 [shape = 'u8[8192]{0}', space=vmem, size = 0x2000, scoped, tag = 'output window, operand 0, single buffered']
    #allocation3 [shape = 's32[1]{0}', space=sflag, size = 0x4, scoped, tag = 'scoped memory for glac_gcn_forward.1']
    %65 = vsyncpa [#allocation3], 0
    // Predicated region
    $region2: #{glac_gcn_forward.1} parent=1 // pred_check
      _
    $region3: #{glac_gcn_forward.1} parent=1 // pred_check_branch
      %67 = sbr.rel (0) target = $region5
    $region4: #{glac_gcn_forward.1} parent=1 // pred_region
      _
    $region5: #{glac_gcn_forward.1} parent=1 // pred_fallthru
      _
    // Predicated region
    $region6: #{glac_gcn_forward.1} parent=1 // pred_check
      _
    $region7: #{glac_gcn_forward.1} parent=1 // pred_check_branch
      %69 = sbr.rel (0) target = $region9
    $region8: #{glac_gcn_forward.1} parent=1 // pred_region
      _
    $region9: #{glac_gcn_forward.1} parent=1 // pred_fallthru
      _
    // Predicated region
    $region10: #{glac_gcn_forward.1} parent=1 // pred_check
      _
    $region11: #{glac_gcn_forward.1} parent=1 // pred_check_branch
      %71 = sbr.rel (0) target = $region13
    $region12: #{glac_gcn_forward.1} parent=1 // pred_region
      _
    $region13: #{glac_gcn_forward.1} parent=1 // pred_fallthru
      _
    // Predicated region
    $region14: #{glac_gcn_forward.1} parent=1 // pred_check
      _
    $region15: #{glac_gcn_forward.1} parent=1 // pred_check_branch
      %73 = sbr.rel (0) target = $region17
    $region16: #{glac_gcn_forward.1} parent=1 // pred_region
      _
    $region17: #{glac_gcn_forward.1} parent=1 // pred_fallthru
      _
    // Predicated region
    $region18: #{glac_gcn_forward.1} parent=1 // pred_check
      _
    $region19: #{glac_gcn_forward.1} parent=1 // pred_check_branch
      %75 = sbr.rel (0) target = $region21
    $region20: #{glac_gcn_forward.1} parent=1 // pred_region
      _
    $region21: #{glac_gcn_forward.1} parent=1 // pred_fallthru
      _
    // Predicated region
    $region22: #{glac_gcn_forward.1} parent=1 // pred_check
      _
    $region23: #{glac_gcn_forward.1} parent=1 // pred_check_branch
      %77 = sbr.rel (0) target = $region25
    $region24: #{glac_gcn_forward.1} parent=1 // pred_region
      _
    $region25: #{glac_gcn_forward.1} parent=1 // pred_fallthru
      _
    // Predicated region
    $region26: #{glac_gcn_forward.1} parent=1 // pred_check
      _
    $region27: #{glac_gcn_forward.1} parent=1 // pred_check_branch
      %79 = sbr.rel (0) target = $region29
    $region28: #{glac_gcn_forward.1} parent=1 // pred_region
      _
    $region29: #{glac_gcn_forward.1} parent=1 // pred_fallthru
      _
    // Predicated region
    $region30: #{glac_gcn_forward.1} parent=1 // pred_check
      _
    $region31: #{glac_gcn_forward.1} parent=1 // pred_check_branch
      %81 = sbr.rel (0) target = $region33
    $region32: #{glac_gcn_forward.1} parent=1 // pred_region
      _
    $region33: #{glac_gcn_forward.1} parent=1 // pred_fallthru
      _
    // Predicated region
    $region34: #{glac_gcn_forward.1} parent=1 // pred_check
      _
    $region35: #{glac_gcn_forward.1} parent=1 // pred_check_branch
      %83 = sbr.rel (0) target = $region37
    $region36: #{glac_gcn_forward.1} parent=1 // pred_region
      _
    $region37: #{glac_gcn_forward.1} parent=1 // pred_fallthru
      _
    // Predicated region
    $region38: #{glac_gcn_forward.1} parent=1 // pred_check
      _
    $region39: #{glac_gcn_forward.1} parent=1 // pred_check_branch
      %85 = sbr.rel (0) target = $region41
    $region40: #{glac_gcn_forward.1} parent=1 // pred_region
      _
    $region41: #{glac_gcn_forward.1} parent=1 // pred_fallthru
      _
    // Predicated region
    $region42: #{glac_gcn_forward.1} parent=1 // pred_check
      _
    $region43: #{glac_gcn_forward.1} parent=1 // pred_check_branch
      %87 = sbr.rel (0) target = $region45
    $region44: #{glac_gcn_forward.1} parent=1 // pred_region
      _
    $region45: #{glac_gcn_forward.1} parent=1 // pred_fallthru
      _
    // Predicated region
    $region46: #{glac_gcn_forward.1} parent=1 // pred_check
      _
    $region47: #{glac_gcn_forward.1} parent=1 // pred_check_branch
      %89 = sbr.rel (0) target = $region49
    $region48: #{glac_gcn_forward.1} parent=1 // pred_region
      _
    $region49: #{glac_gcn_forward.1} parent=1 // pred_fallthru
      _
    // Predicated region
    $region50: #{glac_gcn_forward.1} parent=1 // pred_check
      _
    $region51: #{glac_gcn_forward.1} parent=1 // pred_check_branch
      %91 = sbr.rel (0) target = $region53
    $region52: #{glac_gcn_forward.1} parent=1 // pred_region
      _
    $region53: #{glac_gcn_forward.1} parent=1 // pred_fallthru
      _
    // Predicated region
    $region54: #{glac_gcn_forward.1} parent=1 // pred_check
      _
    $region55: #{glac_gcn_forward.1} parent=1 // pred_check_branch
      %93 = sbr.rel (0) target = $region57
    $region56: #{glac_gcn_forward.1} parent=1 // pred_region
      _
    $region57: #{glac_gcn_forward.1} parent=1 // pred_fallthru
      _
    // Predicated region
    $region58: #{glac_gcn_forward.1} parent=1 // pred_check
      _
    $region59: #{glac_gcn_forward.1} parent=1 // pred_check_branch
      %95 = sbr.rel (0) target = $region61
    $region60: #{glac_gcn_forward.1} parent=1 // pred_region
      _
    $region61: #{glac_gcn_forward.1} parent=1 // pred_fallthru
      _
    // Predicated region
    $region62: #{glac_gcn_forward.1} parent=1 // pred_check
      _
    $region63: #{glac_gcn_forward.1} parent=1 // pred_check_branch
      %97 = sbr.rel (0) target = $region65
    $region64: #{glac_gcn_forward.1} parent=1 // pred_region
      _
    $region65: #{glac_gcn_forward.1} parent=1 // pred_fallthru
      _
    // Predicated region
    $region66: #{glac_gcn_forward.1} parent=1 // pred_check
      _
    $region67: #{glac_gcn_forward.1} parent=1 // pred_check_branch
      %99 = sbr.rel (0) target = $region69
    $region68: #{glac_gcn_forward.1} parent=1 // pred_region
      _
    $region69: #{glac_gcn_forward.1} parent=1 // pred_fallthru
      _
    // Predicated region
    $region70: #{glac_gcn_forward.1} parent=1 // pred_check
      _
    $region71: #{glac_gcn_forward.1} parent=1 // pred_check_branch
      %101 = sbr.rel (0) target = $region73
    $region72: #{glac_gcn_forward.1} parent=1 // pred_region
      _
    $region73: #{glac_gcn_forward.1} parent=1 // pred_fallthru
      _
    // Predicated region
    $region74: #{glac_gcn_forward.1} parent=1 // pred_check
      _
    $region75: #{glac_gcn_forward.1} parent=1 // pred_check_branch
      %103 = sbr.rel (0) target = $region77
    $region76: #{glac_gcn_forward.1} parent=1 // pred_region
      _
    $region77: #{glac_gcn_forward.1} parent=1 // pred_fallthru
      _
    // Predicated region
    $region78: #{glac_gcn_forward.1} parent=1 // pred_check
      _
    $region79: #{glac_gcn_forward.1} parent=1 // pred_check_branch
      %105 = sbr.rel (0) target = $region81
    $region80: #{glac_gcn_forward.1} parent=1 // pred_region
      _
    $region81: #{glac_gcn_forward.1} parent=1 // pred_fallthru
      _
    // Predicated region
    $region82: #{glac_gcn_forward.1} parent=1 // pred_check
      _
    $region83: #{glac_gcn_forward.1} parent=1 // pred_check_branch
      %107 = sbr.rel (0) target = $region85
    $region84: #{glac_gcn_forward.1} parent=1 // pred_region
      _
    $region85: #{glac_gcn_forward.1} parent=1 // pred_fallthru
      _
    // Predicated region
    $region86: #{glac_gcn_forward.1} parent=1 // pred_check
      _
    $region87: #{glac_gcn_forward.1} parent=1 // pred_check_branch
      %109 = sbr.rel (0) target = $region89
    $region88: #{glac_gcn_forward.1} parent=1 // pred_region
      _
    $region89: #{glac_gcn_forward.1} parent=1 // pred_fallthru
      _
    // Predicated region
    $region90: #{glac_gcn_forward.1} parent=1 // pred_check
      _
    $region91: #{glac_gcn_forward.1} parent=1 // pred_check_branch
      %111 = sbr.rel (0) target = $region93
    $region92: #{glac_gcn_forward.1} parent=1 // pred_region
      _
    $region93: #{glac_gcn_forward.1} parent=1 // pred_fallthru
      _
    // Predicated region
    $region94: #{glac_gcn_forward.1} parent=1 // pred_check
      _
    $region95: #{glac_gcn_forward.1} parent=1 // pred_check_branch
      %113 = sbr.rel (0) target = $region97
    $region96: #{glac_gcn_forward.1} parent=1 // pred_region
      _
    $region97: #{glac_gcn_forward.1} parent=1 // pred_fallthru
      _
    // Predicated region
    $region98: #{glac_gcn_forward.1} parent=1 // pred_check
      _
    $region99: #{glac_gcn_forward.1} parent=1 // pred_check_branch
      %115 = sbr.rel (0) target = $region101
    $region100: #{glac_gcn_forward.1} parent=1 // pred_region
      _
    $region101: #{glac_gcn_forward.1} parent=1 // pred_fallthru
      _
    %v116 = vld [vmem:[%s1] sm:$0xff]
    %v117 = vld [vmem:[%s1 + $0x8] sm:$0xff]
    %v118 = vld [vmem:[%s3] sm:$0xff]
    %v119 = vld [vmem:[%s3 + $0x8] sm:$0xff]
    %v120 = vld [vmem:[%s5] sm:$0xff]
    %v121 = vld [vmem:[%s5 + $0x8] sm:$0xff]
    %v122 = vld [vmem:[%s7] sm:$0xff]
    %v123 = vld [vmem:[%s7 + $0x8] sm:$0xff]
    %v124 = vld [vmem:[%s7 + $0x10] sm:$0xff]
    %v125 = vld [vmem:[%s7 + $0x18] sm:$0xff]
    %v126 = vld [vmem:[%s9] sm:$0x1]
    %v128 = vlaneseq
    %v129 = vshrl.u32 %v128, 7
    %v130 = vsub.s32 0, %v129
    %v131 = vrot.slane %v126, %v130
    %vm133 = vcmask 261120
    %v135 = vsel %vm133, %v116, 0
    %v138 = vsel %vm133, %v117, 0
    %140 = vmatprep.subr.mxu0 0.0
    %141 = vmatpush1.msra.mxu0 %v122
    %142 = vmatprep.subr.mxu0 0.0
    %143 = vmatpush1.msra.mxu0 %v123
    %144 = vmatprep.subr.mxu0 0.0
    %145 = vmatpush1.msra.mxu0 %v124
    %146 = vmatprep.subr.mxu0 0.0
    %147 = vmatpush1.msra.mxu0 %v125
    %148 = vmatprep.subr.mxu0 0.0
    %149 = vmatpush1.msra.mxu0 0.0
    %150 = vmatprep.subr.mxu0 0.0
    %151 = vmatpush1.msra.mxu0 0.0
    %152 = vmatprep.subr.mxu0 0.0
    %153 = vmatpush1.msra.mxu0 0.0
    %154 = vmatprep.subr.mxu0 0.0
    %155 = vmatpush1.msra.mxu0 0.0
    %156 = vmatprep.subr.mxu0 0.0
    %157 = vmatpush1.msra.mxu0 0.0
    %158 = vmatprep.subr.mxu0 0.0
    %159 = vmatpush1.msra.mxu0 0.0
    %160 = vmatprep.subr.mxu0 0.0
    %161 = vmatpush1.msra.mxu0 0.0
    %162 = vmatprep.subr.mxu0 0.0
    %163 = vmatpush1.msra.mxu0 0.0
    %164 = vmatprep.subr.mxu0 0.0
    %165 = vmatpush1.msra.mxu0 0.0
    %166 = vmatprep.subr.mxu0 0.0
    %167 = vmatpush1.msra.mxu0 0.0
    %168 = vmatprep.subr.mxu0 0.0
    %169 = vmatpush1.msra.mxu0 0.0
    %170 = vmatprep.subr.mxu0 0.0
    %171 = vmatpush1.msra.mxu0 0.0
    %172 = vmatprep.subr.mxu0 0.0
    %173 = vmatpush1.msra.mxu0 0.0
    %174 = vmatprep.subr.mxu0 0.0
    %175 = vmatpush1.msra.mxu0 0.0
    %176 = vmatprep.subr.mxu0 0.0
    %177 = vmatpush1.msra.mxu0 0.0
    %178 = vmatprep.subr.mxu0 0.0
    %179 = vmatpush1.msra.mxu0 0.0
    %180 = vmatprep.subr.mxu0 0.0
    %181 = vmatpush1.msra.mxu0 0.0
    %182 = vmatprep.subr.mxu0 0.0
    %183 = vmatpush1.msra.mxu0 0.0
    %184 = vmatprep.subr.mxu0 0.0
    %185 = vmatpush1.msra.mxu0 0.0
    %186 = vmatprep.subr.mxu0 0.0
    %187 = vmatpush1.msra.mxu0 0.0
    %188 = vmatprep.subr.mxu0 0.0
    %189 = vmatpush1.msra.mxu0 0.0
    %190 = vmatprep.subr.mxu0 0.0
    %191 = vmatpush1.msra.mxu0 0.0
    %192 = vmatprep.subr.mxu0 0.0
    %193 = vmatpush1.msra.mxu0 0.0
    %194 = vmatprep.subr.mxu0 0.0
    %195 = vmatpush1.msra.mxu0 0.0
    %196 = vmatprep.subr.mxu0 0.0
    %197 = vmatpush1.msra.mxu0 0.0
    %198 = vmatprep.subr.mxu0 0.0
    %199 = vmatpush1.msra.mxu0 0.0
    %200 = vmatprep.subr.mxu0 0.0
    %201 = vmatpush1.msra.mxu0 0.0
    %202 = vmatprep.subr.mxu0 0.0
    %203 = vmatpush1.msra.mxu0 0.0
    %204 = vmatprep.mubr.f32.mxu0 0.0
    %205 = vmatmul.mubr.f32.gmra.mrb[0].mxu0 %v135
    %v206 = vpop.f32.mrb[0].mxu0
    %v207 = vadd.f32 %v131, %v206
    %v208 = vpop.f32.mrb[0].mxu0
    %209 = vmatprep.mubr.f32.mxu0 0.0
    %210 = vmatmul.mubr.f32.gmra.mrb[0].mxu0 %v138
    %v211 = vpop.f32.mrb[0].mxu0
    %v212 = vadd.f32 %v131, %v211
    %v213 = vpop.f32.mrb[0].mxu0
    %214 = vdwg.mxu0
    %v215 = vmax.f32 %v207, 0.0
    %v216 = vmax.f32 %v212, 0.0
    %v217 = vld [vmem:[%s11] sm:$0xff]
    %v218 = vld [vmem:[%s11 + $0x8] sm:$0xff]
    %v219 = vld [vmem:[%s13] sm:$0x1]
    %v221 = vlaneseq
    %v222 = vshrl.u32 %v221, 7
    %v223 = vsub.s32 0, %v222
    %v224 = vrot.slane %v219, %v223
    %vm226 = vcmask 130048
    %v228 = vsel %vm226, %v215, 0
    %v231 = vsel %vm226, %v216, 0
    %233 = vmatprep.subr.mxu0 0.0
    %234 = vmatpush1.msra.mxu0 %v217
    %235 = vmatprep.subr.mxu0 0.0
    %236 = vmatpush1.msra.mxu0 %v218
    %237 = vmatprep.subr.mxu0 0.0
    %238 = vmatpush1.msra.mxu0 0.0
    %239 = vmatprep.subr.mxu0 0.0
    %240 = vmatpush1.msra.mxu0 0.0
    %241 = vmatprep.subr.mxu0 0.0
    %242 = vmatpush1.msra.mxu0 0.0
    %243 = vmatprep.subr.mxu0 0.0
    %244 = vmatpush1.msra.mxu0 0.0
    %245 = vmatprep.subr.mxu0 0.0
    %246 = vmatpush1.msra.mxu0 0.0
    %247 = vmatprep.subr.mxu0 0.0
    %248 = vmatpush1.msra.mxu0 0.0
    %249 = vmatprep.subr.mxu0 0.0
    %250 = vmatpush1.msra.mxu0 0.0
    %251 = vmatprep.subr.mxu0 0.0
    %252 = vmatpush1.msra.mxu0 0.0
    %253 = vmatprep.subr.mxu0 0.0
    %254 = vmatpush1.msra.mxu0 0.0
    %255 = vmatprep.subr.mxu0 0.0
    %256 = vmatpush1.msra.mxu0 0.0
    %257 = vmatprep.subr.mxu0 0.0
    %258 = vmatpush1.msra.mxu0 0.0
    %259 = vmatprep.subr.mxu0 0.0
    %260 = vmatpush1.msra.mxu0 0.0
    %261 = vmatprep.subr.mxu0 0.0
    %262 = vmatpush1.msra.mxu0 0.0
    %263 = vmatprep.subr.mxu0 0.0
    %264 = vmatpush1.msra.mxu0 0.0
    %265 = vmatprep.subr.mxu0 0.0
    %266 = vmatpush1.msra.mxu0 0.0
    %267 = vmatprep.subr.mxu0 0.0
    %268 = vmatpush1.msra.mxu0 0.0
    %269 = vmatprep.subr.mxu0 0.0
    %270 = vmatpush1.msra.mxu0 0.0
    %271 = vmatprep.subr.mxu0 0.0
    %272 = vmatpush1.msra.mxu0 0.0
    %273 = vmatprep.subr.mxu0 0.0
    %274 = vmatpush1.msra.mxu0 0.0
    %275 = vmatprep.subr.mxu0 0.0
    %276 = vmatpush1.msra.mxu0 0.0
    %277 = vmatprep.subr.mxu0 0.0
    %278 = vmatpush1.msra.mxu0 0.0
    %279 = vmatprep.subr.mxu0 0.0
    %280 = vmatpush1.msra.mxu0 0.0
    %281 = vmatprep.subr.mxu0 0.0
    %282 = vmatpush1.msra.mxu0 0.0
    %283 = vmatprep.subr.mxu0 0.0
    %284 = vmatpush1.msra.mxu0 0.0
    %285 = vmatprep.subr.mxu0 0.0
    %286 = vmatpush1.msra.mxu0 0.0
    %287 = vmatprep.subr.mxu0 0.0
    %288 = vmatpush1.msra.mxu0 0.0
    %289 = vmatprep.subr.mxu0 0.0
    %290 = vmatpush1.msra.mxu0 0.0
    %291 = vmatprep.subr.mxu0 0.0
    %292 = vmatpush1.msra.mxu0 0.0
    %293 = vmatprep.subr.mxu0 0.0
    %294 = vmatpush1.msra.mxu0 0.0
    %295 = vmatprep.subr.mxu0 0.0
    %296 = vmatpush1.msra.mxu0 0.0
    %297 = vmatprep.mubr.f32.mxu0 0.0
    %298 = vmatmul.mubr.f32.gmra.mrb[0].mxu0 %v228
    %v299 = vpop.f32.mrb[0].mxu0
    %v300 = vadd.f32 %v224, %v299
    %v301 = vpop.f32.mrb[0].mxu0
    %302 = vmatprep.mubr.f32.mxu0 0.0
    %303 = vmatmul.mubr.f32.gmra.mrb[0].mxu0 %v231
    %v304 = vpop.f32.mrb[0].mxu0
    %v305 = vadd.f32 %v224, %v304
    %v306 = vpop.f32.mrb[0].mxu0
    %307 = vdwg.mxu0
    %v308 = vmax.f32 %v300, 0.0
    %v309 = vmax.f32 %v305, 0.0
    %v310 = vld [vmem:[%s15] sm:$0xff]
    %v311 = vld [vmem:[%s15 + $0x8] sm:$0xff]
    %v312 = vld [vmem:[%s17] sm:$0x1]
    %v314 = vlaneseq
    %v315 = vshrl.u32 %v314, 7
    %v316 = vsub.s32 0, %v315
    %v317 = vrot.slane %v312, %v316
    %v320 = vsel %vm226, %v308, 0
    %v323 = vsel %vm226, %v309, 0
    %325 = vmatprep.subr.mxu0 0.0
    %326 = vmatpush1.msra.mxu0 %v310
    %327 = vmatprep.subr.mxu0 0.0
    %328 = vmatpush1.msra.mxu0 %v311
    %329 = vmatprep.subr.mxu0 0.0
    %330 = vmatpush1.msra.mxu0 0.0
    %331 = vmatprep.subr.mxu0 0.0
    %332 = vmatpush1.msra.mxu0 0.0
    %333 = vmatprep.subr.mxu0 0.0
    %334 = vmatpush1.msra.mxu0 0.0
    %335 = vmatprep.subr.mxu0 0.0
    %336 = vmatpush1.msra.mxu0 0.0
    %337 = vmatprep.subr.mxu0 0.0
    %338 = vmatpush1.msra.mxu0 0.0
    %339 = vmatprep.subr.mxu0 0.0
    %340 = vmatpush1.msra.mxu0 0.0
    %341 = vmatprep.subr.mxu0 0.0
    %342 = vmatpush1.msra.mxu0 0.0
    %343 = vmatprep.subr.mxu0 0.0
    %344 = vmatpush1.msra.mxu0 0.0
    %345 = vmatprep.subr.mxu0 0.0
    %346 = vmatpush1.msra.mxu0 0.0
    %347 = vmatprep.subr.mxu0 0.0
    %348 = vmatpush1.msra.mxu0 0.0
    %349 = vmatprep.subr.mxu0 0.0
    %350 = vmatpush1.msra.mxu0 0.0
    %351 = vmatprep.subr.mxu0 0.0
    %352 = vmatpush1.msra.mxu0 0.0
    %353 = vmatprep.subr.mxu0 0.0
    %354 = vmatpush1.msra.mxu0 0.0
    %355 = vmatprep.subr.mxu0 0.0
    %356 = vmatpush1.msra.mxu0 0.0
    %357 = vmatprep.subr.mxu0 0.0
    %358 = vmatpush1.msra.mxu0 0.0
    %359 = vmatprep.subr.mxu0 0.0
    %360 = vmatpush1.msra.mxu0 0.0
    %361 = vmatprep.subr.mxu0 0.0
    %362 = vmatpush1.msra.mxu0 0.0
    %363 = vmatprep.subr.mxu0 0.0
    %364 = vmatpush1.msra.mxu0 0.0
    %365 = vmatprep.subr.mxu0 0.0
    %366 = vmatpush1.msra.mxu0 0.0
    %367 = vmatprep.subr.mxu0 0.0
    %368 = vmatpush1.msra.mxu0 0.0
    %369 = vmatprep.subr.mxu0 0.0
    %370 = vmatpush1.msra.mxu0 0.0
    %371 = vmatprep.subr.mxu0 0.0
    %372 = vmatpush1.msra.mxu0 0.0
    %373 = vmatprep.subr.mxu0 0.0
    %374 = vmatpush1.msra.mxu0 0.0
    %375 = vmatprep.subr.mxu0 0.0
    %376 = vmatpush1.msra.mxu0 0.0
    %377 = vmatprep.subr.mxu0 0.0
    %378 = vmatpush1.msra.mxu0 0.0
    %379 = vmatprep.subr.mxu0 0.0
    %380 = vmatpush1.msra.mxu0 0.0
    %381 = vmatprep.subr.mxu0 0.0
    %382 = vmatpush1.msra.mxu0 0.0
    %383 = vmatprep.subr.mxu0 0.0
    %384 = vmatpush1.msra.mxu0 0.0
    %385 = vmatprep.subr.mxu0 0.0
    %386 = vmatpush1.msra.mxu0 0.0
    %387 = vmatprep.subr.mxu0 0.0
    %388 = vmatpush1.msra.mxu0 0.0
    %389 = vmatprep.mubr.f32.mxu0 0.0
    %390 = vmatmul.mubr.f32.gmra.mrb[0].mxu0 %v320
    %v391 = vpop.f32.mrb[0].mxu0
    %v392 = vadd.f32 %v317, %v391
    %v393 = vpop.f32.mrb[0].mxu0
    %394 = vmatprep.mubr.f32.mxu0 0.0
    %395 = vmatmul.mubr.f32.gmra.mrb[0].mxu0 %v323
    %v396 = vpop.f32.mrb[0].mxu0
    %v397 = vadd.f32 %v317, %v396
    %v398 = vpop.f32.mrb[0].mxu0
    %399 = vdwg.mxu0
    %v400 = vmax.f32 %v392, 0.0
    %v401 = vmax.f32 %v397, 0.0
    %v402 = vld [vmem:[%s19] sm:$0xff]
    %v403 = vld [vmem:[%s19 + $0x8] sm:$0xff]
    %v404 = vld [vmem:[%s19 + $0x10] sm:$0xff]
    %v405 = vld [vmem:[%s19 + $0x18] sm:$0xff]
    %v406 = vld [vmem:[%s21] sm:$0x1]
    %v408 = vlaneseq
    %v409 = vshrl.u32 %v408, 7
    %v410 = vsub.s32 0, %v409
    %v411 = vrot.slane %v406, %v410
    %v414 = vsel %vm133, %v400, 0
    %v417 = vsel %vm133, %v401, 0
    %419 = vmatprep.subr.mxu0 0.0
    %420 = vmatpush1.msra.mxu0 %v402
    %421 = vmatprep.subr.mxu0 0.0
    %422 = vmatpush1.msra.mxu0 %v403
    %423 = vmatprep.subr.mxu0 0.0
    %424 = vmatpush1.msra.mxu0 %v404
    %425 = vmatprep.subr.mxu0 0.0
    %426 = vmatpush1.msra.mxu0 %v405
    %427 = vmatprep.subr.mxu0 0.0
    %428 = vmatpush1.msra.mxu0 0.0
    %429 = vmatprep.subr.mxu0 0.0
    %430 = vmatpush1.msra.mxu0 0.0
    %431 = vmatprep.subr.mxu0 0.0
    %432 = vmatpush1.msra.mxu0 0.0
    %433 = vmatprep.subr.mxu0 0.0
    %434 = vmatpush1.msra.mxu0 0.0
    %435 = vmatprep.subr.mxu0 0.0
    %436 = vmatpush1.msra.mxu0 0.0
    %437 = vmatprep.subr.mxu0 0.0
    %438 = vmatpush1.msra.mxu0 0.0
    %439 = vmatprep.subr.mxu0 0.0
    %440 = vmatpush1.msra.mxu0 0.0
    %441 = vmatprep.subr.mxu0 0.0
    %442 = vmatpush1.msra.mxu0 0.0
    %443 = vmatprep.subr.mxu0 0.0
    %444 = vmatpush1.msra.mxu0 0.0
    %445 = vmatprep.subr.mxu0 0.0
    %446 = vmatpush1.msra.mxu0 0.0
    %447 = vmatprep.subr.mxu0 0.0
    %448 = vmatpush1.msra.mxu0 0.0
    %449 = vmatprep.subr.mxu0 0.0
    %450 = vmatpush1.msra.mxu0 0.0
    %451 = vmatprep.subr.mxu0 0.0
    %452 = vmatpush1.msra.mxu0 0.0
    %453 = vmatprep.subr.mxu0 0.0
    %454 = vmatpush1.msra.mxu0 0.0
    %455 = vmatprep.subr.mxu0 0.0
    %456 = vmatpush1.msra.mxu0 0.0
    %457 = vmatprep.subr.mxu0 0.0
    %458 = vmatpush1.msra.mxu0 0.0
    %459 = vmatprep.subr.mxu0 0.0
    %460 = vmatpush1.msra.mxu0 0.0
    %461 = vmatprep.subr.mxu0 0.0
    %462 = vmatpush1.msra.mxu0 0.0
    %463 = vmatprep.subr.mxu0 0.0
    %464 = vmatpush1.msra.mxu0 0.0
    %465 = vmatprep.subr.mxu0 0.0
    %466 = vmatpush1.msra.mxu0 0.0
    %467 = vmatprep.subr.mxu0 0.0
    %468 = vmatpush1.msra.mxu0 0.0
    %469 = vmatprep.subr.mxu0 0.0
    %470 = vmatpush1.msra.mxu0 0.0
    %471 = vmatprep.subr.mxu0 0.0
    %472 = vmatpush1.msra.mxu0 0.0
    %473 = vmatprep.subr.mxu0 0.0
    %474 = vmatpush1.msra.mxu0 0.0
    %475 = vmatprep.subr.mxu0 0.0
    %476 = vmatpush1.msra.mxu0 0.0
    %477 = vmatprep.subr.mxu0 0.0
    %478 = vmatpush1.msra.mxu0 0.0
    %479 = vmatprep.subr.mxu0 0.0
    %480 = vmatpush1.msra.mxu0 0.0
    %481 = vmatprep.subr.mxu0 0.0
    %482 = vmatpush1.msra.mxu0 0.0
    %483 = vmatprep.mubr.f32.mxu0 0.0
    %484 = vmatmul.mubr.f32.gmra.mrb[0].mxu0 %v414
    %v485 = vpop.f32.mrb[0].mxu0
    %v486 = vadd.f32 %v411, %v485
    %v487 = vpop.f32.mrb[0].mxu0
    %488 = vmatprep.mubr.f32.mxu0 0.0
    %489 = vmatmul.mubr.f32.gmra.mrb[0].mxu0 %v417
    %v490 = vpop.f32.mrb[0].mxu0
    %v491 = vadd.f32 %v411, %v490
    %v492 = vpop.f32.mrb[0].mxu0
    %493 = vdwg.mxu0
    %v494 = vld [vmem:[%s23] sm:$0xff]
    %v495 = vld [vmem:[%s25] sm:$0x1]
    %v497 = vlaneseq
    %v498 = vshrl.u32 %v497, 7
    %v499 = vsub.s32 0, %v498
    %v500 = vrot.slane %v495, %v499
    %vm502 = vcmask 64512
    %v504 = vsel %vm502, %v486, 0
    %v507 = vsel %vm502, %v491, 0
    %509 = vmatprep.subr.mxu0 0.0
    %510 = vmatpush1.msra.mxu0 %v494
    %511 = vmatprep.subr.mxu0 0.0
    %512 = vmatpush1.msra.mxu0 0.0
    %513 = vmatprep.subr.mxu0 0.0
    %514 = vmatpush1.msra.mxu0 0.0
    %515 = vmatprep.subr.mxu0 0.0
    %516 = vmatpush1.msra.mxu0 0.0
    %517 = vmatprep.subr.mxu0 0.0
    %518 = vmatpush1.msra.mxu0 0.0
    %519 = vmatprep.subr.mxu0 0.0
    %520 = vmatpush1.msra.mxu0 0.0
    %521 = vmatprep.subr.mxu0 0.0
    %522 = vmatpush1.msra.mxu0 0.0
    %523 = vmatprep.subr.mxu0 0.0
    %524 = vmatpush1.msra.mxu0 0.0
    %525 = vmatprep.subr.mxu0 0.0
    %526 = vmatpush1.msra.mxu0 0.0
    %527 = vmatprep.subr.mxu0 0.0
    %528 = vmatpush1.msra.mxu0 0.0
    %529 = vmatprep.subr.mxu0 0.0
    %530 = vmatpush1.msra.mxu0 0.0
    %531 = vmatprep.subr.mxu0 0.0
    %532 = vmatpush1.msra.mxu0 0.0
    %533 = vmatprep.subr.mxu0 0.0
    %534 = vmatpush1.msra.mxu0 0.0
    %535 = vmatprep.subr.mxu0 0.0
    %536 = vmatpush1.msra.mxu0 0.0
    %537 = vmatprep.subr.mxu0 0.0
    %538 = vmatpush1.msra.mxu0 0.0
    %539 = vmatprep.subr.mxu0 0.0
    %540 = vmatpush1.msra.mxu0 0.0
    %541 = vmatprep.subr.mxu0 0.0
    %542 = vmatpush1.msra.mxu0 0.0
    %543 = vmatprep.subr.mxu0 0.0
    %544 = vmatpush1.msra.mxu0 0.0
    %545 = vmatprep.subr.mxu0 0.0
    %546 = vmatpush1.msra.mxu0 0.0
    %547 = vmatprep.subr.mxu0 0.0
    %548 = vmatpush1.msra.mxu0 0.0
    %549 = vmatprep.subr.mxu0 0.0
    %550 = vmatpush1.msra.mxu0 0.0
    %551 = vmatprep.subr.mxu0 0.0
    %552 = vmatpush1.msra.mxu0 0.0
    %553 = vmatprep.subr.mxu0 0.0
    %554 = vmatpush1.msra.mxu0 0.0
    %555 = vmatprep.subr.mxu0 0.0
    %556 = vmatpush1.msra.mxu0 0.0
    %557 = vmatprep.subr.mxu0 0.0
    %558 = vmatpush1.msra.mxu0 0.0
    %559 = vmatprep.subr.mxu0 0.0
    %560 = vmatpush1.msra.mxu0 0.0
    %561 = vmatprep.subr.mxu0 0.0
    %562 = vmatpush1.msra.mxu0 0.0
    %563 = vmatprep.subr.mxu0 0.0
    %564 = vmatpush1.msra.mxu0 0.0
    %565 = vmatprep.subr.mxu0 0.0
    %566 = vmatpush1.msra.mxu0 0.0
    %567 = vmatprep.subr.mxu0 0.0
    %568 = vmatpush1.msra.mxu0 0.0
    %569 = vmatprep.subr.mxu0 0.0
    %570 = vmatpush1.msra.mxu0 0.0
    %571 = vmatprep.subr.mxu0 0.0
    %572 = vmatpush1.msra.mxu0 0.0
    %573 = vmatprep.mubr.f32.mxu0 0.0
    %574 = vmatmul.mubr.f32.gmra.mrb[0].mxu0 %v504
    %v575 = vpop.f32.mrb[0].mxu0
    %v576 = vadd.f32 %v500, %v575
    %v577 = vpop.f32.mrb[0].mxu0
    %578 = vmatprep.mubr.f32.mxu0 0.0
    %579 = vmatmul.mubr.f32.gmra.mrb[0].mxu0 %v507
    %v580 = vpop.f32.mrb[0].mxu0
    %v581 = vadd.f32 %v500, %v580
    %v582 = vpop.f32.mrb[0].mxu0
    %583 = vdwg.mxu0
    %v584 = vmax.f32 %v576, 0.0
    %v585 = vmax.f32 %v581, 0.0
    %v586 = vld [vmem:[%s27] sm:$0xff]
    %v587 = vld [vmem:[%s27 + $0x8] sm:$0xff]
    %v588 = vld [vmem:[%s27 + $0x10] sm:$0xff]
    %v589 = vld [vmem:[%s27 + $0x18] sm:$0xff]
    %v590 = vld [vmem:[%s29] sm:$0x1]
    %v592 = vlaneseq
    %v593 = vshrl.u32 %v592, 7
    %v594 = vsub.s32 0, %v593
    %v595 = vrot.slane %v590, %v594
    %v598 = vsel %vm133, %v584, 0
    %v601 = vsel %vm133, %v585, 0
    %603 = vmatprep.subr.mxu0 0.0
    %604 = vmatpush1.msra.mxu0 %v586
    %605 = vmatprep.subr.mxu0 0.0
    %606 = vmatpush1.msra.mxu0 %v587
    %607 = vmatprep.subr.mxu0 0.0
    %608 = vmatpush1.msra.mxu0 %v588
    %609 = vmatprep.subr.mxu0 0.0
    %610 = vmatpush1.msra.mxu0 %v589
    %611 = vmatprep.subr.mxu0 0.0
    %612 = vmatpush1.msra.mxu0 0.0
    %613 = vmatprep.subr.mxu0 0.0
    %614 = vmatpush1.msra.mxu0 0.0
    %615 = vmatprep.subr.mxu0 0.0
    %616 = vmatpush1.msra.mxu0 0.0
    %617 = vmatprep.subr.mxu0 0.0
    %618 = vmatpush1.msra.mxu0 0.0
    %619 = vmatprep.subr.mxu0 0.0
    %620 = vmatpush1.msra.mxu0 0.0
    %621 = vmatprep.subr.mxu0 0.0
    %622 = vmatpush1.msra.mxu0 0.0
    %623 = vmatprep.subr.mxu0 0.0
    %624 = vmatpush1.msra.mxu0 0.0
    %625 = vmatprep.subr.mxu0 0.0
    %626 = vmatpush1.msra.mxu0 0.0
    %627 = vmatprep.subr.mxu0 0.0
    %628 = vmatpush1.msra.mxu0 0.0
    %629 = vmatprep.subr.mxu0 0.0
    %630 = vmatpush1.msra.mxu0 0.0
    %631 = vmatprep.subr.mxu0 0.0
    %632 = vmatpush1.msra.mxu0 0.0
    %633 = vmatprep.subr.mxu0 0.0
    %634 = vmatpush1.msra.mxu0 0.0
    %635 = vmatprep.subr.mxu0 0.0
    %636 = vmatpush1.msra.mxu0 0.0
    %637 = vmatprep.subr.mxu0 0.0
    %638 = vmatpush1.msra.mxu0 0.0
    %639 = vmatprep.subr.mxu0 0.0
    %640 = vmatpush1.msra.mxu0 0.0
    %641 = vmatprep.subr.mxu0 0.0
    %642 = vmatpush1.msra.mxu0 0.0
    %643 = vmatprep.subr.mxu0 0.0
    %644 = vmatpush1.msra.mxu0 0.0
    %645 = vmatprep.subr.mxu0 0.0
    %646 = vmatpush1.msra.mxu0 0.0
    %647 = vmatprep.subr.mxu0 0.0
    %648 = vmatpush1.msra.mxu0 0.0
    %649 = vmatprep.subr.mxu0 0.0
    %650 = vmatpush1.msra.mxu0 0.0
    %651 = vmatprep.subr.mxu0 0.0
    %652 = vmatpush1.msra.mxu0 0.0
    %653 = vmatprep.subr.mxu0 0.0
    %654 = vmatpush1.msra.mxu0 0.0
    %655 = vmatprep.subr.mxu0 0.0
    %656 = vmatpush1.msra.mxu0 0.0
    %657 = vmatprep.subr.mxu0 0.0
    %658 = vmatpush1.msra.mxu0 0.0
    %659 = vmatprep.subr.mxu0 0.0
    %660 = vmatpush1.msra.mxu0 0.0
    %661 = vmatprep.subr.mxu0 0.0
    %662 = vmatpush1.msra.mxu0 0.0
    %663 = vmatprep.subr.mxu0 0.0
    %664 = vmatpush1.msra.mxu0 0.0
    %665 = vmatprep.subr.mxu0 0.0
    %666 = vmatpush1.msra.mxu0 0.0
    %667 = vmatprep.mubr.f32.mxu0 0.0
    %668 = vmatmul.mubr.f32.gmra.mrb[0].mxu0 %v598
    %v669 = vpop.f32.mrb[0].mxu0
    %v670 = vadd.f32 %v595, %v669
    %v671 = vpop.f32.mrb[0].mxu0
    %672 = vmatprep.mubr.f32.mxu0 0.0
    %673 = vmatmul.mubr.f32.gmra.mrb[0].mxu0 %v601
    %v674 = vpop.f32.mrb[0].mxu0
    %v675 = vadd.f32 %v595, %v674
    %v676 = vpop.f32.mrb[0].mxu0
    %677 = vdwg.mxu0
    %v678 = vmax.f32 %v670, 0.0
    %v679 = vmax.f32 %v675, 0.0
    %v680 = vld [vmem:[%s31] sm:$0xff]
    %v681 = vld [vmem:[%s31 + $0x8] sm:$0xff]
    %v682 = vld [vmem:[%s33] sm:$0x1]
    %v684 = vlaneseq
    %v685 = vshrl.u32 %v684, 7
    %v686 = vsub.s32 0, %v685
    %v687 = vrot.slane %v682, %v686
    %v690 = vsel %vm226, %v678, 0
    %v693 = vsel %vm226, %v679, 0
    %695 = vmatprep.subr.mxu0 0.0
    %696 = vmatpush1.msra.mxu0 %v680
    %697 = vmatprep.subr.mxu0 0.0
    %698 = vmatpush1.msra.mxu0 %v681
    %699 = vmatprep.subr.mxu0 0.0
    %700 = vmatpush1.msra.mxu0 0.0
    %701 = vmatprep.subr.mxu0 0.0
    %702 = vmatpush1.msra.mxu0 0.0
    %703 = vmatprep.subr.mxu0 0.0
    %704 = vmatpush1.msra.mxu0 0.0
    %705 = vmatprep.subr.mxu0 0.0
    %706 = vmatpush1.msra.mxu0 0.0
    %707 = vmatprep.subr.mxu0 0.0
    %708 = vmatpush1.msra.mxu0 0.0
    %709 = vmatprep.subr.mxu0 0.0
    %710 = vmatpush1.msra.mxu0 0.0
    %711 = vmatprep.subr.mxu0 0.0
    %712 = vmatpush1.msra.mxu0 0.0
    %713 = vmatprep.subr.mxu0 0.0
    %714 = vmatpush1.msra.mxu0 0.0
    %715 = vmatprep.subr.mxu0 0.0
    %716 = vmatpush1.msra.mxu0 0.0
    %717 = vmatprep.subr.mxu0 0.0
    %718 = vmatpush1.msra.mxu0 0.0
    %719 = vmatprep.subr.mxu0 0.0
    %720 = vmatpush1.msra.mxu0 0.0
    %721 = vmatprep.subr.mxu0 0.0
    %722 = vmatpush1.msra.mxu0 0.0
    %723 = vmatprep.subr.mxu0 0.0
    %724 = vmatpush1.msra.mxu0 0.0
    %725 = vmatprep.subr.mxu0 0.0
    %726 = vmatpush1.msra.mxu0 0.0
    %727 = vmatprep.subr.mxu0 0.0
    %728 = vmatpush1.msra.mxu0 0.0
    %729 = vmatprep.subr.mxu0 0.0
    %730 = vmatpush1.msra.mxu0 0.0
    %731 = vmatprep.subr.mxu0 0.0
    %732 = vmatpush1.msra.mxu0 0.0
    %733 = vmatprep.subr.mxu0 0.0
    %734 = vmatpush1.msra.mxu0 0.0
    %735 = vmatprep.subr.mxu0 0.0
    %736 = vmatpush1.msra.mxu0 0.0
    %737 = vmatprep.subr.mxu0 0.0
    %738 = vmatpush1.msra.mxu0 0.0
    %739 = vmatprep.subr.mxu0 0.0
    %740 = vmatpush1.msra.mxu0 0.0
    %741 = vmatprep.subr.mxu0 0.0
    %742 = vmatpush1.msra.mxu0 0.0
    %743 = vmatprep.subr.mxu0 0.0
    %744 = vmatpush1.msra.mxu0 0.0
    %745 = vmatprep.subr.mxu0 0.0
    %746 = vmatpush1.msra.mxu0 0.0
    %747 = vmatprep.subr.mxu0 0.0
    %748 = vmatpush1.msra.mxu0 0.0
    %749 = vmatprep.subr.mxu0 0.0
    %750 = vmatpush1.msra.mxu0 0.0
    %751 = vmatprep.subr.mxu0 0.0
    %752 = vmatpush1.msra.mxu0 0.0
    %753 = vmatprep.subr.mxu0 0.0
    %754 = vmatpush1.msra.mxu0 0.0
    %755 = vmatprep.subr.mxu0 0.0
    %756 = vmatpush1.msra.mxu0 0.0
    %757 = vmatprep.subr.mxu0 0.0
    %758 = vmatpush1.msra.mxu0 0.0
    %759 = vmatprep.mubr.f32.mxu0 0.0
    %760 = vmatmul.mubr.f32.gmra.mrb[0].mxu0 %v690
    %v761 = vpop.f32.mrb[0].mxu0
    %v762 = vadd.f32 %v687, %v761
    %v763 = vpop.f32.mrb[0].mxu0
    %764 = vmatprep.mubr.f32.mxu0 0.0
    %765 = vmatmul.mubr.f32.gmra.mrb[0].mxu0 %v693
    %v766 = vpop.f32.mrb[0].mxu0
    %v767 = vadd.f32 %v687, %v766
    %v768 = vpop.f32.mrb[0].mxu0
    %769 = vdwg.mxu0
    %v770 = vmax.f32 %v762, 0.0
    %v771 = vmax.f32 %v767, 0.0
    %v772 = vld [vmem:[%s35] sm:$0xff]
    %v773 = vld [vmem:[%s35 + $0x8] sm:$0xff]
    %v774 = vld [vmem:[%s37] sm:$0x1]
    %v776 = vlaneseq
    %v777 = vshrl.u32 %v776, 7
    %v778 = vsub.s32 0, %v777
    %v779 = vrot.slane %v774, %v778
    %v782 = vsel %vm226, %v770, 0
    %v785 = vsel %vm226, %v771, 0
    %787 = vmatprep.subr.mxu0 0.0
    %788 = vmatpush1.msra.mxu0 %v772
    %789 = vmatprep.subr.mxu0 0.0
    %790 = vmatpush1.msra.mxu0 %v773
    %791 = vmatprep.subr.mxu0 0.0
    %792 = vmatpush1.msra.mxu0 0.0
    %793 = vmatprep.subr.mxu0 0.0
    %794 = vmatpush1.msra.mxu0 0.0
    %795 = vmatprep.subr.mxu0 0.0
    %796 = vmatpush1.msra.mxu0 0.0
    %797 = vmatprep.subr.mxu0 0.0
    %798 = vmatpush1.msra.mxu0 0.0
    %799 = vmatprep.subr.mxu0 0.0
    %800 = vmatpush1.msra.mxu0 0.0
    %801 = vmatprep.subr.mxu0 0.0
    %802 = vmatpush1.msra.mxu0 0.0
    %803 = vmatprep.subr.mxu0 0.0
    %804 = vmatpush1.msra.mxu0 0.0
    %805 = vmatprep.subr.mxu0 0.0
    %806 = vmatpush1.msra.mxu0 0.0
    %807 = vmatprep.subr.mxu0 0.0
    %808 = vmatpush1.msra.mxu0 0.0
    %809 = vmatprep.subr.mxu0 0.0
    %810 = vmatpush1.msra.mxu0 0.0
    %811 = vmatprep.subr.mxu0 0.0
    %812 = vmatpush1.msra.mxu0 0.0
    %813 = vmatprep.subr.mxu0 0.0
    %814 = vmatpush1.msra.mxu0 0.0
    %815 = vmatprep.subr.mxu0 0.0
    %816 = vmatpush1.msra.mxu0 0.0
    %817 = vmatprep.subr.mxu0 0.0
    %818 = vmatpush1.msra.mxu0 0.0
    %819 = vmatprep.subr.mxu0 0.0
    %820 = vmatpush1.msra.mxu0 0.0
    %821 = vmatprep.subr.mxu0 0.0
    %822 = vmatpush1.msra.mxu0 0.0
    %823 = vmatprep.subr.mxu0 0.0
    %824 = vmatpush1.msra.mxu0 0.0
    %825 = vmatprep.subr.mxu0 0.0
    %826 = vmatpush1.msra.mxu0 0.0
    %827 = vmatprep.subr.mxu0 0.0
    %828 = vmatpush1.msra.mxu0 0.0
    %829 = vmatprep.subr.mxu0 0.0
    %830 = vmatpush1.msra.mxu0 0.0
    %831 = vmatprep.subr.mxu0 0.0
    %832 = vmatpush1.msra.mxu0 0.0
    %833 = vmatprep.subr.mxu0 0.0
    %834 = vmatpush1.msra.mxu0 0.0
    %835 = vmatprep.subr.mxu0 0.0
    %836 = vmatpush1.msra.mxu0 0.0
    %837 = vmatprep.subr.mxu0 0.0
    %838 = vmatpush1.msra.mxu0 0.0
    %839 = vmatprep.subr.mxu0 0.0
    %840 = vmatpush1.msra.mxu0 0.0
    %841 = vmatprep.subr.mxu0 0.0
    %842 = vmatpush1.msra.mxu0 0.0
    %843 = vmatprep.subr.mxu0 0.0
    %844 = vmatpush1.msra.mxu0 0.0
    %845 = vmatprep.subr.mxu0 0.0
    %846 = vmatpush1.msra.mxu0 0.0
    %847 = vmatprep.subr.mxu0 0.0
    %848 = vmatpush1.msra.mxu0 0.0
    %849 = vmatprep.subr.mxu0 0.0
    %850 = vmatpush1.msra.mxu0 0.0
    %851 = vmatprep.mubr.f32.mxu0 0.0
    %852 = vmatmul.mubr.f32.gmra.mrb[0].mxu0 %v782
    %v853 = vpop.f32.mrb[0].mxu0
    %v854 = vadd.f32 %v779, %v853
    %v855 = vpop.f32.mrb[0].mxu0
    %856 = vmatprep.mubr.f32.mxu0 0.0
    %857 = vmatmul.mubr.f32.gmra.mrb[0].mxu0 %v785
    %v858 = vpop.f32.mrb[0].mxu0
    %v859 = vadd.f32 %v779, %v858
    %v860 = vpop.f32.mrb[0].mxu0
    %861 = vdwg.mxu0
    %862 = vst.msk [vmem:[#allocation2] sm:$0xff] %vm133, %v854
    %863 = vst.msk [vmem:[#allocation2 + $0x8] sm:$0xff] %vm133, %v859
    %864 = vst.msk [vmem:[%s59] sm:$0xff] %vm502, %v486
    %865 = vst.msk [vmem:[%s59 + $0x8] sm:$0xff] %vm502, %v491
    %v866 = vld [vmem:[%s39] sm:$0xff]
    %v867 = vld [vmem:[%s39 + $0x8] sm:$0xff]
    %v868 = vld [vmem:[%s39 + $0x10] sm:$0xff]
    %v869 = vld [vmem:[%s39 + $0x18] sm:$0xff]
    %870 = vmatprep.subr.mxu0 0.0
    %871 = vmatpush1.msra.mxu0 %v866
    %872 = vmatprep.subr.mxu0 0.0
    %873 = vmatpush1.msra.mxu0 %v867
    %874 = vmatprep.subr.mxu0 0.0
    %875 = vmatpush1.msra.mxu0 %v868
    %876 = vmatprep.subr.mxu0 0.0
    %877 = vmatpush1.msra.mxu0 %v869
    %878 = vmatprep.subr.mxu0 0.0
    %879 = vmatpush1.msra.mxu0 0.0
    %880 = vmatprep.subr.mxu0 0.0
    %881 = vmatpush1.msra.mxu0 0.0
    %882 = vmatprep.subr.mxu0 0.0
    %883 = vmatpush1.msra.mxu0 0.0
    %884 = vmatprep.subr.mxu0 0.0
    %885 = vmatpush1.msra.mxu0 0.0
    %886 = vmatprep.subr.mxu0 0.0
    %887 = vmatpush1.msra.mxu0 0.0
    %888 = vmatprep.subr.mxu0 0.0
    %889 = vmatpush1.msra.mxu0 0.0
    %890 = vmatprep.subr.mxu0 0.0
    %891 = vmatpush1.msra.mxu0 0.0
    %892 = vmatprep.subr.mxu0 0.0
    %893 = vmatpush1.msra.mxu0 0.0
    %894 = vmatprep.subr.mxu0 0.0
    %895 = vmatpush1.msra.mxu0 0.0
    %896 = vmatprep.subr.mxu0 0.0
    %897 = vmatpush1.msra.mxu0 0.0
    %898 = vmatprep.subr.mxu0 0.0
    %899 = vmatpush1.msra.mxu0 0.0
    %900 = vmatprep.subr.mxu0 0.0
    %901 = vmatpush1.msra.mxu0 0.0
    %902 = vmatprep.subr.mxu0 0.0
    %903 = vmatpush1.msra.mxu0 0.0
    %904 = vmatprep.subr.mxu0 0.0
    %905 = vmatpush1.msra.mxu0 0.0
    %906 = vmatprep.subr.mxu0 0.0
    %907 = vmatpush1.msra.mxu0 0.0
    %908 = vmatprep.subr.mxu0 0.0
    %909 = vmatpush1.msra.mxu0 0.0
    %910 = vmatprep.subr.mxu0 0.0
    %911 = vmatpush1.msra.mxu0 0.0
    %912 = vmatprep.subr.mxu0 0.0
    %913 = vmatpush1.msra.mxu0 0.0
    %914 = vmatprep.subr.mxu0 0.0
    %915 = vmatpush1.msra.mxu0 0.0
    %916 = vmatprep.subr.mxu0 0.0
    %917 = vmatpush1.msra.mxu0 0.0
    %918 = vmatprep.subr.mxu0 0.0
    %919 = vmatpush1.msra.mxu0 0.0
    %920 = vmatprep.subr.mxu0 0.0
    %921 = vmatpush1.msra.mxu0 0.0
    %922 = vmatprep.subr.mxu0 0.0
    %923 = vmatpush1.msra.mxu0 0.0
    %924 = vmatprep.subr.mxu0 0.0
    %925 = vmatpush1.msra.mxu0 0.0
    %926 = vmatprep.subr.mxu0 0.0
    %927 = vmatpush1.msra.mxu0 0.0
    %928 = vmatprep.subr.mxu0 0.0
    %929 = vmatpush1.msra.mxu0 0.0
    %930 = vmatprep.subr.mxu0 0.0
    %931 = vmatpush1.msra.mxu0 0.0
    %932 = vmatprep.subr.mxu0 0.0
    %933 = vmatpush1.msra.mxu0 0.0
    %934 = vmatprep.mubr.f32.mxu0 0.0
    %935 = vmatmul.mubr.f32.gmra.mrb[0].mxu0 %v135
    %v936 = vpop.f32.mrb[0].mxu0
    %v937 = vadd.f32 0.0, %v936
    %v938 = vpop.f32.mrb[0].mxu0
    %939 = vmatprep.mubr.f32.mxu0 0.0
    %940 = vmatmul.mubr.f32.gmra.mrb[0].mxu0 %v138
    %v941 = vpop.f32.mrb[0].mxu0
    %v942 = vadd.f32 0.0, %v941
    %v943 = vpop.f32.mrb[0].mxu0
    %944 = vdwg.mxu0
    %v946 = vsel %vm226, %v118, 0
    %v949 = vsel %vm226, %v119, 0
    %951 = vmatprep.subr.mxu0 0.0
    %952 = vmatpush1.msra.mxu0 %v937
    %953 = vmatprep.subr.mxu0 0.0
    %954 = vmatpush1.msra.mxu0 %v942
    %955 = vmatprep.subr.mxu0 0.0
    %956 = vmatpush1.msra.mxu0 0.0
    %957 = vmatprep.subr.mxu0 0.0
    %958 = vmatpush1.msra.mxu0 0.0
    %959 = vmatprep.subr.mxu0 0.0
    %960 = vmatpush1.msra.mxu0 0.0
    %961 = vmatprep.subr.mxu0 0.0
    %962 = vmatpush1.msra.mxu0 0.0
    %963 = vmatprep.subr.mxu0 0.0
    %964 = vmatpush1.msra.mxu0 0.0
    %965 = vmatprep.subr.mxu0 0.0
    %966 = vmatpush1.msra.mxu0 0.0
    %967 = vmatprep.subr.mxu0 0.0
    %968 = vmatpush1.msra.mxu0 0.0
    %969 = vmatprep.subr.mxu0 0.0
    %970 = vmatpush1.msra.mxu0 0.0
    %971 = vmatprep.subr.mxu0 0.0
    %972 = vmatpush1.msra.mxu0 0.0
    %973 = vmatprep.subr.mxu0 0.0
    %974 = vmatpush1.msra.mxu0 0.0
    %975 = vmatprep.subr.mxu0 0.0
    %976 = vmatpush1.msra.mxu0 0.0
    %977 = vmatprep.subr.mxu0 0.0
    %978 = vmatpush1.msra.mxu0 0.0
    %979 = vmatprep.subr.mxu0 0.0
    %980 = vmatpush1.msra.mxu0 0.0
    %981 = vmatprep.subr.mxu0 0.0
    %982 = vmatpush1.msra.mxu0 0.0
    %983 = vmatprep.subr.mxu0 0.0
    %984 = vmatpush1.msra.mxu0 0.0
    %985 = vmatprep.subr.mxu0 0.0
    %986 = vmatpush1.msra.mxu0 0.0
    %987 = vmatprep.subr.mxu0 0.0
    %988 = vmatpush1.msra.mxu0 0.0
    %989 = vmatprep.subr.mxu0 0.0
    %990 = vmatpush1.msra.mxu0 0.0
    %991 = vmatprep.subr.mxu0 0.0
    %992 = vmatpush1.msra.mxu0 0.0
    %993 = vmatprep.subr.mxu0 0.0
    %994 = vmatpush1.msra.mxu0 0.0
    %995 = vmatprep.subr.mxu0 0.0
    %996 = vmatpush1.msra.mxu0 0.0
    %997 = vmatprep.subr.mxu0 0.0
    %998 = vmatpush1.msra.mxu0 0.0
    %999 = vmatprep.subr.mxu0 0.0
    %1000 = vmatpush1.msra.mxu0 0.0
    %1001 = vmatprep.subr.mxu0 0.0
    %1002 = vmatpush1.msra.mxu0 0.0
    %1003 = vmatprep.subr.mxu0 0.0
    %1004 = vmatpush1.msra.mxu0 0.0
    %1005 = vmatprep.subr.mxu0 0.0
    %1006 = vmatpush1.msra.mxu0 0.0
    %1007 = vmatprep.subr.mxu0 0.0
    %1008 = vmatpush1.msra.mxu0 0.0
    %1009 = vmatprep.subr.mxu0 0.0
    %1010 = vmatpush1.msra.mxu0 0.0
    %1011 = vmatprep.subr.mxu0 0.0
    %1012 = vmatpush1.msra.mxu0 0.0
    %1013 = vmatprep.subr.mxu0 0.0
    %1014 = vmatpush1.msra.mxu0 0.0
    %1015 = vmatprep.mubr.f32.mxu0 0.0
    %1016 = vmatmul.mubr.f32.gmra.mrb[0].mxu0 %v946
    %v1017 = vpop.f32.mrb[0].mxu0
    %v1018 = vadd.f32 0.0, %v1017
    %v1019 = vpop.f32.mrb[0].mxu0
    %1020 = vmatprep.mubr.f32.mxu0 0.0
    %1021 = vmatmul.mubr.f32.gmra.mrb[0].mxu0 %v949
    %v1022 = vpop.f32.mrb[0].mxu0
    %v1023 = vadd.f32 0.0, %v1022
    %v1024 = vpop.f32.mrb[0].mxu0
    %1025 = vdwg.mxu0
    %v1027 = vsel %vm226, %v120, 0
    %v1030 = vsel %vm226, %v121, 0
    %1032 = vmatprep.subr.mxu0 0.0
    %1033 = vmatpush1.msra.mxu0 %v937
    %1034 = vmatprep.subr.mxu0 0.0
    %1035 = vmatpush1.msra.mxu0 %v942
    %1036 = vmatprep.subr.mxu0 0.0
    %1037 = vmatpush1.msra.mxu0 0.0
    %1038 = vmatprep.subr.mxu0 0.0
    %1039 = vmatpush1.msra.mxu0 0.0
    %1040 = vmatprep.subr.mxu0 0.0
    %1041 = vmatpush1.msra.mxu0 0.0
    %1042 = vmatprep.subr.mxu0 0.0
    %1043 = vmatpush1.msra.mxu0 0.0
    %1044 = vmatprep.subr.mxu0 0.0
    %1045 = vmatpush1.msra.mxu0 0.0
    %1046 = vmatprep.subr.mxu0 0.0
    %1047 = vmatpush1.msra.mxu0 0.0
    %1048 = vmatprep.subr.mxu0 0.0
    %1049 = vmatpush1.msra.mxu0 0.0
    %1050 = vmatprep.subr.mxu0 0.0
    %1051 = vmatpush1.msra.mxu0 0.0
    %1052 = vmatprep.subr.mxu0 0.0
    %1053 = vmatpush1.msra.mxu0 0.0
    %1054 = vmatprep.subr.mxu0 0.0
    %1055 = vmatpush1.msra.mxu0 0.0
    %1056 = vmatprep.subr.mxu0 0.0
    %1057 = vmatpush1.msra.mxu0 0.0
    %1058 = vmatprep.subr.mxu0 0.0
    %1059 = vmatpush1.msra.mxu0 0.0
    %1060 = vmatprep.subr.mxu0 0.0
    %1061 = vmatpush1.msra.mxu0 0.0
    %1062 = vmatprep.subr.mxu0 0.0
    %1063 = vmatpush1.msra.mxu0 0.0
    %1064 = vmatprep.subr.mxu0 0.0
    %1065 = vmatpush1.msra.mxu0 0.0
    %1066 = vmatprep.subr.mxu0 0.0
    %1067 = vmatpush1.msra.mxu0 0.0
    %1068 = vmatprep.subr.mxu0 0.0
    %1069 = vmatpush1.msra.mxu0 0.0
    %1070 = vmatprep.subr.mxu0 0.0
    %1071 = vmatpush1.msra.mxu0 0.0
    %1072 = vmatprep.subr.mxu0 0.0
    %1073 = vmatpush1.msra.mxu0 0.0
    %1074 = vmatprep.subr.mxu0 0.0
    %1075 = vmatpush1.msra.mxu0 0.0
    %1076 = vmatprep.subr.mxu0 0.0
    %1077 = vmatpush1.msra.mxu0 0.0
    %1078 = vmatprep.subr.mxu0 0.0
    %1079 = vmatpush1.msra.mxu0 0.0
    %1080 = vmatprep.subr.mxu0 0.0
    %1081 = vmatpush1.msra.mxu0 0.0
    %1082 = vmatprep.subr.mxu0 0.0
    %1083 = vmatpush1.msra.mxu0 0.0
    %1084 = vmatprep.subr.mxu0 0.0
    %1085 = vmatpush1.msra.mxu0 0.0
    %1086 = vmatprep.subr.mxu0 0.0
    %1087 = vmatpush1.msra.mxu0 0.0
    %1088 = vmatprep.subr.mxu0 0.0
    %1089 = vmatpush1.msra.mxu0 0.0
    %1090 = vmatprep.subr.mxu0 0.0
    %1091 = vmatpush1.msra.mxu0 0.0
    %1092 = vmatprep.subr.mxu0 0.0
    %1093 = vmatpush1.msra.mxu0 0.0
    %1094 = vmatprep.subr.mxu0 0.0
    %1095 = vmatpush1.msra.mxu0 0.0
    %1096 = vmatprep.mubr.f32.mxu0 0.0
    %1097 = vmatmul.mubr.f32.gmra.mrb[0].mxu0 %v1027
    %v1098 = vpop.f32.mrb[0].mxu0
    %v1099 = vadd.f32 0.0, %v1098
    %v1100 = vpop.f32.mrb[0].mxu0
    %1101 = vmatprep.mubr.f32.mxu0 0.0
    %1102 = vmatmul.mubr.f32.gmra.mrb[0].mxu0 %v1030
    %v1103 = vpop.f32.mrb[0].mxu0
    %v1104 = vadd.f32 0.0, %v1103
    %v1105 = vpop.f32.mrb[0].mxu0
    %1106 = vdwg.mxu0
    %v1107 = vmax.f32 %v1018, 0.0
    %v1108 = vmax.f32 %v1023, 0.0
    %v1109 = vmax.f32 %v1099, 0.0
    %v1110 = vmax.f32 %v1104, 0.0
    %v1111 = vmul.f32 %v1107, 0.5
    %v1112 = vmul.f32 %v1108, 0.5
    %v1113 = vmul.f32 %v1109, 0.1
    %v1114 = vmul.f32 %v1110, 0.1
    %v1115 = vadd.f32 %v1111, %v1113
    %v1116 = vadd.f32 %v1112, %v1114
    %v1117 = vmul.f32 %v215, 0.5
    %v1118 = vmul.f32 %v216, 0.5
    %v1119 = vadd.f32 %v1115, %v1117
    %v1120 = vadd.f32 %v1116, %v1118
    %v1121 = vmul.f32 %v1109, 0.5
    %v1122 = vmul.f32 %v1110, 0.5
    %v1123 = vmul.f32 %v1107, 0.1
    %v1124 = vmul.f32 %v1108, 0.1
    %v1125 = vadd.f32 %v1121, %v1123
    %v1126 = vadd.f32 %v1122, %v1124
    %v1127 = vadd.f32 %v1125, %v1117
    %v1128 = vadd.f32 %v1126, %v1118
    %v1129 = vld [vmem:[%s41] sm:$0xff]
    %v1130 = vld [vmem:[%s41 + $0x8] sm:$0xff]
    %v1132 = vsel %vm226, %v1119, 0
    %v1135 = vsel %vm226, %v1120, 0
    %1137 = vmatprep.subr.mxu0 0.0
    %1138 = vmatpush1.msra.mxu0 %v1129
    %1139 = vmatprep.subr.mxu0 0.0
    %1140 = vmatpush1.msra.mxu0 %v1130
    %1141 = vmatprep.subr.mxu0 0.0
    %1142 = vmatpush1.msra.mxu0 0.0
    %1143 = vmatprep.subr.mxu0 0.0
    %1144 = vmatpush1.msra.mxu0 0.0
    %1145 = vmatprep.subr.mxu0 0.0
    %1146 = vmatpush1.msra.mxu0 0.0
    %1147 = vmatprep.subr.mxu0 0.0
    %1148 = vmatpush1.msra.mxu0 0.0
    %1149 = vmatprep.subr.mxu0 0.0
    %1150 = vmatpush1.msra.mxu0 0.0
    %1151 = vmatprep.subr.mxu0 0.0
    %1152 = vmatpush1.msra.mxu0 0.0
    %1153 = vmatprep.subr.mxu0 0.0
    %1154 = vmatpush1.msra.mxu0 0.0
    %1155 = vmatprep.subr.mxu0 0.0
    %1156 = vmatpush1.msra.mxu0 0.0
    %1157 = vmatprep.subr.mxu0 0.0
    %1158 = vmatpush1.msra.mxu0 0.0
    %1159 = vmatprep.subr.mxu0 0.0
    %1160 = vmatpush1.msra.mxu0 0.0
    %1161 = vmatprep.subr.mxu0 0.0
    %1162 = vmatpush1.msra.mxu0 0.0
    %1163 = vmatprep.subr.mxu0 0.0
    %1164 = vmatpush1.msra.mxu0 0.0
    %1165 = vmatprep.subr.mxu0 0.0
    %1166 = vmatpush1.msra.mxu0 0.0
    %1167 = vmatprep.subr.mxu0 0.0
    %1168 = vmatpush1.msra.mxu0 0.0
    %1169 = vmatprep.subr.mxu0 0.0
    %1170 = vmatpush1.msra.mxu0 0.0
    %1171 = vmatprep.subr.mxu0 0.0
    %1172 = vmatpush1.msra.mxu0 0.0
    %1173 = vmatprep.subr.mxu0 0.0
    %1174 = vmatpush1.msra.mxu0 0.0
    %1175 = vmatprep.subr.mxu0 0.0
    %1176 = vmatpush1.msra.mxu0 0.0
    %1177 = vmatprep.subr.mxu0 0.0
    %1178 = vmatpush1.msra.mxu0 0.0
    %1179 = vmatprep.subr.mxu0 0.0
    %1180 = vmatpush1.msra.mxu0 0.0
    %1181 = vmatprep.subr.mxu0 0.0
    %1182 = vmatpush1.msra.mxu0 0.0
    %1183 = vmatprep.subr.mxu0 0.0
    %1184 = vmatpush1.msra.mxu0 0.0
    %1185 = vmatprep.subr.mxu0 0.0
    %1186 = vmatpush1.msra.mxu0 0.0
    %1187 = vmatprep.subr.mxu0 0.0
    %1188 = vmatpush1.msra.mxu0 0.0
    %1189 = vmatprep.subr.mxu0 0.0
    %1190 = vmatpush1.msra.mxu0 0.0
    %1191 = vmatprep.subr.mxu0 0.0
    %1192 = vmatpush1.msra.mxu0 0.0
    %1193 = vmatprep.subr.mxu0 0.0
    %1194 = vmatpush1.msra.mxu0 0.0
    %1195 = vmatprep.subr.mxu0 0.0
    %1196 = vmatpush1.msra.mxu0 0.0
    %1197 = vmatprep.subr.mxu0 0.0
    %1198 = vmatpush1.msra.mxu0 0.0
    %1199 = vmatprep.subr.mxu0 0.0
    %1200 = vmatpush1.msra.mxu0 0.0
    %1201 = vmatprep.mubr.f32.mxu0 0.0
    %1202 = vmatmul.mubr.f32.gmra.mrb[0].mxu0 %v1132
    %v1203 = vpop.f32.mrb[0].mxu0
    %v1204 = vadd.f32 0.0, %v1203
    %v1205 = vpop.f32.mrb[0].mxu0
    %1206 = vmatprep.mubr.f32.mxu0 0.0
    %1207 = vmatmul.mubr.f32.gmra.mrb[0].mxu0 %v1135
    %v1208 = vpop.f32.mrb[0].mxu0
    %v1209 = vadd.f32 0.0, %v1208
    %v1210 = vpop.f32.mrb[0].mxu0
    %1211 = vdwg.mxu0
    %v1213 = vsel %vm226, %v1127, 0
    %v1216 = vsel %vm226, %v1128, 0
    %1218 = vmatprep.subr.mxu0 0.0
    %1219 = vmatpush1.msra.mxu0 %v1129
    %1220 = vmatprep.subr.mxu0 0.0
    %1221 = vmatpush1.msra.mxu0 %v1130
    %1222 = vmatprep.subr.mxu0 0.0
    %1223 = vmatpush1.msra.mxu0 0.0
    %1224 = vmatprep.subr.mxu0 0.0
    %1225 = vmatpush1.msra.mxu0 0.0
    %1226 = vmatprep.subr.mxu0 0.0
    %1227 = vmatpush1.msra.mxu0 0.0
    %1228 = vmatprep.subr.mxu0 0.0
    %1229 = vmatpush1.msra.mxu0 0.0
    %1230 = vmatprep.subr.mxu0 0.0
    %1231 = vmatpush1.msra.mxu0 0.0
    %1232 = vmatprep.subr.mxu0 0.0
    %1233 = vmatpush1.msra.mxu0 0.0
    %1234 = vmatprep.subr.mxu0 0.0
    %1235 = vmatpush1.msra.mxu0 0.0
    %1236 = vmatprep.subr.mxu0 0.0
    %1237 = vmatpush1.msra.mxu0 0.0
    %1238 = vmatprep.subr.mxu0 0.0
    %1239 = vmatpush1.msra.mxu0 0.0
    %1240 = vmatprep.subr.mxu0 0.0
    %1241 = vmatpush1.msra.mxu0 0.0
    %1242 = vmatprep.subr.mxu0 0.0
    %1243 = vmatpush1.msra.mxu0 0.0
    %1244 = vmatprep.subr.mxu0 0.0
    %1245 = vmatpush1.msra.mxu0 0.0
    %1246 = vmatprep.subr.mxu0 0.0
    %1247 = vmatpush1.msra.mxu0 0.0
    %1248 = vmatprep.subr.mxu0 0.0
    %1249 = vmatpush1.msra.mxu0 0.0
    %1250 = vmatprep.subr.mxu0 0.0
    %1251 = vmatpush1.msra.mxu0 0.0
    %1252 = vmatprep.subr.mxu0 0.0
    %1253 = vmatpush1.msra.mxu0 0.0
    %1254 = vmatprep.subr.mxu0 0.0
    %1255 = vmatpush1.msra.mxu0 0.0
    %1256 = vmatprep.subr.mxu0 0.0
    %1257 = vmatpush1.msra.mxu0 0.0
    %1258 = vmatprep.subr.mxu0 0.0
    %1259 = vmatpush1.msra.mxu0 0.0
    %1260 = vmatprep.subr.mxu0 0.0
    %1261 = vmatpush1.msra.mxu0 0.0
    %1262 = vmatprep.subr.mxu0 0.0
    %1263 = vmatpush1.msra.mxu0 0.0
    %1264 = vmatprep.subr.mxu0 0.0
    %1265 = vmatpush1.msra.mxu0 0.0
    %1266 = vmatprep.subr.mxu0 0.0
    %1267 = vmatpush1.msra.mxu0 0.0
    %1268 = vmatprep.subr.mxu0 0.0
    %1269 = vmatpush1.msra.mxu0 0.0
    %1270 = vmatprep.subr.mxu0 0.0
    %1271 = vmatpush1.msra.mxu0 0.0
    %1272 = vmatprep.subr.mxu0 0.0
    %1273 = vmatpush1.msra.mxu0 0.0
    %1274 = vmatprep.subr.mxu0 0.0
    %1275 = vmatpush1.msra.mxu0 0.0
    %1276 = vmatprep.subr.mxu0 0.0
    %1277 = vmatpush1.msra.mxu0 0.0
    %1278 = vmatprep.subr.mxu0 0.0
    %1279 = vmatpush1.msra.mxu0 0.0
    %1280 = vmatprep.subr.mxu0 0.0
    %1281 = vmatpush1.msra.mxu0 0.0
    %1282 = vmatprep.mubr.f32.mxu0 0.0
    %1283 = vmatmul.mubr.f32.gmra.mrb[0].mxu0 %v1213
    %v1284 = vpop.f32.mrb[0].mxu0
    %v1285 = vadd.f32 0.0, %v1284
    %v1286 = vpop.f32.mrb[0].mxu0
    %1287 = vmatprep.mubr.f32.mxu0 0.0
    %1288 = vmatmul.mubr.f32.gmra.mrb[0].mxu0 %v1216
    %v1289 = vpop.f32.mrb[0].mxu0
    %v1290 = vadd.f32 0.0, %v1289
    %v1291 = vpop.f32.mrb[0].mxu0
    %1292 = vdwg.mxu0
    %1293 = vmatprep.subr.mxu0 0.0
    %1294 = vmatpush1.msra.mxu0 %v1204
    %1295 = vmatprep.subr.mxu0 0.0
    %1296 = vmatpush1.msra.mxu0 %v1209
    %1297 = vmatprep.subr.mxu0 0.0
    %1298 = vmatpush1.msra.mxu0 0.0
    %1299 = vmatprep.subr.mxu0 0.0
    %1300 = vmatpush1.msra.mxu0 0.0
    %1301 = vmatprep.subr.mxu0 0.0
    %1302 = vmatpush1.msra.mxu0 0.0
    %1303 = vmatprep.subr.mxu0 0.0
    %1304 = vmatpush1.msra.mxu0 0.0
    %1305 = vmatprep.subr.mxu0 0.0
    %1306 = vmatpush1.msra.mxu0 0.0
    %1307 = vmatprep.subr.mxu0 0.0
    %1308 = vmatpush1.msra.mxu0 0.0
    %1309 = vmatprep.subr.mxu0 0.0
    %1310 = vmatpush1.msra.mxu0 0.0
    %1311 = vmatprep.subr.mxu0 0.0
    %1312 = vmatpush1.msra.mxu0 0.0
    %1313 = vmatprep.subr.mxu0 0.0
    %1314 = vmatpush1.msra.mxu0 0.0
    %1315 = vmatprep.subr.mxu0 0.0
    %1316 = vmatpush1.msra.mxu0 0.0
    %1317 = vmatprep.subr.mxu0 0.0
    %1318 = vmatpush1.msra.mxu0 0.0
    %1319 = vmatprep.subr.mxu0 0.0
    %1320 = vmatpush1.msra.mxu0 0.0
    %1321 = vmatprep.subr.mxu0 0.0
    %1322 = vmatpush1.msra.mxu0 0.0
    %1323 = vmatprep.subr.mxu0 0.0
    %1324 = vmatpush1.msra.mxu0 0.0
    %1325 = vmatprep.subr.mxu0 0.0
    %1326 = vmatpush1.msra.mxu0 0.0
    %1327 = vmatprep.subr.mxu0 0.0
    %1328 = vmatpush1.msra.mxu0 0.0
    %1329 = vmatprep.subr.mxu0 0.0
    %1330 = vmatpush1.msra.mxu0 0.0
    %1331 = vmatprep.subr.mxu0 0.0
    %1332 = vmatpush1.msra.mxu0 0.0
    %1333 = vmatprep.subr.mxu0 0.0
    %1334 = vmatpush1.msra.mxu0 0.0
    %1335 = vmatprep.subr.mxu0 0.0
    %1336 = vmatpush1.msra.mxu0 0.0
    %1337 = vmatprep.subr.mxu0 0.0
    %1338 = vmatpush1.msra.mxu0 0.0
    %1339 = vmatprep.subr.mxu0 0.0
    %1340 = vmatpush1.msra.mxu0 0.0
    %1341 = vmatprep.subr.mxu0 0.0
    %1342 = vmatpush1.msra.mxu0 0.0
    %1343 = vmatprep.subr.mxu0 0.0
    %1344 = vmatpush1.msra.mxu0 0.0
    %1345 = vmatprep.subr.mxu0 0.0
    %1346 = vmatpush1.msra.mxu0 0.0
    %1347 = vmatprep.subr.mxu0 0.0
    %1348 = vmatpush1.msra.mxu0 0.0
    %1349 = vmatprep.subr.mxu0 0.0
    %1350 = vmatpush1.msra.mxu0 0.0
    %1351 = vmatprep.subr.mxu0 0.0
    %1352 = vmatpush1.msra.mxu0 0.0
    %1353 = vmatprep.subr.mxu0 0.0
    %1354 = vmatpush1.msra.mxu0 0.0
    %1355 = vmatprep.subr.mxu0 0.0
    %1356 = vmatpush1.msra.mxu0 0.0
    %1357 = vmatprep.mubr.f32.mxu0 0.0
    %1358 = vmatmul.mubr.f32.gmra.mrb[0].mxu0 %v946
    %v1359 = vpop.f32.mrb[0].mxu0
    %v1360 = vadd.f32 0.0, %v1359
    %v1361 = vpop.f32.mrb[0].mxu0
    %1362 = vmatprep.mubr.f32.mxu0 0.0
    %1363 = vmatmul.mubr.f32.gmra.mrb[0].mxu0 %v949
    %v1364 = vpop.f32.mrb[0].mxu0
    %v1365 = vadd.f32 0.0, %v1364
    %v1366 = vpop.f32.mrb[0].mxu0
    %1367 = vdwg.mxu0
    %1368 = vmatprep.subr.mxu0 0.0
    %1369 = vmatpush1.msra.mxu0 %v1285
    %1370 = vmatprep.subr.mxu0 0.0
    %1371 = vmatpush1.msra.mxu0 %v1290
    %1372 = vmatprep.subr.mxu0 0.0
    %1373 = vmatpush1.msra.mxu0 0.0
    %1374 = vmatprep.subr.mxu0 0.0
    %1375 = vmatpush1.msra.mxu0 0.0
    %1376 = vmatprep.subr.mxu0 0.0
    %1377 = vmatpush1.msra.mxu0 0.0
    %1378 = vmatprep.subr.mxu0 0.0
    %1379 = vmatpush1.msra.mxu0 0.0
    %1380 = vmatprep.subr.mxu0 0.0
    %1381 = vmatpush1.msra.mxu0 0.0
    %1382 = vmatprep.subr.mxu0 0.0
    %1383 = vmatpush1.msra.mxu0 0.0
    %1384 = vmatprep.subr.mxu0 0.0
    %1385 = vmatpush1.msra.mxu0 0.0
    %1386 = vmatprep.subr.mxu0 0.0
    %1387 = vmatpush1.msra.mxu0 0.0
    %1388 = vmatprep.subr.mxu0 0.0
    %1389 = vmatpush1.msra.mxu0 0.0
    %1390 = vmatprep.subr.mxu0 0.0
    %1391 = vmatpush1.msra.mxu0 0.0
    %1392 = vmatprep.subr.mxu0 0.0
    %1393 = vmatpush1.msra.mxu0 0.0
    %1394 = vmatprep.subr.mxu0 0.0
    %1395 = vmatpush1.msra.mxu0 0.0
    %1396 = vmatprep.subr.mxu0 0.0
    %1397 = vmatpush1.msra.mxu0 0.0
    %1398 = vmatprep.subr.mxu0 0.0
    %1399 = vmatpush1.msra.mxu0 0.0
    %1400 = vmatprep.subr.mxu0 0.0
    %1401 = vmatpush1.msra.mxu0 0.0
    %1402 = vmatprep.subr.mxu0 0.0
    %1403 = vmatpush1.msra.mxu0 0.0
    %1404 = vmatprep.subr.mxu0 0.0
    %1405 = vmatpush1.msra.mxu0 0.0
    %1406 = vmatprep.subr.mxu0 0.0
    %1407 = vmatpush1.msra.mxu0 0.0
    %1408 = vmatprep.subr.mxu0 0.0
    %1409 = vmatpush1.msra.mxu0 0.0
    %1410 = vmatprep.subr.mxu0 0.0
    %1411 = vmatpush1.msra.mxu0 0.0
    %1412 = vmatprep.subr.mxu0 0.0
    %1413 = vmatpush1.msra.mxu0 0.0
    %1414 = vmatprep.subr.mxu0 0.0
    %1415 = vmatpush1.msra.mxu0 0.0
    %1416 = vmatprep.subr.mxu0 0.0
    %1417 = vmatpush1.msra.mxu0 0.0
    %1418 = vmatprep.subr.mxu0 0.0
    %1419 = vmatpush1.msra.mxu0 0.0
    %1420 = vmatprep.subr.mxu0 0.0
    %1421 = vmatpush1.msra.mxu0 0.0
    %1422 = vmatprep.subr.mxu0 0.0
    %1423 = vmatpush1.msra.mxu0 0.0
    %1424 = vmatprep.subr.mxu0 0.0
    %1425 = vmatpush1.msra.mxu0 0.0
    %1426 = vmatprep.subr.mxu0 0.0
    %1427 = vmatpush1.msra.mxu0 0.0
    %1428 = vmatprep.subr.mxu0 0.0
    %1429 = vmatpush1.msra.mxu0 0.0
    %1430 = vmatprep.subr.mxu0 0.0
    %1431 = vmatpush1.msra.mxu0 0.0
    %1432 = vmatprep.mubr.f32.mxu0 0.0
    %1433 = vmatmul.mubr.f32.gmra.mrb[0].mxu0 %v1027
    %v1434 = vpop.f32.mrb[0].mxu0
    %v1435 = vadd.f32 0.0, %v1434
    %v1436 = vpop.f32.mrb[0].mxu0
    %1437 = vmatprep.mubr.f32.mxu0 0.0
    %1438 = vmatmul.mubr.f32.gmra.mrb[0].mxu0 %v1030
    %v1439 = vpop.f32.mrb[0].mxu0
    %v1440 = vadd.f32 0.0, %v1439
    %v1441 = vpop.f32.mrb[0].mxu0
    %1442 = vdwg.mxu0
    %v1443 = vmax.f32 %v1360, 0.0
    %v1444 = vmax.f32 %v1365, 0.0
    %v1445 = vmax.f32 %v1435, 0.0
    %v1446 = vmax.f32 %v1440, 0.0
    %v1447 = vmul.f32 %v1443, 0.5
    %v1448 = vmul.f32 %v1444, 0.5
    %v1449 = vmul.f32 %v1445, 0.1
    %v1450 = vmul.f32 %v1446, 0.1
    %v1451 = vadd.f32 %v1447, %v1449
    %v1452 = vadd.f32 %v1448, %v1450
    %v1453 = vmul.f32 %v308, 0.5
    %v1454 = vmul.f32 %v309, 0.5
    %v1455 = vadd.f32 %v1451, %v1453
    %v1456 = vadd.f32 %v1452, %v1454
    %v1457 = vmul.f32 %v1445, 0.5
    %v1458 = vmul.f32 %v1446, 0.5
    %v1459 = vmul.f32 %v1443, 0.1
    %v1460 = vmul.f32 %v1444, 0.1
    %v1461 = vadd.f32 %v1457, %v1459
    %v1462 = vadd.f32 %v1458, %v1460
    %v1463 = vadd.f32 %v1461, %v1453
    %v1464 = vadd.f32 %v1462, %v1454
    %v1465 = vld [vmem:[%s43] sm:$0xff]
    %v1466 = vld [vmem:[%s43 + $0x8] sm:$0xff]
    %v1468 = vsel %vm226, %v1455, 0
    %v1471 = vsel %vm226, %v1456, 0
    %1473 = vmatprep.subr.mxu0 0.0
    %1474 = vmatpush1.msra.mxu0 %v1465
    %1475 = vmatprep.subr.mxu0 0.0
    %1476 = vmatpush1.msra.mxu0 %v1466
    %1477 = vmatprep.subr.mxu0 0.0
    %1478 = vmatpush1.msra.mxu0 0.0
    %1479 = vmatprep.subr.mxu0 0.0
    %1480 = vmatpush1.msra.mxu0 0.0
    %1481 = vmatprep.subr.mxu0 0.0
    %1482 = vmatpush1.msra.mxu0 0.0
    %1483 = vmatprep.subr.mxu0 0.0
    %1484 = vmatpush1.msra.mxu0 0.0
    %1485 = vmatprep.subr.mxu0 0.0
    %1486 = vmatpush1.msra.mxu0 0.0
    %1487 = vmatprep.subr.mxu0 0.0
    %1488 = vmatpush1.msra.mxu0 0.0
    %1489 = vmatprep.subr.mxu0 0.0
    %1490 = vmatpush1.msra.mxu0 0.0
    %1491 = vmatprep.subr.mxu0 0.0
    %1492 = vmatpush1.msra.mxu0 0.0
    %1493 = vmatprep.subr.mxu0 0.0
    %1494 = vmatpush1.msra.mxu0 0.0
    %1495 = vmatprep.subr.mxu0 0.0
    %1496 = vmatpush1.msra.mxu0 0.0
    %1497 = vmatprep.subr.mxu0 0.0
    %1498 = vmatpush1.msra.mxu0 0.0
    %1499 = vmatprep.subr.mxu0 0.0
    %1500 = vmatpush1.msra.mxu0 0.0
    %1501 = vmatprep.subr.mxu0 0.0
    %1502 = vmatpush1.msra.mxu0 0.0
    %1503 = vmatprep.subr.mxu0 0.0
    %1504 = vmatpush1.msra.mxu0 0.0
    %1505 = vmatprep.subr.mxu0 0.0
    %1506 = vmatpush1.msra.mxu0 0.0
    %1507 = vmatprep.subr.mxu0 0.0
    %1508 = vmatpush1.msra.mxu0 0.0
    %1509 = vmatprep.subr.mxu0 0.0
    %1510 = vmatpush1.msra.mxu0 0.0
    %1511 = vmatprep.subr.mxu0 0.0
    %1512 = vmatpush1.msra.mxu0 0.0
    %1513 = vmatprep.subr.mxu0 0.0
    %1514 = vmatpush1.msra.mxu0 0.0
    %1515 = vmatprep.subr.mxu0 0.0
    %1516 = vmatpush1.msra.mxu0 0.0
    %1517 = vmatprep.subr.mxu0 0.0
    %1518 = vmatpush1.msra.mxu0 0.0
    %1519 = vmatprep.subr.mxu0 0.0
    %1520 = vmatpush1.msra.mxu0 0.0
    %1521 = vmatprep.subr.mxu0 0.0
    %1522 = vmatpush1.msra.mxu0 0.0
    %1523 = vmatprep.subr.mxu0 0.0
    %1524 = vmatpush1.msra.mxu0 0.0
    %1525 = vmatprep.subr.mxu0 0.0
    %1526 = vmatpush1.msra.mxu0 0.0
    %1527 = vmatprep.subr.mxu0 0.0
    %1528 = vmatpush1.msra.mxu0 0.0
    %1529 = vmatprep.subr.mxu0 0.0
    %1530 = vmatpush1.msra.mxu0 0.0
    %1531 = vmatprep.subr.mxu0 0.0
    %1532 = vmatpush1.msra.mxu0 0.0
    %1533 = vmatprep.subr.mxu0 0.0
    %1534 = vmatpush1.msra.mxu0 0.0
    %1535 = vmatprep.subr.mxu0 0.0
    %1536 = vmatpush1.msra.mxu0 0.0
    %1537 = vmatprep.mubr.f32.mxu0 0.0
    %1538 = vmatmul.mubr.f32.gmra.mrb[0].mxu0 %v1468
    %v1539 = vpop.f32.mrb[0].mxu0
    %v1540 = vadd.f32 0.0, %v1539
    %v1541 = vpop.f32.mrb[0].mxu0
    %1542 = vmatprep.mubr.f32.mxu0 0.0
    %1543 = vmatmul.mubr.f32.gmra.mrb[0].mxu0 %v1471
    %v1544 = vpop.f32.mrb[0].mxu0
    %v1545 = vadd.f32 0.0, %v1544
    %v1546 = vpop.f32.mrb[0].mxu0
    %1547 = vdwg.mxu0
    %v1549 = vsel %vm226, %v1463, 0
    %v1552 = vsel %vm226, %v1464, 0
    %1554 = vmatprep.subr.mxu0 0.0
    %1555 = vmatpush1.msra.mxu0 %v1465
    %1556 = vmatprep.subr.mxu0 0.0
    %1557 = vmatpush1.msra.mxu0 %v1466
    %1558 = vmatprep.subr.mxu0 0.0
    %1559 = vmatpush1.msra.mxu0 0.0
    %1560 = vmatprep.subr.mxu0 0.0
    %1561 = vmatpush1.msra.mxu0 0.0
    %1562 = vmatprep.subr.mxu0 0.0
    %1563 = vmatpush1.msra.mxu0 0.0
    %1564 = vmatprep.subr.mxu0 0.0
    %1565 = vmatpush1.msra.mxu0 0.0
    %1566 = vmatprep.subr.mxu0 0.0
    %1567 = vmatpush1.msra.mxu0 0.0
    %1568 = vmatprep.subr.mxu0 0.0
    %1569 = vmatpush1.msra.mxu0 0.0
    %1570 = vmatprep.subr.mxu0 0.0
    %1571 = vmatpush1.msra.mxu0 0.0
    %1572 = vmatprep.subr.mxu0 0.0
    %1573 = vmatpush1.msra.mxu0 0.0
    %1574 = vmatprep.subr.mxu0 0.0
    %1575 = vmatpush1.msra.mxu0 0.0
    %1576 = vmatprep.subr.mxu0 0.0
    %1577 = vmatpush1.msra.mxu0 0.0
    %1578 = vmatprep.subr.mxu0 0.0
    %1579 = vmatpush1.msra.mxu0 0.0
    %1580 = vmatprep.subr.mxu0 0.0
    %1581 = vmatpush1.msra.mxu0 0.0
    %1582 = vmatprep.subr.mxu0 0.0
    %1583 = vmatpush1.msra.mxu0 0.0
    %1584 = vmatprep.subr.mxu0 0.0
    %1585 = vmatpush1.msra.mxu0 0.0
    %1586 = vmatprep.subr.mxu0 0.0
    %1587 = vmatpush1.msra.mxu0 0.0
    %1588 = vmatprep.subr.mxu0 0.0
    %1589 = vmatpush1.msra.mxu0 0.0
    %1590 = vmatprep.subr.mxu0 0.0
    %1591 = vmatpush1.msra.mxu0 0.0
    %1592 = vmatprep.subr.mxu0 0.0
    %1593 = vmatpush1.msra.mxu0 0.0
    %1594 = vmatprep.subr.mxu0 0.0
    %1595 = vmatpush1.msra.mxu0 0.0
    %1596 = vmatprep.subr.mxu0 0.0
    %1597 = vmatpush1.msra.mxu0 0.0
    %1598 = vmatprep.subr.mxu0 0.0
    %1599 = vmatpush1.msra.mxu0 0.0
    %1600 = vmatprep.subr.mxu0 0.0
    %1601 = vmatpush1.msra.mxu0 0.0
    %1602 = vmatprep.subr.mxu0 0.0
    %1603 = vmatpush1.msra.mxu0 0.0
    %1604 = vmatprep.subr.mxu0 0.0
    %1605 = vmatpush1.msra.mxu0 0.0
    %1606 = vmatprep.subr.mxu0 0.0
    %1607 = vmatpush1.msra.mxu0 0.0
    %1608 = vmatprep.subr.mxu0 0.0
    %1609 = vmatpush1.msra.mxu0 0.0
    %1610 = vmatprep.subr.mxu0 0.0
    %1611 = vmatpush1.msra.mxu0 0.0
    %1612 = vmatprep.subr.mxu0 0.0
    %1613 = vmatpush1.msra.mxu0 0.0
    %1614 = vmatprep.subr.mxu0 0.0
    %1615 = vmatpush1.msra.mxu0 0.0
    %1616 = vmatprep.subr.mxu0 0.0
    %1617 = vmatpush1.msra.mxu0 0.0
    %1618 = vmatprep.mubr.f32.mxu0 0.0
    %1619 = vmatmul.mubr.f32.gmra.mrb[0].mxu0 %v1549
    %v1620 = vpop.f32.mrb[0].mxu0
    %v1621 = vadd.f32 0.0, %v1620
    %v1622 = vpop.f32.mrb[0].mxu0
    %1623 = vmatprep.mubr.f32.mxu0 0.0
    %1624 = vmatmul.mubr.f32.gmra.mrb[0].mxu0 %v1552
    %v1625 = vpop.f32.mrb[0].mxu0
    %v1626 = vadd.f32 0.0, %v1625
    %v1627 = vpop.f32.mrb[0].mxu0
    %1628 = vdwg.mxu0
    %1629 = vmatprep.subr.mxu0 0.0
    %1630 = vmatpush1.msra.mxu0 %v1540
    %1631 = vmatprep.subr.mxu0 0.0
    %1632 = vmatpush1.msra.mxu0 %v1545
    %1633 = vmatprep.subr.mxu0 0.0
    %1634 = vmatpush1.msra.mxu0 0.0
    %1635 = vmatprep.subr.mxu0 0.0
    %1636 = vmatpush1.msra.mxu0 0.0
    %1637 = vmatprep.subr.mxu0 0.0
    %1638 = vmatpush1.msra.mxu0 0.0
    %1639 = vmatprep.subr.mxu0 0.0
    %1640 = vmatpush1.msra.mxu0 0.0
    %1641 = vmatprep.subr.mxu0 0.0
    %1642 = vmatpush1.msra.mxu0 0.0
    %1643 = vmatprep.subr.mxu0 0.0
    %1644 = vmatpush1.msra.mxu0 0.0
    %1645 = vmatprep.subr.mxu0 0.0
    %1646 = vmatpush1.msra.mxu0 0.0
    %1647 = vmatprep.subr.mxu0 0.0
    %1648 = vmatpush1.msra.mxu0 0.0
    %1649 = vmatprep.subr.mxu0 0.0
    %1650 = vmatpush1.msra.mxu0 0.0
    %1651 = vmatprep.subr.mxu0 0.0
    %1652 = vmatpush1.msra.mxu0 0.0
    %1653 = vmatprep.subr.mxu0 0.0
    %1654 = vmatpush1.msra.mxu0 0.0
    %1655 = vmatprep.subr.mxu0 0.0
    %1656 = vmatpush1.msra.mxu0 0.0
    %1657 = vmatprep.subr.mxu0 0.0
    %1658 = vmatpush1.msra.mxu0 0.0
    %1659 = vmatprep.subr.mxu0 0.0
    %1660 = vmatpush1.msra.mxu0 0.0
    %1661 = vmatprep.subr.mxu0 0.0
    %1662 = vmatpush1.msra.mxu0 0.0
    %1663 = vmatprep.subr.mxu0 0.0
    %1664 = vmatpush1.msra.mxu0 0.0
    %1665 = vmatprep.subr.mxu0 0.0
    %1666 = vmatpush1.msra.mxu0 0.0
    %1667 = vmatprep.subr.mxu0 0.0
    %1668 = vmatpush1.msra.mxu0 0.0
    %1669 = vmatprep.subr.mxu0 0.0
    %1670 = vmatpush1.msra.mxu0 0.0
    %1671 = vmatprep.subr.mxu0 0.0
    %1672 = vmatpush1.msra.mxu0 0.0
    %1673 = vmatprep.subr.mxu0 0.0
    %1674 = vmatpush1.msra.mxu0 0.0
    %1675 = vmatprep.subr.mxu0 0.0
    %1676 = vmatpush1.msra.mxu0 0.0
    %1677 = vmatprep.subr.mxu0 0.0
    %1678 = vmatpush1.msra.mxu0 0.0
    %1679 = vmatprep.subr.mxu0 0.0
    %1680 = vmatpush1.msra.mxu0 0.0
    %1681 = vmatprep.subr.mxu0 0.0
    %1682 = vmatpush1.msra.mxu0 0.0
    %1683 = vmatprep.subr.mxu0 0.0
    %1684 = vmatpush1.msra.mxu0 0.0
    %1685 = vmatprep.subr.mxu0 0.0
    %1686 = vmatpush1.msra.mxu0 0.0
    %1687 = vmatprep.subr.mxu0 0.0
    %1688 = vmatpush1.msra.mxu0 0.0
    %1689 = vmatprep.subr.mxu0 0.0
    %1690 = vmatpush1.msra.mxu0 0.0
    %1691 = vmatprep.subr.mxu0 0.0
    %1692 = vmatpush1.msra.mxu0 0.0
    %1693 = vmatprep.mubr.f32.mxu0 0.0
    %1694 = vmatmul.mubr.f32.gmra.mrb[0].mxu0 %v946
    %v1695 = vpop.f32.mrb[0].mxu0
    %v1696 = vadd.f32 0.0, %v1695
    %v1697 = vpop.f32.mrb[0].mxu0
    %1698 = vmatprep.mubr.f32.mxu0 0.0
    %1699 = vmatmul.mubr.f32.gmra.mrb[0].mxu0 %v949
    %v1700 = vpop.f32.mrb[0].mxu0
    %v1701 = vadd.f32 0.0, %v1700
    %v1702 = vpop.f32.mrb[0].mxu0
    %1703 = vdwg.mxu0
    %1704 = vmatprep.subr.mxu0 0.0
    %1705 = vmatpush1.msra.mxu0 %v1621
    %1706 = vmatprep.subr.mxu0 0.0
    %1707 = vmatpush1.msra.mxu0 %v1626
    %1708 = vmatprep.subr.mxu0 0.0
    %1709 = vmatpush1.msra.mxu0 0.0
    %1710 = vmatprep.subr.mxu0 0.0
    %1711 = vmatpush1.msra.mxu0 0.0
    %1712 = vmatprep.subr.mxu0 0.0
    %1713 = vmatpush1.msra.mxu0 0.0
    %1714 = vmatprep.subr.mxu0 0.0
    %1715 = vmatpush1.msra.mxu0 0.0
    %1716 = vmatprep.subr.mxu0 0.0
    %1717 = vmatpush1.msra.mxu0 0.0
    %1718 = vmatprep.subr.mxu0 0.0
    %1719 = vmatpush1.msra.mxu0 0.0
    %1720 = vmatprep.subr.mxu0 0.0
    %1721 = vmatpush1.msra.mxu0 0.0
    %1722 = vmatprep.subr.mxu0 0.0
    %1723 = vmatpush1.msra.mxu0 0.0
    %1724 = vmatprep.subr.mxu0 0.0
    %1725 = vmatpush1.msra.mxu0 0.0
    %1726 = vmatprep.subr.mxu0 0.0
    %1727 = vmatpush1.msra.mxu0 0.0
    %1728 = vmatprep.subr.mxu0 0.0
    %1729 = vmatpush1.msra.mxu0 0.0
    %1730 = vmatprep.subr.mxu0 0.0
    %1731 = vmatpush1.msra.mxu0 0.0
    %1732 = vmatprep.subr.mxu0 0.0
    %1733 = vmatpush1.msra.mxu0 0.0
    %1734 = vmatprep.subr.mxu0 0.0
    %1735 = vmatpush1.msra.mxu0 0.0
    %1736 = vmatprep.subr.mxu0 0.0
    %1737 = vmatpush1.msra.mxu0 0.0
    %1738 = vmatprep.subr.mxu0 0.0
    %1739 = vmatpush1.msra.mxu0 0.0
    %1740 = vmatprep.subr.mxu0 0.0
    %1741 = vmatpush1.msra.mxu0 0.0
    %1742 = vmatprep.subr.mxu0 0.0
    %1743 = vmatpush1.msra.mxu0 0.0
    %1744 = vmatprep.subr.mxu0 0.0
    %1745 = vmatpush1.msra.mxu0 0.0
    %1746 = vmatprep.subr.mxu0 0.0
    %1747 = vmatpush1.msra.mxu0 0.0
    %1748 = vmatprep.subr.mxu0 0.0
    %1749 = vmatpush1.msra.mxu0 0.0
    %1750 = vmatprep.subr.mxu0 0.0
    %1751 = vmatpush1.msra.mxu0 0.0
    %1752 = vmatprep.subr.mxu0 0.0
    %1753 = vmatpush1.msra.mxu0 0.0
    %1754 = vmatprep.subr.mxu0 0.0
    %1755 = vmatpush1.msra.mxu0 0.0
    %1756 = vmatprep.subr.mxu0 0.0
    %1757 = vmatpush1.msra.mxu0 0.0
    %1758 = vmatprep.subr.mxu0 0.0
    %1759 = vmatpush1.msra.mxu0 0.0
    %1760 = vmatprep.subr.mxu0 0.0
    %1761 = vmatpush1.msra.mxu0 0.0
    %1762 = vmatprep.subr.mxu0 0.0
    %1763 = vmatpush1.msra.mxu0 0.0
    %1764 = vmatprep.subr.mxu0 0.0
    %1765 = vmatpush1.msra.mxu0 0.0
    %1766 = vmatprep.subr.mxu0 0.0
    %1767 = vmatpush1.msra.mxu0 0.0
    %1768 = vmatprep.mubr.f32.mxu0 0.0
    %1769 = vmatmul.mubr.f32.gmra.mrb[0].mxu0 %v1027
    %v1770 = vpop.f32.mrb[0].mxu0
    %v1771 = vadd.f32 0.0, %v1770
    %v1772 = vpop.f32.mrb[0].mxu0
    %1773 = vmatprep.mubr.f32.mxu0 0.0
    %1774 = vmatmul.mubr.f32.gmra.mrb[0].mxu0 %v1030
    %v1775 = vpop.f32.mrb[0].mxu0
    %v1776 = vadd.f32 0.0, %v1775
    %v1777 = vpop.f32.mrb[0].mxu0
    %1778 = vdwg.mxu0
    %v1779 = vmax.f32 %v1696, 0.0
    %v1780 = vmax.f32 %v1701, 0.0
    %v1781 = vmax.f32 %v1771, 0.0
    %v1782 = vmax.f32 %v1776, 0.0
    %v1783 = vmul.f32 %v1779, 0.5
    %v1784 = vmul.f32 %v1780, 0.5
    %v1785 = vmul.f32 %v1781, 0.1
    %v1786 = vmul.f32 %v1782, 0.1
    %v1787 = vadd.f32 %v1783, %v1785
    %v1788 = vadd.f32 %v1784, %v1786
    %v1789 = vmul.f32 %v400, 0.5
    %v1790 = vmul.f32 %v401, 0.5
    %v1791 = vadd.f32 %v1787, %v1789
    %v1792 = vadd.f32 %v1788, %v1790
    %v1793 = vmul.f32 %v1781, 0.5
    %v1794 = vmul.f32 %v1782, 0.5
    %v1795 = vmul.f32 %v1779, 0.1
    %v1796 = vmul.f32 %v1780, 0.1
    %v1797 = vadd.f32 %v1793, %v1795
    %v1798 = vadd.f32 %v1794, %v1796
    %v1799 = vadd.f32 %v1797, %v1789
    %v1800 = vadd.f32 %v1798, %v1790
    %v1801 = vld [vmem:[%s45] sm:$0xff]
    %v1802 = vld [vmem:[%s45 + $0x8] sm:$0xff]
    %v1803 = vld [vmem:[%s45 + $0x10] sm:$0xff]
    %v1804 = vld [vmem:[%s45 + $0x18] sm:$0xff]
    %v1806 = vsel %vm133, %v1791, 0
    %v1809 = vsel %vm133, %v1792, 0
    %1811 = vmatprep.subr.mxu0 0.0
    %1812 = vmatpush1.msra.mxu0 %v1801
    %1813 = vmatprep.subr.mxu0 0.0
    %1814 = vmatpush1.msra.mxu0 %v1802
    %1815 = vmatprep.subr.mxu0 0.0
    %1816 = vmatpush1.msra.mxu0 %v1803
    %1817 = vmatprep.subr.mxu0 0.0
    %1818 = vmatpush1.msra.mxu0 %v1804
    %1819 = vmatprep.subr.mxu0 0.0
    %1820 = vmatpush1.msra.mxu0 0.0
    %1821 = vmatprep.subr.mxu0 0.0
    %1822 = vmatpush1.msra.mxu0 0.0
    %1823 = vmatprep.subr.mxu0 0.0
    %1824 = vmatpush1.msra.mxu0 0.0
    %1825 = vmatprep.subr.mxu0 0.0
    %1826 = vmatpush1.msra.mxu0 0.0
    %1827 = vmatprep.subr.mxu0 0.0
    %1828 = vmatpush1.msra.mxu0 0.0
    %1829 = vmatprep.subr.mxu0 0.0
    %1830 = vmatpush1.msra.mxu0 0.0
    %1831 = vmatprep.subr.mxu0 0.0
    %1832 = vmatpush1.msra.mxu0 0.0
    %1833 = vmatprep.subr.mxu0 0.0
    %1834 = vmatpush1.msra.mxu0 0.0
    %1835 = vmatprep.subr.mxu0 0.0
    %1836 = vmatpush1.msra.mxu0 0.0
    %1837 = vmatprep.subr.mxu0 0.0
    %1838 = vmatpush1.msra.mxu0 0.0
    %1839 = vmatprep.subr.mxu0 0.0
    %1840 = vmatpush1.msra.mxu0 0.0
    %1841 = vmatprep.subr.mxu0 0.0
    %1842 = vmatpush1.msra.mxu0 0.0
    %1843 = vmatprep.subr.mxu0 0.0
    %1844 = vmatpush1.msra.mxu0 0.0
    %1845 = vmatprep.subr.mxu0 0.0
    %1846 = vmatpush1.msra.mxu0 0.0
    %1847 = vmatprep.subr.mxu0 0.0
    %1848 = vmatpush1.msra.mxu0 0.0
    %1849 = vmatprep.subr.mxu0 0.0
    %1850 = vmatpush1.msra.mxu0 0.0
    %1851 = vmatprep.subr.mxu0 0.0
    %1852 = vmatpush1.msra.mxu0 0.0
    %1853 = vmatprep.subr.mxu0 0.0
    %1854 = vmatpush1.msra.mxu0 0.0
    %1855 = vmatprep.subr.mxu0 0.0
    %1856 = vmatpush1.msra.mxu0 0.0
    %1857 = vmatprep.subr.mxu0 0.0
    %1858 = vmatpush1.msra.mxu0 0.0
    %1859 = vmatprep.subr.mxu0 0.0
    %1860 = vmatpush1.msra.mxu0 0.0
    %1861 = vmatprep.subr.mxu0 0.0
    %1862 = vmatpush1.msra.mxu0 0.0
    %1863 = vmatprep.subr.mxu0 0.0
    %1864 = vmatpush1.msra.mxu0 0.0
    %1865 = vmatprep.subr.mxu0 0.0
    %1866 = vmatpush1.msra.mxu0 0.0
    %1867 = vmatprep.subr.mxu0 0.0
    %1868 = vmatpush1.msra.mxu0 0.0
    %1869 = vmatprep.subr.mxu0 0.0
    %1870 = vmatpush1.msra.mxu0 0.0
    %1871 = vmatprep.subr.mxu0 0.0
    %1872 = vmatpush1.msra.mxu0 0.0
    %1873 = vmatprep.subr.mxu0 0.0
    %1874 = vmatpush1.msra.mxu0 0.0
    %1875 = vmatprep.mubr.f32.mxu0 0.0
    %1876 = vmatmul.mubr.f32.gmra.mrb[0].mxu0 %v1806
    %v1877 = vpop.f32.mrb[0].mxu0
    %v1878 = vadd.f32 0.0, %v1877
    %v1879 = vpop.f32.mrb[0].mxu0
    %1880 = vmatprep.mubr.f32.mxu0 0.0
    %1881 = vmatmul.mubr.f32.gmra.mrb[0].mxu0 %v1809
    %v1882 = vpop.f32.mrb[0].mxu0
    %v1883 = vadd.f32 0.0, %v1882
    %v1884 = vpop.f32.mrb[0].mxu0
    %1885 = vdwg.mxu0
    %v1887 = vsel %vm133, %v1799, 0
    %v1890 = vsel %vm133, %v1800, 0
    %1892 = vmatprep.subr.mxu0 0.0
    %1893 = vmatpush1.msra.mxu0 %v1801
    %1894 = vmatprep.subr.mxu0 0.0
    %1895 = vmatpush1.msra.mxu0 %v1802
    %1896 = vmatprep.subr.mxu0 0.0
    %1897 = vmatpush1.msra.mxu0 %v1803
    %1898 = vmatprep.subr.mxu0 0.0
    %1899 = vmatpush1.msra.mxu0 %v1804
    %1900 = vmatprep.subr.mxu0 0.0
    %1901 = vmatpush1.msra.mxu0 0.0
    %1902 = vmatprep.subr.mxu0 0.0
    %1903 = vmatpush1.msra.mxu0 0.0
    %1904 = vmatprep.subr.mxu0 0.0
    %1905 = vmatpush1.msra.mxu0 0.0
    %1906 = vmatprep.subr.mxu0 0.0
    %1907 = vmatpush1.msra.mxu0 0.0
    %1908 = vmatprep.subr.mxu0 0.0
    %1909 = vmatpush1.msra.mxu0 0.0
    %1910 = vmatprep.subr.mxu0 0.0
    %1911 = vmatpush1.msra.mxu0 0.0
    %1912 = vmatprep.subr.mxu0 0.0
    %1913 = vmatpush1.msra.mxu0 0.0
    %1914 = vmatprep.subr.mxu0 0.0
    %1915 = vmatpush1.msra.mxu0 0.0
    %1916 = vmatprep.subr.mxu0 0.0
    %1917 = vmatpush1.msra.mxu0 0.0
    %1918 = vmatprep.subr.mxu0 0.0
    %1919 = vmatpush1.msra.mxu0 0.0
    %1920 = vmatprep.subr.mxu0 0.0
    %1921 = vmatpush1.msra.mxu0 0.0
    %1922 = vmatprep.subr.mxu0 0.0
    %1923 = vmatpush1.msra.mxu0 0.0
    %1924 = vmatprep.subr.mxu0 0.0
    %1925 = vmatpush1.msra.mxu0 0.0
    %1926 = vmatprep.subr.mxu0 0.0
    %1927 = vmatpush1.msra.mxu0 0.0
    %1928 = vmatprep.subr.mxu0 0.0
    %1929 = vmatpush1.msra.mxu0 0.0
    %1930 = vmatprep.subr.mxu0 0.0
    %1931 = vmatpush1.msra.mxu0 0.0
    %1932 = vmatprep.subr.mxu0 0.0
    %1933 = vmatpush1.msra.mxu0 0.0
    %1934 = vmatprep.subr.mxu0 0.0
    %1935 = vmatpush1.msra.mxu0 0.0
    %1936 = vmatprep.subr.mxu0 0.0
    %1937 = vmatpush1.msra.mxu0 0.0
    %1938 = vmatprep.subr.mxu0 0.0
    %1939 = vmatpush1.msra.mxu0 0.0
    %1940 = vmatprep.subr.mxu0 0.0
    %1941 = vmatpush1.msra.mxu0 0.0
    %1942 = vmatprep.subr.mxu0 0.0
    %1943 = vmatpush1.msra.mxu0 0.0
    %1944 = vmatprep.subr.mxu0 0.0
    %1945 = vmatpush1.msra.mxu0 0.0
    %1946 = vmatprep.subr.mxu0 0.0
    %1947 = vmatpush1.msra.mxu0 0.0
    %1948 = vmatprep.subr.mxu0 0.0
    %1949 = vmatpush1.msra.mxu0 0.0
    %1950 = vmatprep.subr.mxu0 0.0
    %1951 = vmatpush1.msra.mxu0 0.0
    %1952 = vmatprep.subr.mxu0 0.0
    %1953 = vmatpush1.msra.mxu0 0.0
    %1954 = vmatprep.subr.mxu0 0.0
    %1955 = vmatpush1.msra.mxu0 0.0
    %1956 = vmatprep.mubr.f32.mxu0 0.0
    %1957 = vmatmul.mubr.f32.gmra.mrb[0].mxu0 %v1887
    %v1958 = vpop.f32.mrb[0].mxu0
    %v1959 = vadd.f32 0.0, %v1958
    %v1960 = vpop.f32.mrb[0].mxu0
    %1961 = vmatprep.mubr.f32.mxu0 0.0
    %1962 = vmatmul.mubr.f32.gmra.mrb[0].mxu0 %v1890
    %v1963 = vpop.f32.mrb[0].mxu0
    %v1964 = vadd.f32 0.0, %v1963
    %v1965 = vpop.f32.mrb[0].mxu0
    %1966 = vdwg.mxu0
    %1967 = vmatprep.subr.mxu0 0.0
    %1968 = vmatpush1.msra.mxu0 %v1878
    %1969 = vmatprep.subr.mxu0 0.0
    %1970 = vmatpush1.msra.mxu0 %v1883
    %1971 = vmatprep.subr.mxu0 0.0
    %1972 = vmatpush1.msra.mxu0 0.0
    %1973 = vmatprep.subr.mxu0 0.0
    %1974 = vmatpush1.msra.mxu0 0.0
    %1975 = vmatprep.subr.mxu0 0.0
    %1976 = vmatpush1.msra.mxu0 0.0
    %1977 = vmatprep.subr.mxu0 0.0
    %1978 = vmatpush1.msra.mxu0 0.0
    %1979 = vmatprep.subr.mxu0 0.0
    %1980 = vmatpush1.msra.mxu0 0.0
    %1981 = vmatprep.subr.mxu0 0.0
    %1982 = vmatpush1.msra.mxu0 0.0
    %1983 = vmatprep.subr.mxu0 0.0
    %1984 = vmatpush1.msra.mxu0 0.0
    %1985 = vmatprep.subr.mxu0 0.0
    %1986 = vmatpush1.msra.mxu0 0.0
    %1987 = vmatprep.subr.mxu0 0.0
    %1988 = vmatpush1.msra.mxu0 0.0
    %1989 = vmatprep.subr.mxu0 0.0
    %1990 = vmatpush1.msra.mxu0 0.0
    %1991 = vmatprep.subr.mxu0 0.0
    %1992 = vmatpush1.msra.mxu0 0.0
    %1993 = vmatprep.subr.mxu0 0.0
    %1994 = vmatpush1.msra.mxu0 0.0
    %1995 = vmatprep.subr.mxu0 0.0
    %1996 = vmatpush1.msra.mxu0 0.0
    %1997 = vmatprep.subr.mxu0 0.0
    %1998 = vmatpush1.msra.mxu0 0.0
    %1999 = vmatprep.subr.mxu0 0.0
    %2000 = vmatpush1.msra.mxu0 0.0
    %2001 = vmatprep.subr.mxu0 0.0
    %2002 = vmatpush1.msra.mxu0 0.0
    %2003 = vmatprep.subr.mxu0 0.0
    %2004 = vmatpush1.msra.mxu0 0.0
    %2005 = vmatprep.subr.mxu0 0.0
    %2006 = vmatpush1.msra.mxu0 0.0
    %2007 = vmatprep.subr.mxu0 0.0
    %2008 = vmatpush1.msra.mxu0 0.0
    %2009 = vmatprep.subr.mxu0 0.0
    %2010 = vmatpush1.msra.mxu0 0.0
    %2011 = vmatprep.subr.mxu0 0.0
    %2012 = vmatpush1.msra.mxu0 0.0
    %2013 = vmatprep.subr.mxu0 0.0
    %2014 = vmatpush1.msra.mxu0 0.0
    %2015 = vmatprep.subr.mxu0 0.0
    %2016 = vmatpush1.msra.mxu0 0.0
    %2017 = vmatprep.subr.mxu0 0.0
    %2018 = vmatpush1.msra.mxu0 0.0
    %2019 = vmatprep.subr.mxu0 0.0
    %2020 = vmatpush1.msra.mxu0 0.0
    %2021 = vmatprep.subr.mxu0 0.0
    %2022 = vmatpush1.msra.mxu0 0.0
    %2023 = vmatprep.subr.mxu0 0.0
    %2024 = vmatpush1.msra.mxu0 0.0
    %2025 = vmatprep.subr.mxu0 0.0
    %2026 = vmatpush1.msra.mxu0 0.0
    %2027 = vmatprep.subr.mxu0 0.0
    %2028 = vmatpush1.msra.mxu0 0.0
    %2029 = vmatprep.subr.mxu0 0.0
    %2030 = vmatpush1.msra.mxu0 0.0
    %2031 = vmatprep.mubr.f32.mxu0 0.0
    %2032 = vmatmul.mubr.f32.gmra.mrb[0].mxu0 %v946
    %v2033 = vpop.f32.mrb[0].mxu0
    %v2034 = vadd.f32 0.0, %v2033
    %v2035 = vpop.f32.mrb[0].mxu0
    %2036 = vmatprep.mubr.f32.mxu0 0.0
    %2037 = vmatmul.mubr.f32.gmra.mrb[0].mxu0 %v949
    %v2038 = vpop.f32.mrb[0].mxu0
    %v2039 = vadd.f32 0.0, %v2038
    %v2040 = vpop.f32.mrb[0].mxu0
    %2041 = vdwg.mxu0
    %2042 = vmatprep.subr.mxu0 0.0
    %2043 = vmatpush1.msra.mxu0 %v1959
    %2044 = vmatprep.subr.mxu0 0.0
    %2045 = vmatpush1.msra.mxu0 %v1964
    %2046 = vmatprep.subr.mxu0 0.0
    %2047 = vmatpush1.msra.mxu0 0.0
    %2048 = vmatprep.subr.mxu0 0.0
    %2049 = vmatpush1.msra.mxu0 0.0
    %2050 = vmatprep.subr.mxu0 0.0
    %2051 = vmatpush1.msra.mxu0 0.0
    %2052 = vmatprep.subr.mxu0 0.0
    %2053 = vmatpush1.msra.mxu0 0.0
    %2054 = vmatprep.subr.mxu0 0.0
    %2055 = vmatpush1.msra.mxu0 0.0
    %2056 = vmatprep.subr.mxu0 0.0
    %2057 = vmatpush1.msra.mxu0 0.0
    %2058 = vmatprep.subr.mxu0 0.0
    %2059 = vmatpush1.msra.mxu0 0.0
    %2060 = vmatprep.subr.mxu0 0.0
    %2061 = vmatpush1.msra.mxu0 0.0
    %2062 = vmatprep.subr.mxu0 0.0
    %2063 = vmatpush1.msra.mxu0 0.0
    %2064 = vmatprep.subr.mxu0 0.0
    %2065 = vmatpush1.msra.mxu0 0.0
    %2066 = vmatprep.subr.mxu0 0.0
    %2067 = vmatpush1.msra.mxu0 0.0
    %2068 = vmatprep.subr.mxu0 0.0
    %2069 = vmatpush1.msra.mxu0 0.0
    %2070 = vmatprep.subr.mxu0 0.0
    %2071 = vmatpush1.msra.mxu0 0.0
    %2072 = vmatprep.subr.mxu0 0.0
    %2073 = vmatpush1.msra.mxu0 0.0
    %2074 = vmatprep.subr.mxu0 0.0
    %2075 = vmatpush1.msra.mxu0 0.0
    %2076 = vmatprep.subr.mxu0 0.0
    %2077 = vmatpush1.msra.mxu0 0.0
    %2078 = vmatprep.subr.mxu0 0.0
    %2079 = vmatpush1.msra.mxu0 0.0
    %2080 = vmatprep.subr.mxu0 0.0
    %2081 = vmatpush1.msra.mxu0 0.0
    %2082 = vmatprep.subr.mxu0 0.0
    %2083 = vmatpush1.msra.mxu0 0.0
    %2084 = vmatprep.subr.mxu0 0.0
    %2085 = vmatpush1.msra.mxu0 0.0
    %2086 = vmatprep.subr.mxu0 0.0
    %2087 = vmatpush1.msra.mxu0 0.0
    %2088 = vmatprep.subr.mxu0 0.0
    %2089 = vmatpush1.msra.mxu0 0.0
    %2090 = vmatprep.subr.mxu0 0.0
    %2091 = vmatpush1.msra.mxu0 0.0
    %2092 = vmatprep.subr.mxu0 0.0
    %2093 = vmatpush1.msra.mxu0 0.0
    %2094 = vmatprep.subr.mxu0 0.0
    %2095 = vmatpush1.msra.mxu0 0.0
    %2096 = vmatprep.subr.mxu0 0.0
    %2097 = vmatpush1.msra.mxu0 0.0
    %2098 = vmatprep.subr.mxu0 0.0
    %2099 = vmatpush1.msra.mxu0 0.0
    %2100 = vmatprep.subr.mxu0 0.0
    %2101 = vmatpush1.msra.mxu0 0.0
    %2102 = vmatprep.subr.mxu0 0.0
    %2103 = vmatpush1.msra.mxu0 0.0
    %2104 = vmatprep.subr.mxu0 0.0
    %2105 = vmatpush1.msra.mxu0 0.0
    %2106 = vmatprep.mubr.f32.mxu0 0.0
    %2107 = vmatmul.mubr.f32.gmra.mrb[0].mxu0 %v1027
    %v2108 = vpop.f32.mrb[0].mxu0
    %v2109 = vadd.f32 0.0, %v2108
    %v2110 = vpop.f32.mrb[0].mxu0
    %2111 = vmatprep.mubr.f32.mxu0 0.0
    %2112 = vmatmul.mubr.f32.gmra.mrb[0].mxu0 %v1030
    %v2113 = vpop.f32.mrb[0].mxu0
    %v2114 = vadd.f32 0.0, %v2113
    %v2115 = vpop.f32.mrb[0].mxu0
    %2116 = vdwg.mxu0
    %v2117 = vmax.f32 %v2034, 0.0
    %v2118 = vmax.f32 %v2039, 0.0
    %v2119 = vmax.f32 %v2109, 0.0
    %v2120 = vmax.f32 %v2114, 0.0
    %v2121 = vmul.f32 %v2117, 0.5
    %v2122 = vmul.f32 %v2118, 0.5
    %v2123 = vmul.f32 %v2119, 0.1
    %v2124 = vmul.f32 %v2120, 0.1
    %v2125 = vadd.f32 %v2121, %v2123
    %v2126 = vadd.f32 %v2122, %v2124
    %v2127 = vmul.f32 %v486, 0.5
    %v2128 = vmul.f32 %v491, 0.5
    %v2129 = vadd.f32 %v2125, %v2127
    %v2130 = vadd.f32 %v2126, %v2128
    %v2131 = vmul.f32 %v2119, 0.5
    %v2132 = vmul.f32 %v2120, 0.5
    %v2133 = vmul.f32 %v2117, 0.1
    %v2134 = vmul.f32 %v2118, 0.1
    %v2135 = vadd.f32 %v2131, %v2133
    %v2136 = vadd.f32 %v2132, %v2134
    %v2137 = vadd.f32 %v2135, %v2127
    %v2138 = vadd.f32 %v2136, %v2128
    %v2139 = vld [vmem:[%s47] sm:$0xff]
    %v2141 = vsel %vm502, %v2129, 0
    %v2144 = vsel %vm502, %v2130, 0
    %2146 = vmatprep.subr.mxu0 0.0
    %2147 = vmatpush1.msra.mxu0 %v2139
    %2148 = vmatprep.subr.mxu0 0.0
    %2149 = vmatpush1.msra.mxu0 0.0
    %2150 = vmatprep.subr.mxu0 0.0
    %2151 = vmatpush1.msra.mxu0 0.0
    %2152 = vmatprep.subr.mxu0 0.0
    %2153 = vmatpush1.msra.mxu0 0.0
    %2154 = vmatprep.subr.mxu0 0.0
    %2155 = vmatpush1.msra.mxu0 0.0
    %2156 = vmatprep.subr.mxu0 0.0
    %2157 = vmatpush1.msra.mxu0 0.0
    %2158 = vmatprep.subr.mxu0 0.0
    %2159 = vmatpush1.msra.mxu0 0.0
    %2160 = vmatprep.subr.mxu0 0.0
    %2161 = vmatpush1.msra.mxu0 0.0
    %2162 = vmatprep.subr.mxu0 0.0
    %2163 = vmatpush1.msra.mxu0 0.0
    %2164 = vmatprep.subr.mxu0 0.0
    %2165 = vmatpush1.msra.mxu0 0.0
    %2166 = vmatprep.subr.mxu0 0.0
    %2167 = vmatpush1.msra.mxu0 0.0
    %2168 = vmatprep.subr.mxu0 0.0
    %2169 = vmatpush1.msra.mxu0 0.0
    %2170 = vmatprep.subr.mxu0 0.0
    %2171 = vmatpush1.msra.mxu0 0.0
    %2172 = vmatprep.subr.mxu0 0.0
    %2173 = vmatpush1.msra.mxu0 0.0
    %2174 = vmatprep.subr.mxu0 0.0
    %2175 = vmatpush1.msra.mxu0 0.0
    %2176 = vmatprep.subr.mxu0 0.0
    %2177 = vmatpush1.msra.mxu0 0.0
    %2178 = vmatprep.subr.mxu0 0.0
    %2179 = vmatpush1.msra.mxu0 0.0
    %2180 = vmatprep.subr.mxu0 0.0
    %2181 = vmatpush1.msra.mxu0 0.0
    %2182 = vmatprep.subr.mxu0 0.0
    %2183 = vmatpush1.msra.mxu0 0.0
    %2184 = vmatprep.subr.mxu0 0.0
    %2185 = vmatpush1.msra.mxu0 0.0
    %2186 = vmatprep.subr.mxu0 0.0
    %2187 = vmatpush1.msra.mxu0 0.0
    %2188 = vmatprep.subr.mxu0 0.0
    %2189 = vmatpush1.msra.mxu0 0.0
    %2190 = vmatprep.subr.mxu0 0.0
    %2191 = vmatpush1.msra.mxu0 0.0
    %2192 = vmatprep.subr.mxu0 0.0
    %2193 = vmatpush1.msra.mxu0 0.0
    %2194 = vmatprep.subr.mxu0 0.0
    %2195 = vmatpush1.msra.mxu0 0.0
    %2196 = vmatprep.subr.mxu0 0.0
    %2197 = vmatpush1.msra.mxu0 0.0
    %2198 = vmatprep.subr.mxu0 0.0
    %2199 = vmatpush1.msra.mxu0 0.0
    %2200 = vmatprep.subr.mxu0 0.0
    %2201 = vmatpush1.msra.mxu0 0.0
    %2202 = vmatprep.subr.mxu0 0.0
    %2203 = vmatpush1.msra.mxu0 0.0
    %2204 = vmatprep.subr.mxu0 0.0
    %2205 = vmatpush1.msra.mxu0 0.0
    %2206 = vmatprep.subr.mxu0 0.0
    %2207 = vmatpush1.msra.mxu0 0.0
    %2208 = vmatprep.subr.mxu0 0.0
    %2209 = vmatpush1.msra.mxu0 0.0
    %2210 = vmatprep.mubr.f32.mxu0 0.0
    %2211 = vmatmul.mubr.f32.gmra.mrb[0].mxu0 %v2141
    %v2212 = vpop.f32.mrb[0].mxu0
    %v2213 = vadd.f32 0.0, %v2212
    %v2214 = vpop.f32.mrb[0].mxu0
    %2215 = vmatprep.mubr.f32.mxu0 0.0
    %2216 = vmatmul.mubr.f32.gmra.mrb[0].mxu0 %v2144
    %v2217 = vpop.f32.mrb[0].mxu0
    %v2218 = vadd.f32 0.0, %v2217
    %v2219 = vpop.f32.mrb[0].mxu0
    %2220 = vdwg.mxu0
    %v2222 = vsel %vm502, %v2137, 0
    %v2225 = vsel %vm502, %v2138, 0
    %2227 = vmatprep.subr.mxu0 0.0
    %2228 = vmatpush1.msra.mxu0 %v2139
    %2229 = vmatprep.subr.mxu0 0.0
    %2230 = vmatpush1.msra.mxu0 0.0
    %2231 = vmatprep.subr.mxu0 0.0
    %2232 = vmatpush1.msra.mxu0 0.0
    %2233 = vmatprep.subr.mxu0 0.0
    %2234 = vmatpush1.msra.mxu0 0.0
    %2235 = vmatprep.subr.mxu0 0.0
    %2236 = vmatpush1.msra.mxu0 0.0
    %2237 = vmatprep.subr.mxu0 0.0
    %2238 = vmatpush1.msra.mxu0 0.0
    %2239 = vmatprep.subr.mxu0 0.0
    %2240 = vmatpush1.msra.mxu0 0.0
    %2241 = vmatprep.subr.mxu0 0.0
    %2242 = vmatpush1.msra.mxu0 0.0
    %2243 = vmatprep.subr.mxu0 0.0
    %2244 = vmatpush1.msra.mxu0 0.0
    %2245 = vmatprep.subr.mxu0 0.0
    %2246 = vmatpush1.msra.mxu0 0.0
    %2247 = vmatprep.subr.mxu0 0.0
    %2248 = vmatpush1.msra.mxu0 0.0
    %2249 = vmatprep.subr.mxu0 0.0
    %2250 = vmatpush1.msra.mxu0 0.0
    %2251 = vmatprep.subr.mxu0 0.0
    %2252 = vmatpush1.msra.mxu0 0.0
    %2253 = vmatprep.subr.mxu0 0.0
    %2254 = vmatpush1.msra.mxu0 0.0
    %2255 = vmatprep.subr.mxu0 0.0
    %2256 = vmatpush1.msra.mxu0 0.0
    %2257 = vmatprep.subr.mxu0 0.0
    %2258 = vmatpush1.msra.mxu0 0.0
    %2259 = vmatprep.subr.mxu0 0.0
    %2260 = vmatpush1.msra.mxu0 0.0
    %2261 = vmatprep.subr.mxu0 0.0
    %2262 = vmatpush1.msra.mxu0 0.0
    %2263 = vmatprep.subr.mxu0 0.0
    %2264 = vmatpush1.msra.mxu0 0.0
    %2265 = vmatprep.subr.mxu0 0.0
    %2266 = vmatpush1.msra.mxu0 0.0
    %2267 = vmatprep.subr.mxu0 0.0
    %2268 = vmatpush1.msra.mxu0 0.0
    %2269 = vmatprep.subr.mxu0 0.0
    %2270 = vmatpush1.msra.mxu0 0.0
    %2271 = vmatprep.subr.mxu0 0.0
    %2272 = vmatpush1.msra.mxu0 0.0
    %2273 = vmatprep.subr.mxu0 0.0
    %2274 = vmatpush1.msra.mxu0 0.0
    %2275 = vmatprep.subr.mxu0 0.0
    %2276 = vmatpush1.msra.mxu0 0.0
    %2277 = vmatprep.subr.mxu0 0.0
    %2278 = vmatpush1.msra.mxu0 0.0
    %2279 = vmatprep.subr.mxu0 0.0
    %2280 = vmatpush1.msra.mxu0 0.0
    %2281 = vmatprep.subr.mxu0 0.0
    %2282 = vmatpush1.msra.mxu0 0.0
    %2283 = vmatprep.subr.mxu0 0.0
    %2284 = vmatpush1.msra.mxu0 0.0
    %2285 = vmatprep.subr.mxu0 0.0
    %2286 = vmatpush1.msra.mxu0 0.0
    %2287 = vmatprep.subr.mxu0 0.0
    %2288 = vmatpush1.msra.mxu0 0.0
    %2289 = vmatprep.subr.mxu0 0.0
    %2290 = vmatpush1.msra.mxu0 0.0
    %2291 = vmatprep.mubr.f32.mxu0 0.0
    %2292 = vmatmul.mubr.f32.gmra.mrb[0].mxu0 %v2222
    %v2293 = vpop.f32.mrb[0].mxu0
    %v2294 = vadd.f32 0.0, %v2293
    %v2295 = vpop.f32.mrb[0].mxu0
    %2296 = vmatprep.mubr.f32.mxu0 0.0
    %2297 = vmatmul.mubr.f32.gmra.mrb[0].mxu0 %v2225
    %v2298 = vpop.f32.mrb[0].mxu0
    %v2299 = vadd.f32 0.0, %v2298
    %v2300 = vpop.f32.mrb[0].mxu0
    %2301 = vdwg.mxu0
    %2302 = vmatprep.subr.mxu0 0.0
    %2303 = vmatpush1.msra.mxu0 %v2213
    %2304 = vmatprep.subr.mxu0 0.0
    %2305 = vmatpush1.msra.mxu0 %v2218
    %2306 = vmatprep.subr.mxu0 0.0
    %2307 = vmatpush1.msra.mxu0 0.0
    %2308 = vmatprep.subr.mxu0 0.0
    %2309 = vmatpush1.msra.mxu0 0.0
    %2310 = vmatprep.subr.mxu0 0.0
    %2311 = vmatpush1.msra.mxu0 0.0
    %2312 = vmatprep.subr.mxu0 0.0
    %2313 = vmatpush1.msra.mxu0 0.0
    %2314 = vmatprep.subr.mxu0 0.0
    %2315 = vmatpush1.msra.mxu0 0.0
    %2316 = vmatprep.subr.mxu0 0.0
    %2317 = vmatpush1.msra.mxu0 0.0
    %2318 = vmatprep.subr.mxu0 0.0
    %2319 = vmatpush1.msra.mxu0 0.0
    %2320 = vmatprep.subr.mxu0 0.0
    %2321 = vmatpush1.msra.mxu0 0.0
    %2322 = vmatprep.subr.mxu0 0.0
    %2323 = vmatpush1.msra.mxu0 0.0
    %2324 = vmatprep.subr.mxu0 0.0
    %2325 = vmatpush1.msra.mxu0 0.0
    %2326 = vmatprep.subr.mxu0 0.0
    %2327 = vmatpush1.msra.mxu0 0.0
    %2328 = vmatprep.subr.mxu0 0.0
    %2329 = vmatpush1.msra.mxu0 0.0
    %2330 = vmatprep.subr.mxu0 0.0
    %2331 = vmatpush1.msra.mxu0 0.0
    %2332 = vmatprep.subr.mxu0 0.0
    %2333 = vmatpush1.msra.mxu0 0.0
    %2334 = vmatprep.subr.mxu0 0.0
    %2335 = vmatpush1.msra.mxu0 0.0
    %2336 = vmatprep.subr.mxu0 0.0
    %2337 = vmatpush1.msra.mxu0 0.0
    %2338 = vmatprep.subr.mxu0 0.0
    %2339 = vmatpush1.msra.mxu0 0.0
    %2340 = vmatprep.subr.mxu0 0.0
    %2341 = vmatpush1.msra.mxu0 0.0
    %2342 = vmatprep.subr.mxu0 0.0
    %2343 = vmatpush1.msra.mxu0 0.0
    %2344 = vmatprep.subr.mxu0 0.0
    %2345 = vmatpush1.msra.mxu0 0.0
    %2346 = vmatprep.subr.mxu0 0.0
    %2347 = vmatpush1.msra.mxu0 0.0
    %2348 = vmatprep.subr.mxu0 0.0
    %2349 = vmatpush1.msra.mxu0 0.0
    %2350 = vmatprep.subr.mxu0 0.0
    %2351 = vmatpush1.msra.mxu0 0.0
    %2352 = vmatprep.subr.mxu0 0.0
    %2353 = vmatpush1.msra.mxu0 0.0
    %2354 = vmatprep.subr.mxu0 0.0
    %2355 = vmatpush1.msra.mxu0 0.0
    %2356 = vmatprep.subr.mxu0 0.0
    %2357 = vmatpush1.msra.mxu0 0.0
    %2358 = vmatprep.subr.mxu0 0.0
    %2359 = vmatpush1.msra.mxu0 0.0
    %2360 = vmatprep.subr.mxu0 0.0
    %2361 = vmatpush1.msra.mxu0 0.0
    %2362 = vmatprep.subr.mxu0 0.0
    %2363 = vmatpush1.msra.mxu0 0.0
    %2364 = vmatprep.subr.mxu0 0.0
    %2365 = vmatpush1.msra.mxu0 0.0
    %2366 = vmatprep.mubr.f32.mxu0 0.0
    %2367 = vmatmul.mubr.f32.gmra.mrb[0].mxu0 %v946
    %v2368 = vpop.f32.mrb[0].mxu0
    %v2369 = vadd.f32 0.0, %v2368
    %v2370 = vpop.f32.mrb[0].mxu0
    %2371 = vmatprep.mubr.f32.mxu0 0.0
    %2372 = vmatmul.mubr.f32.gmra.mrb[0].mxu0 %v949
    %v2373 = vpop.f32.mrb[0].mxu0
    %v2374 = vadd.f32 0.0, %v2373
    %v2375 = vpop.f32.mrb[0].mxu0
    %2376 = vdwg.mxu0
    %2377 = vmatprep.subr.mxu0 0.0
    %2378 = vmatpush1.msra.mxu0 %v2294
    %2379 = vmatprep.subr.mxu0 0.0
    %2380 = vmatpush1.msra.mxu0 %v2299
    %2381 = vmatprep.subr.mxu0 0.0
    %2382 = vmatpush1.msra.mxu0 0.0
    %2383 = vmatprep.subr.mxu0 0.0
    %2384 = vmatpush1.msra.mxu0 0.0
    %2385 = vmatprep.subr.mxu0 0.0
    %2386 = vmatpush1.msra.mxu0 0.0
    %2387 = vmatprep.subr.mxu0 0.0
    %2388 = vmatpush1.msra.mxu0 0.0
    %2389 = vmatprep.subr.mxu0 0.0
    %2390 = vmatpush1.msra.mxu0 0.0
    %2391 = vmatprep.subr.mxu0 0.0
    %2392 = vmatpush1.msra.mxu0 0.0
    %2393 = vmatprep.subr.mxu0 0.0
    %2394 = vmatpush1.msra.mxu0 0.0
    %2395 = vmatprep.subr.mxu0 0.0
    %2396 = vmatpush1.msra.mxu0 0.0
    %2397 = vmatprep.subr.mxu0 0.0
    %2398 = vmatpush1.msra.mxu0 0.0
    %2399 = vmatprep.subr.mxu0 0.0
    %2400 = vmatpush1.msra.mxu0 0.0
    %2401 = vmatprep.subr.mxu0 0.0
    %2402 = vmatpush1.msra.mxu0 0.0
    %2403 = vmatprep.subr.mxu0 0.0
    %2404 = vmatpush1.msra.mxu0 0.0
    %2405 = vmatprep.subr.mxu0 0.0
    %2406 = vmatpush1.msra.mxu0 0.0
    %2407 = vmatprep.subr.mxu0 0.0
    %2408 = vmatpush1.msra.mxu0 0.0
    %2409 = vmatprep.subr.mxu0 0.0
    %2410 = vmatpush1.msra.mxu0 0.0
    %2411 = vmatprep.subr.mxu0 0.0
    %2412 = vmatpush1.msra.mxu0 0.0
    %2413 = vmatprep.subr.mxu0 0.0
    %2414 = vmatpush1.msra.mxu0 0.0
    %2415 = vmatprep.subr.mxu0 0.0
    %2416 = vmatpush1.msra.mxu0 0.0
    %2417 = vmatprep.subr.mxu0 0.0
    %2418 = vmatpush1.msra.mxu0 0.0
    %2419 = vmatprep.subr.mxu0 0.0
    %2420 = vmatpush1.msra.mxu0 0.0
    %2421 = vmatprep.subr.mxu0 0.0
    %2422 = vmatpush1.msra.mxu0 0.0
    %2423 = vmatprep.subr.mxu0 0.0
    %2424 = vmatpush1.msra.mxu0 0.0
    %2425 = vmatprep.subr.mxu0 0.0
    %2426 = vmatpush1.msra.mxu0 0.0
    %2427 = vmatprep.subr.mxu0 0.0
    %2428 = vmatpush1.msra.mxu0 0.0
    %2429 = vmatprep.subr.mxu0 0.0
    %2430 = vmatpush1.msra.mxu0 0.0
    %2431 = vmatprep.subr.mxu0 0.0
    %2432 = vmatpush1.msra.mxu0 0.0
    %2433 = vmatprep.subr.mxu0 0.0
    %2434 = vmatpush1.msra.mxu0 0.0
    %2435 = vmatprep.subr.mxu0 0.0
    %2436 = vmatpush1.msra.mxu0 0.0
    %2437 = vmatprep.subr.mxu0 0.0
    %2438 = vmatpush1.msra.mxu0 0.0
    %2439 = vmatprep.subr.mxu0 0.0
    %2440 = vmatpush1.msra.mxu0 0.0
    %2441 = vmatprep.mubr.f32.mxu0 0.0
    %2442 = vmatmul.mubr.f32.gmra.mrb[0].mxu0 %v1027
    %v2443 = vpop.f32.mrb[0].mxu0
    %v2444 = vadd.f32 0.0, %v2443
    %v2445 = vpop.f32.mrb[0].mxu0
    %2446 = vmatprep.mubr.f32.mxu0 0.0
    %2447 = vmatmul.mubr.f32.gmra.mrb[0].mxu0 %v1030
    %v2448 = vpop.f32.mrb[0].mxu0
    %v2449 = vadd.f32 0.0, %v2448
    %v2450 = vpop.f32.mrb[0].mxu0
    %2451 = vdwg.mxu0
    %vm2452 = vcmask 31744
    %v2453 = vsel %vm2452, %v2369, -inf
    %2454 = vmax.xlane.f32.xlu0 %v2453
    %v2455 = vpop.xlane.xlu0 %2454
    %v2456 = vsel %vm2452, %v2374, -inf
    %2457 = vmax.xlane.f32.xlu0 %v2456
    %v2458 = vpop.xlane.xlu0 %2457
    %v2459 = vsub.f32 %v2369, %v2455
    %v2460 = vsub.f32 %v2374, %v2458
    %v2461 = vmul.f32 %v2459, 1.442695
    %v2462 = vpow.pop %v2461
    %v2463 = vmul.f32 %v2460, 1.442695
    %v2464 = vpow.pop %v2463
    %v2465 = vsel %vm2452, %v2462, 0.0
    %2466 = vadd.xlane.f32.xlu0 %v2465
    %v2467 = vpop.xlane.xlu0 %2466
    %v2468 = vsel %vm2452, %v2464, 0.0
    %2469 = vadd.xlane.f32.xlu0 %v2468
    %v2470 = vpop.xlane.xlu0 %2469
    %v2471 = vrcp.pop %v2467
    %v2472 = vrcp.pop %v2470
    %v2473 = vmul.f32 %v2462, %v2471
    %v2474 = vmul.f32 %v2464, %v2472
    %2475 = vst.msk [vmem:[%s55] sm:$0xff] %vm2452, %v2473
    %2476 = vst.msk [vmem:[%s55 + $0x8] sm:$0xff] %vm2452, %v2474
    %v2477 = vsel %vm2452, %v2444, -inf
    %2478 = vmax.xlane.f32.xlu0 %v2477
    %v2479 = vpop.xlane.xlu0 %2478
    %v2480 = vsel %vm2452, %v2449, -inf
    %2481 = vmax.xlane.f32.xlu0 %v2480
    %v2482 = vpop.xlane.xlu0 %2481
    %v2483 = vsub.f32 %v2444, %v2479
    %v2484 = vsub.f32 %v2449, %v2482
    %v2485 = vmul.f32 %v2483, 1.442695
    %v2486 = vpow.pop %v2485
    %v2487 = vmul.f32 %v2484, 1.442695
    %v2488 = vpow.pop %v2487
    %v2489 = vsel %vm2452, %v2486, 0.0
    %2490 = vadd.xlane.f32.xlu0 %v2489
    %v2491 = vpop.xlane.xlu0 %2490
    %v2492 = vsel %vm2452, %v2488, 0.0
    %2493 = vadd.xlane.f32.xlu0 %v2492
    %v2494 = vpop.xlane.xlu0 %2493
    %v2495 = vrcp.pop %v2491
    %v2496 = vrcp.pop %v2494
    %v2497 = vmul.f32 %v2486, %v2495
    %v2498 = vmul.f32 %v2488, %v2496
    %2499 = vst.msk [vmem:[%s57] sm:$0xff] %vm2452, %v2497
    %2500 = vst.msk [vmem:[%s57 + $0x8] sm:$0xff] %vm2452, %v2498
    %v2501 = vld [vmem:[%s49] sm:$0xf]
    %v2502 = vmul.f32 %v486, %v486
    %v2503 = vmul.f32 %v491, %v491
    %v2504 = vsel %vm502, %v2502, 0.0
    %2505 = vadd.xlane.f32.xlu0 %v2504
    %v2506 = vpop.xlane.xlu0 %2505
    %v2507 = vsel %vm502, %v2503, 0.0
    %2508 = vadd.xlane.f32.xlu0 %v2507
    %v2509 = vpop.xlane.xlu0 %2508
    %v2510 = vmul.f32 %v2501, %v2501
    %vm2511 = vcmask 60416
    %v2512 = vsel %vm2511, %v2510, 0.0
    %2513 = vadd.xlane.f32.xlu0 %v2512
    %v2514 = vpop.xlane.xlu0 %2513
    %v2516 = vsel %vm502, %v2501, 0
    %2518 = vmatprep.subr.mxu0 0.0
    %2519 = vmatpush1.xpose.msra.mxu0 %v2516
    %2520 = vmatprep.subr.mxu0 0.0
    %2521 = vmatpush1.xpose.msra.mxu0 0.0
    %2522 = vmatprep.subr.mxu0 0.0
    %2523 = vmatpush1.xpose.msra.mxu0 0.0
    %2524 = vmatprep.subr.mxu0 0.0
    %2525 = vmatpush1.xpose.msra.mxu0 0.0
    %2526 = vmatprep.subr.mxu0 0.0
    %2527 = vmatpush1.xpose.msra.mxu0 0.0
    %2528 = vmatprep.subr.mxu0 0.0
    %2529 = vmatpush1.xpose.msra.mxu0 0.0
    %2530 = vmatprep.subr.mxu0 0.0
    %2531 = vmatpush1.xpose.msra.mxu0 0.0
    %2532 = vmatprep.subr.mxu0 0.0
    %2533 = vmatpush1.xpose.msra.mxu0 0.0
    %2534 = vmatprep.subr.mxu0 0.0
    %2535 = vmatpush1.xpose.msra.mxu0 0.0
    %2536 = vmatprep.subr.mxu0 0.0
    %2537 = vmatpush1.xpose.msra.mxu0 0.0
    %2538 = vmatprep.subr.mxu0 0.0
    %2539 = vmatpush1.xpose.msra.mxu0 0.0
    %2540 = vmatprep.subr.mxu0 0.0
    %2541 = vmatpush1.xpose.msra.mxu0 0.0
    %2542 = vmatprep.subr.mxu0 0.0
    %2543 = vmatpush1.xpose.msra.mxu0 0.0
    %2544 = vmatprep.subr.mxu0 0.0
    %2545 = vmatpush1.xpose.msra.mxu0 0.0
    %2546 = vmatprep.subr.mxu0 0.0
    %2547 = vmatpush1.xpose.msra.mxu0 0.0
    %2548 = vmatprep.subr.mxu0 0.0
    %2549 = vmatpush1.xpose.msra.mxu0 0.0
    %2550 = vmatprep.subr.mxu0 0.0
    %2551 = vmatpush1.xpose.msra.mxu0 0.0
    %2552 = vmatprep.subr.mxu0 0.0
    %2553 = vmatpush1.xpose.msra.mxu0 0.0
    %2554 = vmatprep.subr.mxu0 0.0
    %2555 = vmatpush1.xpose.msra.mxu0 0.0
    %2556 = vmatprep.subr.mxu0 0.0
    %2557 = vmatpush1.xpose.msra.mxu0 0.0
    %2558 = vmatprep.subr.mxu0 0.0
    %2559 = vmatpush1.xpose.msra.mxu0 0.0
    %2560 = vmatprep.subr.mxu0 0.0
    %2561 = vmatpush1.xpose.msra.mxu0 0.0
    %2562 = vmatprep.subr.mxu0 0.0
    %2563 = vmatpush1.xpose.msra.mxu0 0.0
    %2564 = vmatprep.subr.mxu0 0.0
    %2565 = vmatpush1.xpose.msra.mxu0 0.0
    %2566 = vmatprep.subr.mxu0 0.0
    %2567 = vmatpush1.xpose.msra.mxu0 0.0
    %2568 = vmatprep.subr.mxu0 0.0
    %2569 = vmatpush1.xpose.msra.mxu0 0.0
    %2570 = vmatprep.subr.mxu0 0.0
    %2571 = vmatpush1.xpose.msra.mxu0 0.0
    %2572 = vmatprep.subr.mxu0 0.0
    %2573 = vmatpush1.xpose.msra.mxu0 0.0
    %2574 = vmatprep.subr.mxu0 0.0
    %2575 = vmatpush1.xpose.msra.mxu0 0.0
    %2576 = vmatprep.subr.mxu0 0.0
    %2577 = vmatpush1.xpose.msra.mxu0 0.0
    %2578 = vmatprep.subr.mxu0 0.0
    %2579 = vmatpush1.xpose.msra.mxu0 0.0
    %2580 = vmatprep.subr.mxu0 0.0
    %2581 = vmatpush1.xpose.msra.mxu0 0.0
    %2582 = vmatprep.mubr.f32.mxu0 0.0
    %2583 = vmatmul.mubr.f32.gmra.mrb[0].mxu0 %v504
    %v2584 = vpop.f32.mrb[0].mxu0
    %v2585 = vadd.f32 0.0, %v2584
    %v2586 = vpop.f32.mrb[0].mxu0
    %2587 = vmatprep.mubr.f32.mxu0 0.0
    %2588 = vmatmul.mubr.f32.gmra.mrb[0].mxu0 %v507
    %v2589 = vpop.f32.mrb[0].mxu0
    %v2590 = vadd.f32 0.0, %v2589
    %v2591 = vpop.f32.mrb[0].mxu0
    %2592 = vdwg.mxu0
    %2593 = vxpose.xlu0.b32.start [1/16] %v2514, 128
    %2594 = vxpose.xlu0.b32.cont [2/16] 0.0, 128
    %2595 = vxpose.xlu0.b32.cont [3/16] 0.0, 128
    %2596 = vxpose.xlu0.b32.cont [4/16] 0.0, 128
    %2597 = vxpose.xlu0.b32.cont [5/16] 0.0, 128
    %2598 = vxpose.xlu0.b32.cont [6/16] 0.0, 128
    %2599 = vxpose.xlu0.b32.cont [7/16] 0.0, 128
    %2600 = vxpose.xlu0.b32.cont [8/16] 0.0, 128
    %2601 = vxpose.xlu0.b32.cont [9/16] 0.0, 128
    %2602 = vxpose.xlu0.b32.cont [10/16] 0.0, 128
    %2603 = vxpose.xlu0.b32.cont [11/16] 0.0, 128
    %2604 = vxpose.xlu0.b32.cont [12/16] 0.0, 128
    %2605 = vxpose.xlu0.b32.cont [13/16] 0.0, 128
    %2606 = vxpose.xlu0.b32.cont [14/16] 0.0, 128
    %2607 = vxpose.xlu0.b32.cont [15/16] 0.0, 128
    %2608 = vxpose.xlu0.b32.end [16/16] 0.0, 128
    %v2609 = vpop.trf.xlu0
    %v2610 = vpop.trf.xlu0
    %v2611 = vpop.trf.xlu0
    %v2612 = vpop.trf.xlu0
    %v2613 = vpop.trf.xlu0
    %v2614 = vpop.trf.xlu0
    %v2615 = vpop.trf.xlu0
    %v2616 = vpop.trf.xlu0
    %v2617 = vpop.trf.xlu0
    %v2618 = vpop.trf.xlu0
    %v2619 = vpop.trf.xlu0
    %v2620 = vpop.trf.xlu0
    %v2621 = vpop.trf.xlu0
    %v2622 = vpop.trf.xlu0
    %v2623 = vpop.trf.xlu0
    %v2624 = vpop.trf.xlu0
    %v2625 = vlaneseq
    %v2626 = vshrl.u32 %v2625, 7
    %v2627 = vsub.s32 0, %v2626
    %v2628 = vrot.slane %v2609, %v2627
    %v2629 = vadd.f32 %v2506, %v2628
    %v2630 = vadd.f32 %v2509, %v2628
    %v2631 = vmul.f32 %v2585, 2.0
    %v2632 = vmul.f32 %v2590, 2.0
    %v2633 = vsub.f32 %v2629, %v2631
    %v2634 = vsub.f32 %v2630, %v2632
    %v2635 = vmax.f32 %v2633, 0.0
    %v2636 = vmax.f32 %v2634, 0.0
    %v2637 = vadd.f32 %v2635, 1.0
    %v2638 = vadd.f32 %v2636, 1.0
    %v2639 = vrcp.pop %v2637
    %v2640 = vrcp.pop %v2638
    %v2641 = vsel %vm2452, %v2639, 0.0
    %2642 = vadd.xlane.f32.xlu0 %v2641
    %v2643 = vpop.xlane.xlu0 %2642
    %v2644 = vsel %vm2452, %v2640, 0.0
    %2645 = vadd.xlane.f32.xlu0 %v2644
    %v2646 = vpop.xlane.xlu0 %2645
    %v2647 = vrcp.pop %v2643
    %v2648 = vrcp.pop %v2646
    %v2649 = vmul.f32 %v2639, %v2647
    %v2650 = vmul.f32 %v2640, %v2648
    %2651 = vst.msk [vmem:[%s53] sm:$0xff] %vm2452, %v2649
    %2652 = vst.msk [vmem:[%s53 + $0x8] sm:$0xff] %vm2452, %v2650
    // Predicated region
    $region102: #{glac_gcn_forward.1} parent=1 // pred_check
      _
    $region103: #{glac_gcn_forward.1} parent=1 // pred_check_branch
      %2654 = sbr.rel (0) target = $region105
    $region104: #{glac_gcn_forward.1} parent=1 // pred_region
      %s2656 = ssub.s32 256, 256
      %2657 = vsyncadd [#allocation3], %s2656
      %s2658 = sshll.u32 [#allocation2], 4
      %s2659 = int_to_ptr.vmem [resolvable:$true] %s2658
      %2664 = dma.vmem_to_hbm [thread:$0]  %s2659, 256, %s51, [#allocation3], 128, 128, 8
    $region105: #{glac_gcn_forward.1} parent=1 // pred_fallthru
      _
    // Predicated region
    $region106: #{glac_gcn_forward.1} parent=1 // pred_check
      _
    $region107: #{glac_gcn_forward.1} parent=1 // pred_check_branch
      %2666 = sbr.rel (0) target = $region109
    $region108: #{glac_gcn_forward.1} parent=1 // pred_region
      _
    $region109: #{glac_gcn_forward.1} parent=1 // pred_fallthru
      _
    // Predicated region
    $region110: #{glac_gcn_forward.1} parent=1 // pred_check
      _
    $region111: #{glac_gcn_forward.1} parent=1 // pred_check_branch
      %2668 = sbr.rel (0) target = $region113
    $region112: #{glac_gcn_forward.1} parent=1 // pred_region
      _
    $region113: #{glac_gcn_forward.1} parent=1 // pred_fallthru
      _
    // Predicated region
    $region114: #{glac_gcn_forward.1} parent=1 // pred_check
      _
    $region115: #{glac_gcn_forward.1} parent=1 // pred_check_branch
      %2670 = sbr.rel (0) target = $region117
    $region116: #{glac_gcn_forward.1} parent=1 // pred_region
      _
    $region117: #{glac_gcn_forward.1} parent=1 // pred_fallthru
      _
    // Predicated region
    $region118: #{glac_gcn_forward.1} parent=1 // pred_check
      _
    $region119: #{glac_gcn_forward.1} parent=1 // pred_check_branch
      %2672 = sbr.rel (0) target = $region121
    $region120: #{glac_gcn_forward.1} parent=1 // pred_region
      _
    $region121: #{glac_gcn_forward.1} parent=1 // pred_fallthru
      _
    // Predicated region
    $region122: #{glac_gcn_forward.1} parent=1 // pred_check
      _
    $region123: #{glac_gcn_forward.1} parent=1 // pred_check_branch
      %2674 = sbr.rel (0) target = $region125
    $region124: #{glac_gcn_forward.1} parent=1 // pred_region
      %2675 = dma.done [#allocation3], 256
    $region125: #{glac_gcn_forward.1} parent=1 // pred_fallthru
      _
    // Predicated region
    $region126: #{glac_gcn_forward.1} parent=1 // pred_check
      _
    $region127: #{glac_gcn_forward.1} parent=1 // pred_check_branch
      %2677 = sbr.rel (0) target = $region129
    $region128: #{glac_gcn_forward.1} parent=1 // pred_region
      _
    $region129: #{glac_gcn_forward.1} parent=1 // pred_fallthru
      _
    // Predicated region
    $region130: #{glac_gcn_forward.1} parent=1 // pred_check
      _
    $region131: #{glac_gcn_forward.1} parent=1 // pred_check_branch
      %2679 = sbr.rel (0) target = $region133
    $region132: #{glac_gcn_forward.1} parent=1 // pred_region
      _
    $region133: #{glac_gcn_forward.1} parent=1 // pred_fallthru
      _
    // Predicated region
    $region134: #{glac_gcn_forward.1} parent=1 // pred_check
      _
    $region135: #{glac_gcn_forward.1} parent=1 // pred_check_branch
      %2681 = sbr.rel (0) target = $region137
    $region136: #{glac_gcn_forward.1} parent=1 // pred_region
      _
    $region137: #{glac_gcn_forward.1} parent=1 // pred_fallthru
      _
    // Predicated region
    $region138: #{glac_gcn_forward.1} parent=1 // pred_check
      _
    $region139: #{glac_gcn_forward.1} parent=1 // pred_check_branch
      %2683 = sbr.rel (0) target = $region141
    $region140: #{glac_gcn_forward.1} parent=1 // pred_region
      _
    $region141: #{glac_gcn_forward.1} parent=1 // pred_fallthru
      _
    %2684 = vsyncpa [#allocation3], 1

</llo_original>
